<compile_context>
chip_gen: v6e
topology: v6e:2x2x1
jax: 0.10.0
libtpu: 0.0.40
codegen_flags: <defaults>
</compile_context>

<pallas_src>
import numpy as np

import jax
import jax.numpy as jnp
from jax.experimental import pallas as pl
from jax.experimental.pallas import tpu as pltpu


# ----------------------------------------------------------------------------
# Gather-matrix construction (host-side, numpy, folded into the weights)
# ----------------------------------------------------------------------------

def _conv3x3_gather_info(Hi, Wi, stride):
    """0/1 gather matrices for a 3x3 / stride / pad=1 window.

    mats[k] is (Ho*Wo, Hi*Wi) selecting input tap k = kh*3+kw for every
    output position; rows are zero where the tap falls into the padding.
    kinds[k] in {'zero', 'identity', 'general'}.
    """
    Ho = (Hi - 1) // stride + 1
    Wo = (Wi - 1) // stride + 1
    mats, kinds = [], []
    for kh in range(3):
        for kw in range(3):
            G = np.zeros((Ho * Wo, Hi * Wi), np.float32)
            for ho in range(Ho):
                hi = stride * ho + kh - 1
                if hi < 0 or hi >= Hi:
                    continue
                for wo in range(Wo):
                    wi = stride * wo + kw - 1
                    if 0 <= wi < Wi:
                        G[ho * Wo + wo, hi * Wi + wi] = 1.0
            if not G.any():
                kinds.append('zero')
            elif Ho * Wo == Hi * Wi and np.array_equal(G, np.eye(Hi * Wi)):
                kinds.append('identity')
            else:
                kinds.append('general')
            mats.append(G)
    return mats, kinds, Ho, Wo


# ----------------------------------------------------------------------------
# The fused whole-network kernel (one image per grid step)
# ----------------------------------------------------------------------------

def _make_kernel(meta):
    mp_mo = meta['mp_Mo']
    mp_t = meta['mp_T']
    blocks = meta['blocks']

    def kernel(*refs):
        out_ref = refs[-1]
        it = iter(refs[:-1])

        # ---- stem Con1: im2col 3x3/s2/p1 conv as ONE matmul (+BN+ReLU) -----
        patches = next(it)[0]                          # (M0, 27)   bf16
        w0 = next(it)[...]                             # (27, C0)   bf16 (BN scale folded)
        b0 = next(it)[...]                             # (1, C0)    f32
        y = jnp.dot(patches, w0, preferred_element_type=jnp.float32)
        x = jnp.maximum(y + b0, 0.0).astype(jnp.bfloat16)     # (M0, C0)

        # ---- MaxPool 3x3/s2/p1: stacked 0/1-gather matmul + tap-wise max ---
        mpg = next(it)[...]                            # (9*M1, M0) bf16
        r = jnp.dot(mpg, x, preferred_element_type=jnp.float32)
        m = r[0:mp_mo]
        for t in range(1, mp_t):
            m = jnp.maximum(m, r[t * mp_mo:(t + 1) * mp_mo])
        x = m.astype(jnp.bfloat16)                     # (M1, C0)

        # ---- inverted-residual blocks (split/concat/shuffle folded) --------
        for bm in blocks:
            mo = bm['Mo']
            w1 = next(it)[...]                         # (Cin, bf)  bf16
            b1 = next(it)[...]                         # (1, bf)    f32
            g = next(it) if bm['gen_taps'] else None   # (T*mo, Mi) bf16
            dw = next(it)                              # (9, 1, bf) f32 (BN scale folded)
            bdw = next(it)[...]                        # (1, bf)    f32
            w2 = next(it)[...]                         # (bf, 2bf)  bf16
            b2 = next(it)[...]                         # (1, 2bf)   f32
            pw = next(it)[...] if bm['stride'] == 1 else None  # (Cin, 2bf)

            # branch2 conv1 (1x1) + BN + ReLU, input-half selection folded
            y1 = jnp.dot(x, w1, preferred_element_type=jnp.float32)
            y1 = jnp.maximum(y1 + b1, 0.0)
            y1b = y1.astype(jnp.bfloat16)

            # depthwise 3x3 (stride 1 or 2) + BN: one gather matmul for all
            # non-trivial taps; the stride-1 center tap is an identity (no
            # matmul); out-of-range taps are dropped entirely.
            acc = None
            if bm['gen_taps']:
                r = jnp.dot(g[...], y1b, preferred_element_type=jnp.float32)
                for t, k in enumerate(bm['gen_taps']):
                    c = r[t * mo:(t + 1) * mo] * dw[k]
                    acc = c if acc is None else acc + c
            for k in bm['id_taps']:
                c = y1 * dw[k]
                acc = c if acc is None else acc + c
            y2 = acc + bdw

            # branch2 conv2 (1x1) + BN + ReLU, channel shuffle folded into w2
            y3 = jnp.dot(y2.astype(jnp.bfloat16), w2,
                         preferred_element_type=jnp.float32)
            y3 = jnp.maximum(y3 + b2, 0.0)
            if pw is not None:
                # stride-1: shuffled pass-through half onto the even lanes
                y3 = y3 + jnp.dot(x, pw, preferred_element_type=jnp.float32)
            x = y3.astype(jnp.bfloat16)

        # ---- head: Con5 (+bias+BN+ReLU) -> global mean -> FC ---------------
        w5 = next(it)[...]
        b5 = next(it)[...]
        fcw = next(it)[...]
        fcb = next(it)[...]
        y5 = jnp.dot(x, w5, preferred_element_type=jnp.float32)
        y5 = jnp.maximum(y5 + b5, 0.0)
        feat = jnp.mean(y5, axis=0, keepdims=True)     # sublane reduction
        logits = jnp.dot(feat.astype(jnp.bfloat16), fcw,
                         preferred_element_type=jnp.float32) + fcb
        out_ref[0] = logits

    return kernel


# ----------------------------------------------------------------------------
# pallas_call wrapper
# ----------------------------------------------------------------------------

def _rep_spec(a):
    """Whole array, same block every grid step (weights stay VMEM-resident)."""
    zero = (0,) * a.ndim
    return pl.BlockSpec(a.shape, lambda n: zero)


def _stem_im2col(x_nchw):
    """NCHW -> (N, Ho*Wo, 9*Cin) bf16 patches for the 3x3/s2/p1 stem conv.

    Tap-major (kh*3+kw) then input channel, matching the packed stem weight.
    This is the only host-side work (it replaces the NCHW->NHWC transpose on
    the tiny network input); everything else runs inside one fused kernel.
    """
    N, C, H, W = x_nchw.shape
    Ho = (H - 1) // 2 + 1
    Wo = (W - 1) // 2 + 1
    xp = jnp.pad(x_nchw, ((0, 0), (0, 0), (1, 1), (1, 1)))
    taps = [xp[:, :, kh:kh + 2 * Ho:2, kw:kw + 2 * Wo:2]
            for kh in range(3) for kw in range(3)]
    p = jnp.stack(taps, axis=1)                  # (N, 9, C, Ho, Wo)
    p = p.transpose(0, 3, 4, 1, 2)               # (N, Ho, Wo, 9, C)
    return p.reshape(N, Ho * Wo, 9 * C).astype(jnp.bfloat16)


def shufflenet_forward(x_nchw, packed):
    meta = packed['meta']
    arrays = packed['arrays']
    N, _, H, W = x_nchw.shape
    assert (H, W) == (meta['H'], meta['W']), 'params packed for different HxW'
    patches = _stem_im2col(x_nchw)
    num_class = meta['num_class']

    in_specs = [pl.BlockSpec((1,) + patches.shape[1:], lambda n: (n, 0, 0))]
    in_specs += [_rep_spec(a) for a in arrays]

    out = pl.pallas_call(
        _make_kernel(meta),
        out_shape=jax.ShapeDtypeStruct((N, 1, num_class), jnp.float32),
        grid=(N,),
        in_specs=in_specs,
        out_specs=pl.BlockSpec((1, 1, num_class), lambda n: (n, 0, 0)),
        compiler_params=pltpu.CompilerParams(
            dimension_semantics=("parallel",)),
    )(patches, *arrays)
    return out[:, 0, :]


# ----------------------------------------------------------------------------
# Parameter packing (fold BN / split / concat / shuffle into the weights)
# ----------------------------------------------------------------------------

def _pack_block(raw_b, stride, Hi, Wi):
    s1, b1 = (np.asarray(t, np.float32) for t in raw_b['bn1'])
    sdw, bdw = (np.asarray(t, np.float32) for t in raw_b['bn_dw'])
    s2, b2 = (np.asarray(t, np.float32) for t in raw_b['bn2'])
    w1 = np.asarray(raw_b['w1'], np.float32)
    w2 = np.asarray(raw_b['w2'], np.float32)
    dw = np.asarray(raw_b['dw'], np.float32).reshape(9, 1, -1)
    bf = w2.shape[0]
    cout = 2 * bf

    mats, kinds, Ho, Wo = _conv3x3_gather_info(Hi, Wi, stride)
    gen = [k for k in range(9) if kinds[k] == 'general']
    idt = [k for k in range(9) if kinds[k] == 'identity']

    if stride == 1:
        # conv1 sees only the second input-channel half -> zero-padded rows;
        # shuffle: branch -> odd output lanes, pass-through -> even lanes.
        w1e = np.concatenate([np.zeros((bf, bf), np.float32), w1], axis=0)
        spread = np.zeros((bf, cout), np.float32)
        spread[np.arange(bf), 2 * np.arange(bf) + 1] = 1.0
        passw = np.zeros((cout, cout), np.float32)
        passw[np.arange(bf), 2 * np.arange(bf)] = 1.0
    else:
        # forward() concatenates branch2(x) with itself, then shuffles:
        # every branch channel lands on output lanes 2j and 2j+1.
        w1e = w1
        spread = np.zeros((bf, cout), np.float32)
        spread[np.arange(bf), 2 * np.arange(bf)] = 1.0
        spread[np.arange(bf), 2 * np.arange(bf) + 1] = 1.0
        passw = None

    arrays = [
        jnp.asarray(w1e * s1[None, :], dtype=jnp.bfloat16),
        jnp.asarray(b1.reshape(1, bf), dtype=jnp.float32),
    ]
    if gen:
        gstack = np.concatenate([mats[k] for k in gen], axis=0)
        arrays.append(jnp.asarray(gstack, dtype=jnp.bfloat16))
    arrays += [
        jnp.asarray(dw * sdw.reshape(1, 1, bf), dtype=jnp.float32),
        jnp.asarray(bdw.reshape(1, bf), dtype=jnp.float32),
        jnp.asarray((w2 * s2[None, :]) @ spread, dtype=jnp.bfloat16),
        jnp.asarray((b2 @ spread).reshape(1, cout), dtype=jnp.float32),
    ]
    if passw is not None:
        arrays.append(jnp.asarray(passw, dtype=jnp.bfloat16))

    bmeta = dict(stride=stride, Mo=Ho * Wo, gen_taps=gen, id_taps=idt)
    return arrays, bmeta, Ho, Wo


def pack_params(raw, H, W):
    arrays = []
    meta = {'H': H, 'W': W}

    # stem Con1 (3x3 / s2 / p1 conv + BN + ReLU) as a (27, C0) im2col weight
    w = np.asarray(raw['con1_w'], np.float32)            # (3, 3, 3, C0)
    s0, b0 = (np.asarray(t, np.float32) for t in raw['con1_bn'])
    c0 = s0.shape[0]
    arrays.append(jnp.asarray(w.reshape(9 * w.shape[2], c0) * s0[None, :],
                              dtype=jnp.bfloat16))
    arrays.append(jnp.asarray(b0.reshape(1, c0), dtype=jnp.float32))
    H1 = (H - 1) // 2 + 1
    W1 = (W - 1) // 2 + 1

    # MaxPool 3x3 / s2 / p1 as one stacked gather matrix
    mats, _, H2, W2 = _conv3x3_gather_info(H1, W1, 2)
    arrays.append(jnp.asarray(np.concatenate(mats, axis=0), dtype=jnp.bfloat16))
    meta['mp_Mo'] = H2 * W2
    meta['mp_T'] = 9

    # stages 2..4
    blocks_meta = []
    Hc, Wc = H2, W2
    for blocks in raw['stages']:
        for i, rb in enumerate(blocks):
            stride = 2 if i == 0 else 1
            barrs, bmeta, Hc, Wc = _pack_block(rb, stride, Hc, Wc)
            arrays += barrs
            blocks_meta.append(bmeta)
    meta['blocks'] = blocks_meta

    # head: Con5 (1x1 conv + bias + BN + ReLU) + FC
    s5, b5 = (np.asarray(t, np.float32) for t in raw['con5_bn'])
    w5 = np.asarray(raw['con5_w'], np.float32)
    cb5 = np.asarray(raw['con5_b'], np.float32)
    c5 = s5.shape[0]
    arrays.append(jnp.asarray(w5 * s5[None, :], dtype=jnp.bfloat16))
    arrays.append(jnp.asarray((b5 + cb5 * s5).reshape(1, c5), dtype=jnp.float32))
    arrays.append(jnp.asarray(np.asarray(raw['fc_w'], np.float32),
                              dtype=jnp.bfloat16))
    fcb = np.asarray(raw['fc_b'], np.float32).reshape(1, -1)
    arrays.append(jnp.asarray(fcb, dtype=jnp.float32))
    meta['num_class'] = fcb.shape[1]

    return dict(arrays=arrays, meta=meta)


# ----------------------------------------------------------------------------
# Deterministic synthetic parameters (shapes per the reference module)
# ----------------------------------------------------------------------------

class KeyGen:
    def __init__(self, seed=0):
        self.key = jax.random.PRNGKey(seed)

    def __call__(self):
        self.key, sub = jax.random.split(self.key)
        return sub


def make_bn(kg, c, eps=1e-5):
    gamma = 1.0 + 0.1 * jax.random.normal(kg(), (c,), jnp.float32)
    beta = 0.1 * jax.random.normal(kg(), (c,), jnp.float32)
    # Inference-mode BN folded with default running stats (mean=0, var=1).
    # TODO(synk): real trained weights would need their actual running stats.
    scale = gamma / jnp.sqrt(jnp.ones((c,), jnp.float32) + eps)
    return scale, beta


def make_branch2_raw(kg, cin, bf):
    return dict(
        w1=0.1 * jax.random.normal(kg(), (cin, bf), jnp.float32),
        bn1=make_bn(kg, bf),
        dw=0.1 * jax.random.normal(kg(), (3, 3, bf), jnp.float32),
        bn_dw=make_bn(kg, bf),
        w2=0.1 * jax.random.normal(kg(), (bf, bf), jnp.float32),
        bn2=make_bn(kg, bf),
    )


def build_raw_params(kg, stage_repeat, stage_out_channel, num_class):
    assert len(stage_repeat) == 3 and len(stage_out_channel) == 5
    raw = {}
    c0 = stage_out_channel[0]
    raw['con1_w'] = 0.1 * jax.random.normal(kg(), (3, 3, 3, c0), jnp.float32)
    raw['con1_bn'] = make_bn(kg, c0)
    in_c = c0
    stages = []
    for repeat, out_c in zip(stage_repeat, stage_out_channel[1:4]):
        assert out_c % 2 == 0
        bf = out_c // 2
        blocks = [make_branch2_raw(kg, in_c, bf)]
        for _ in range(repeat - 1):
            blocks.append(make_branch2_raw(kg, bf, bf))
        stages.append(blocks)
        in_c = out_c
    raw['stages'] = stages
    c5 = stage_out_channel[-1]
    raw['con5_w'] = 0.1 * jax.random.normal(kg(), (in_c, c5), jnp.float32)
    raw['con5_b'] = 0.1 * jax.random.normal(kg(), (c5,), jnp.float32)
    raw['con5_bn'] = make_bn(kg, c5)
    raw['fc_w'] = 0.1 * jax.random.normal(kg(), (c5, num_class), jnp.float32)
    raw['fc_b'] = 0.1 * jax.random.normal(kg(), (num_class,), jnp.float32)
    return raw


# ----------------------------------------------------------------------------
# Main
# ----------------------------------------------------------------------------

if __name__ == "__main__":
    stage_repeat = [2, 2, 2]
    stage_out_channel = [8, 16, 32, 64, 128]
    num_class = 16
    H = W = 32

    kg = KeyGen(seed=0)
    raw = build_raw_params(kg, stage_repeat, stage_out_channel, num_class)
    packed = pack_params(raw, H, W)

    x = jax.random.normal(jax.random.PRNGKey(0), (2, 3, H, W), jnp.float32)

    fwd = jax.jit(lambda inp: shufflenet_forward(inp, packed))
    logits = jax.block_until_ready(fwd(x))

    assert logits.shape == (2, num_class), logits.shape
    assert bool(jnp.all(jnp.isfinite(logits)))
    print("KERNEL_OK")
</pallas_src>

<mosaic_0001>
module attributes {stable_mosaic.version = 11 : i64} {
  func.func @kernel(%arg0: i32, %arg1: memref<1x256x27xbf16, #tpu.memory_space<vmem>>, %arg2: memref<27x8xbf16, #tpu.memory_space<vmem>>, %arg3: memref<1x8xf32, #tpu.memory_space<vmem>>, %arg4: memref<576x256xbf16, #tpu.memory_space<vmem>>, %arg5: memref<8x8xbf16, #tpu.memory_space<vmem>>, %arg6: memref<1x8xf32, #tpu.memory_space<vmem>>, %arg7: memref<144x64xbf16, #tpu.memory_space<vmem>>, %arg8: memref<9x1x8xf32, #tpu.memory_space<vmem>>, %arg9: memref<1x8xf32, #tpu.memory_space<vmem>>, %arg10: memref<8x16xbf16, #tpu.memory_space<vmem>>, %arg11: memref<1x16xf32, #tpu.memory_space<vmem>>, %arg12: memref<16x8xbf16, #tpu.memory_space<vmem>>, %arg13: memref<1x8xf32, #tpu.memory_space<vmem>>, %arg14: memref<128x16xbf16, #tpu.memory_space<vmem>>, %arg15: memref<9x1x8xf32, #tpu.memory_space<vmem>>, %arg16: memref<1x8xf32, #tpu.memory_space<vmem>>, %arg17: memref<8x16xbf16, #tpu.memory_space<vmem>>, %arg18: memref<1x16xf32, #tpu.memory_space<vmem>>, %arg19: memref<16x16xbf16, #tpu.memory_space<vmem>>, %arg20: memref<16x16xbf16, #tpu.memory_space<vmem>>, %arg21: memref<1x16xf32, #tpu.memory_space<vmem>>, %arg22: memref<36x16xbf16, #tpu.memory_space<vmem>>, %arg23: memref<9x1x16xf32, #tpu.memory_space<vmem>>, %arg24: memref<1x16xf32, #tpu.memory_space<vmem>>, %arg25: memref<16x32xbf16, #tpu.memory_space<vmem>>, %arg26: memref<1x32xf32, #tpu.memory_space<vmem>>, %arg27: memref<32x16xbf16, #tpu.memory_space<vmem>>, %arg28: memref<1x16xf32, #tpu.memory_space<vmem>>, %arg29: memref<32x4xbf16, #tpu.memory_space<vmem>>, %arg30: memref<9x1x16xf32, #tpu.memory_space<vmem>>, %arg31: memref<1x16xf32, #tpu.memory_space<vmem>>, %arg32: memref<16x32xbf16, #tpu.memory_space<vmem>>, %arg33: memref<1x32xf32, #tpu.memory_space<vmem>>, %arg34: memref<32x32xbf16, #tpu.memory_space<vmem>>, %arg35: memref<32x32xbf16, #tpu.memory_space<vmem>>, %arg36: memref<1x32xf32, #tpu.memory_space<vmem>>, %arg37: memref<4x4xbf16, #tpu.memory_space<vmem>>, %arg38: memref<9x1x32xf32, #tpu.memory_space<vmem>>, %arg39: memref<1x32xf32, #tpu.memory_space<vmem>>, %arg40: memref<32x64xbf16, #tpu.memory_space<vmem>>, %arg41: memref<1x64xf32, #tpu.memory_space<vmem>>, %arg42: memref<64x32xbf16, #tpu.memory_space<vmem>>, %arg43: memref<1x32xf32, #tpu.memory_space<vmem>>, %arg44: memref<9x1x32xf32, #tpu.memory_space<vmem>>, %arg45: memref<1x32xf32, #tpu.memory_space<vmem>>, %arg46: memref<32x64xbf16, #tpu.memory_space<vmem>>, %arg47: memref<1x64xf32, #tpu.memory_space<vmem>>, %arg48: memref<64x64xbf16, #tpu.memory_space<vmem>>, %arg49: memref<64x128xbf16, #tpu.memory_space<vmem>>, %arg50: memref<1x128xf32, #tpu.memory_space<vmem>>, %arg51: memref<128x16xbf16, #tpu.memory_space<vmem>>, %arg52: memref<1x16xf32, #tpu.memory_space<vmem>>, %arg53: memref<1x1x16xf32, #tpu.memory_space<vmem>>) attributes {dimension_semantics = [#tpu.dimension_semantics<parallel>], iteration_bounds = array<i64: 2>, scalar_prefetch = 0 : i64, scratch_operands = 0 : i64, tpu.core_type = #tpu.core_type<tc>, window_params = [{transform_indices = @transform_0, window_bounds = array<i64: 1, 256, 27>}, {pipeline_mode = #tpu.pipeline_mode<synchronous>, transform_indices = @transform_1, window_bounds = array<i64: 27, 8>}, {pipeline_mode = #tpu.pipeline_mode<synchronous>, transform_indices = @transform_2, window_bounds = array<i64: 1, 8>}, {pipeline_mode = #tpu.pipeline_mode<synchronous>, transform_indices = @transform_3, window_bounds = array<i64: 576, 256>}, {pipeline_mode = #tpu.pipeline_mode<synchronous>, transform_indices = @transform_4, window_bounds = array<i64: 8, 8>}, {pipeline_mode = #tpu.pipeline_mode<synchronous>, transform_indices = @transform_5, window_bounds = array<i64: 1, 8>}, {pipeline_mode = #tpu.pipeline_mode<synchronous>, transform_indices = @transform_6, window_bounds = array<i64: 144, 64>}, {pipeline_mode = #tpu.pipeline_mode<synchronous>, transform_indices = @transform_7, window_bounds = array<i64: 9, 1, 8>}, {pipeline_mode = #tpu.pipeline_mode<synchronous>, transform_indices = @transform_8, window_bounds = array<i64: 1, 8>}, {pipeline_mode = #tpu.pipeline_mode<synchronous>, transform_indices = @transform_9, window_bounds = array<i64: 8, 16>}, {pipeline_mode = #tpu.pipeline_mode<synchronous>, transform_indices = @transform_10, window_bounds = array<i64: 1, 16>}, {pipeline_mode = #tpu.pipeline_mode<synchronous>, transform_indices = @transform_11, window_bounds = array<i64: 16, 8>}, {pipeline_mode = #tpu.pipeline_mode<synchronous>, transform_indices = @transform_12, window_bounds = array<i64: 1, 8>}, {pipeline_mode = #tpu.pipeline_mode<synchronous>, transform_indices = @transform_13, window_bounds = array<i64: 128, 16>}, {pipeline_mode = #tpu.pipeline_mode<synchronous>, transform_indices = @transform_14, window_bounds = array<i64: 9, 1, 8>}, {pipeline_mode = #tpu.pipeline_mode<synchronous>, transform_indices = @transform_15, window_bounds = array<i64: 1, 8>}, {pipeline_mode = #tpu.pipeline_mode<synchronous>, transform_indices = @transform_16, window_bounds = array<i64: 8, 16>}, {pipeline_mode = #tpu.pipeline_mode<synchronous>, transform_indices = @transform_17, window_bounds = array<i64: 1, 16>}, {pipeline_mode = #tpu.pipeline_mode<synchronous>, transform_indices = @transform_18, window_bounds = array<i64: 16, 16>}, {pipeline_mode = #tpu.pipeline_mode<synchronous>, transform_indices = @transform_19, window_bounds = array<i64: 16, 16>}, {pipeline_mode = #tpu.pipeline_mode<synchronous>, transform_indices = @transform_20, window_bounds = array<i64: 1, 16>}, {pipeline_mode = #tpu.pipeline_mode<synchronous>, transform_indices = @transform_21, window_bounds = array<i64: 36, 16>}, {pipeline_mode = #tpu.pipeline_mode<synchronous>, transform_indices = @transform_22, window_bounds = array<i64: 9, 1, 16>}, {pipeline_mode = #tpu.pipeline_mode<synchronous>, transform_indices = @transform_23, window_bounds = array<i64: 1, 16>}, {pipeline_mode = #tpu.pipeline_mode<synchronous>, transform_indices = @transform_24, window_bounds = array<i64: 16, 32>}, {pipeline_mode = #tpu.pipeline_mode<synchronous>, transform_indices = @transform_25, window_bounds = array<i64: 1, 32>}, {pipeline_mode = #tpu.pipeline_mode<synchronous>, transform_indices = @transform_26, window_bounds = array<i64: 32, 16>}, {pipeline_mode = #tpu.pipeline_mode<synchronous>, transform_indices = @transform_27, window_bounds = array<i64: 1, 16>}, {pipeline_mode = #tpu.pipeline_mode<synchronous>, transform_indices = @transform_28, window_bounds = array<i64: 32, 4>}, {pipeline_mode = #tpu.pipeline_mode<synchronous>, transform_indices = @transform_29, window_bounds = array<i64: 9, 1, 16>}, {pipeline_mode = #tpu.pipeline_mode<synchronous>, transform_indices = @transform_30, window_bounds = array<i64: 1, 16>}, {pipeline_mode = #tpu.pipeline_mode<synchronous>, transform_indices = @transform_31, window_bounds = array<i64: 16, 32>}, {pipeline_mode = #tpu.pipeline_mode<synchronous>, transform_indices = @transform_32, window_bounds = array<i64: 1, 32>}, {pipeline_mode = #tpu.pipeline_mode<synchronous>, transform_indices = @transform_33, window_bounds = array<i64: 32, 32>}, {pipeline_mode = #tpu.pipeline_mode<synchronous>, transform_indices = @transform_34, window_bounds = array<i64: 32, 32>}, {pipeline_mode = #tpu.pipeline_mode<synchronous>, transform_indices = @transform_35, window_bounds = array<i64: 1, 32>}, {pipeline_mode = #tpu.pipeline_mode<synchronous>, transform_indices = @transform_36, window_bounds = array<i64: 4, 4>}, {pipeline_mode = #tpu.pipeline_mode<synchronous>, transform_indices = @transform_37, window_bounds = array<i64: 9, 1, 32>}, {pipeline_mode = #tpu.pipeline_mode<synchronous>, transform_indices = @transform_38, window_bounds = array<i64: 1, 32>}, {pipeline_mode = #tpu.pipeline_mode<synchronous>, transform_indices = @transform_39, window_bounds = array<i64: 32, 64>}, {pipeline_mode = #tpu.pipeline_mode<synchronous>, transform_indices = @transform_40, window_bounds = array<i64: 1, 64>}, {pipeline_mode = #tpu.pipeline_mode<synchronous>, transform_indices = @transform_41, window_bounds = array<i64: 64, 32>}, {pipeline_mode = #tpu.pipeline_mode<synchronous>, transform_indices = @transform_42, window_bounds = array<i64: 1, 32>}, {pipeline_mode = #tpu.pipeline_mode<synchronous>, transform_indices = @transform_43, window_bounds = array<i64: 9, 1, 32>}, {pipeline_mode = #tpu.pipeline_mode<synchronous>, transform_indices = @transform_44, window_bounds = array<i64: 1, 32>}, {pipeline_mode = #tpu.pipeline_mode<synchronous>, transform_indices = @transform_45, window_bounds = array<i64: 32, 64>}, {pipeline_mode = #tpu.pipeline_mode<synchronous>, transform_indices = @transform_46, window_bounds = array<i64: 1, 64>}, {pipeline_mode = #tpu.pipeline_mode<synchronous>, transform_indices = @transform_47, window_bounds = array<i64: 64, 64>}, {pipeline_mode = #tpu.pipeline_mode<synchronous>, transform_indices = @transform_48, window_bounds = array<i64: 64, 128>}, {pipeline_mode = #tpu.pipeline_mode<synchronous>, transform_indices = @transform_49, window_bounds = array<i64: 1, 128>}, {pipeline_mode = #tpu.pipeline_mode<synchronous>, transform_indices = @transform_50, window_bounds = array<i64: 128, 16>}, {pipeline_mode = #tpu.pipeline_mode<synchronous>, transform_indices = @transform_51, window_bounds = array<i64: 1, 16>}, {transform_indices = @transform_52, window_bounds = array<i64: 1, 1, 16>}]} {
    %c0 = arith.constant 0 : index
    %c0_0 = arith.constant 0 : index
    %c0_1 = arith.constant 0 : index
    %0 = vector.load %arg1[%c0, %c0_0, %c0_1] : memref<1x256x27xbf16, #tpu.memory_space<vmem>>, vector<1x256x27xbf16>
    %1 = vector.shape_cast %0 : vector<1x256x27xbf16> to vector<256x27xbf16>
    %c0_2 = arith.constant 0 : index
    %c0_3 = arith.constant 0 : index
    %2 = vector.load %arg2[%c0_2, %c0_3] : memref<27x8xbf16, #tpu.memory_space<vmem>>, vector<27x8xbf16>
    %c0_4 = arith.constant 0 : index
    %c0_5 = arith.constant 0 : index
    %3 = vector.load %arg3[%c0_4, %c0_5] : memref<1x8xf32, #tpu.memory_space<vmem>>, vector<1x8xf32>
    %cst = arith.constant dense<0.000000e+00> : vector<256x8xf32>
    %4 = tpu.matmul %1, %2, %cst {dimension_numbers = #tpu.dot_dimension_numbers<[1], [0], [0], [1], [0, 0, 1, 1], [], []>} : vector<256x27xbf16>, vector<27x8xbf16>, vector<256x8xf32> -> vector<256x8xf32>
    %5 = vector.broadcast %3 : vector<1x8xf32> to vector<256x8xf32>
    %6 = arith.addf %4, %5 : vector<256x8xf32>
    %cst_6 = arith.constant 0.000000e+00 : f32
    %7 = vector.broadcast %cst_6 : f32 to vector<256x8xf32>
    %8 = arith.maximumf %6, %7 : vector<256x8xf32>
    %9 = arith.truncf %8 : vector<256x8xf32> to vector<256x8xbf16>
    %c0_7 = arith.constant 0 : index
    %c0_8 = arith.constant 0 : index
    %10 = vector.load %arg4[%c0_7, %c0_8] : memref<576x256xbf16, #tpu.memory_space<vmem>>, vector<576x256xbf16>
    %cst_9 = arith.constant dense<0.000000e+00> : vector<576x8xf32>
    %11 = tpu.matmul %10, %9, %cst_9 {dimension_numbers = #tpu.dot_dimension_numbers<[1], [0], [0], [1], [0, 0, 1, 1], [], []>} : vector<576x256xbf16>, vector<256x8xbf16>, vector<576x8xf32> -> vector<576x8xf32>
    %12 = vector.extract_strided_slice %11 {offsets = [0, 0], sizes = [64, 8], strides = [1, 1]} : vector<576x8xf32> to vector<64x8xf32>
    %13 = vector.extract_strided_slice %11 {offsets = [64, 0], sizes = [64, 8], strides = [1, 1]} : vector<576x8xf32> to vector<64x8xf32>
    %14 = arith.maximumf %12, %13 : vector<64x8xf32>
    %15 = vector.extract_strided_slice %11 {offsets = [128, 0], sizes = [64, 8], strides = [1, 1]} : vector<576x8xf32> to vector<64x8xf32>
    %16 = arith.maximumf %14, %15 : vector<64x8xf32>
    %17 = vector.extract_strided_slice %11 {offsets = [192, 0], sizes = [64, 8], strides = [1, 1]} : vector<576x8xf32> to vector<64x8xf32>
    %18 = arith.maximumf %16, %17 : vector<64x8xf32>
    %19 = vector.extract_strided_slice %11 {offsets = [256, 0], sizes = [64, 8], strides = [1, 1]} : vector<576x8xf32> to vector<64x8xf32>
    %20 = arith.maximumf %18, %19 : vector<64x8xf32>
    %21 = vector.extract_strided_slice %11 {offsets = [320, 0], sizes = [64, 8], strides = [1, 1]} : vector<576x8xf32> to vector<64x8xf32>
    %22 = arith.maximumf %20, %21 : vector<64x8xf32>
    %23 = vector.extract_strided_slice %11 {offsets = [384, 0], sizes = [64, 8], strides = [1, 1]} : vector<576x8xf32> to vector<64x8xf32>
    %24 = arith.maximumf %22, %23 : vector<64x8xf32>
    %25 = vector.extract_strided_slice %11 {offsets = [448, 0], sizes = [64, 8], strides = [1, 1]} : vector<576x8xf32> to vector<64x8xf32>
    %26 = arith.maximumf %24, %25 : vector<64x8xf32>
    %27 = vector.extract_strided_slice %11 {offsets = [512, 0], sizes = [64, 8], strides = [1, 1]} : vector<576x8xf32> to vector<64x8xf32>
    %28 = arith.maximumf %26, %27 : vector<64x8xf32>
    %29 = arith.truncf %28 : vector<64x8xf32> to vector<64x8xbf16>
    %c0_10 = arith.constant 0 : index
    %c0_11 = arith.constant 0 : index
    %30 = vector.load %arg5[%c0_10, %c0_11] : memref<8x8xbf16, #tpu.memory_space<vmem>>, vector<8x8xbf16>
    %c0_12 = arith.constant 0 : index
    %c0_13 = arith.constant 0 : index
    %31 = vector.load %arg6[%c0_12, %c0_13] : memref<1x8xf32, #tpu.memory_space<vmem>>, vector<1x8xf32>
    %c0_14 = arith.constant 0 : index
    %c0_15 = arith.constant 0 : index
    %32 = vector.load %arg9[%c0_14, %c0_15] : memref<1x8xf32, #tpu.memory_space<vmem>>, vector<1x8xf32>
    %c0_16 = arith.constant 0 : index
    %c0_17 = arith.constant 0 : index
    %33 = vector.load %arg10[%c0_16, %c0_17] : memref<8x16xbf16, #tpu.memory_space<vmem>>, vector<8x16xbf16>
    %c0_18 = arith.constant 0 : index
    %c0_19 = arith.constant 0 : index
    %34 = vector.load %arg11[%c0_18, %c0_19] : memref<1x16xf32, #tpu.memory_space<vmem>>, vector<1x16xf32>
    %cst_20 = arith.constant dense<0.000000e+00> : vector<64x8xf32>
    %35 = tpu.matmul %29, %30, %cst_20 {dimension_numbers = #tpu.dot_dimension_numbers<[1], [0], [0], [1], [0, 0, 1, 1], [], []>} : vector<64x8xbf16>, vector<8x8xbf16>, vector<64x8xf32> -> vector<64x8xf32>
    %36 = vector.broadcast %31 : vector<1x8xf32> to vector<64x8xf32>
    %37 = arith.addf %35, %36 : vector<64x8xf32>
    %cst_21 = arith.constant 0.000000e+00 : f32
    %38 = vector.broadcast %cst_21 : f32 to vector<64x8xf32>
    %39 = arith.maximumf %37, %38 : vector<64x8xf32>
    %40 = arith.truncf %39 : vector<64x8xf32> to vector<64x8xbf16>
    %c0_22 = arith.constant 0 : index
    %c0_23 = arith.constant 0 : index
    %41 = vector.load %arg7[%c0_22, %c0_23] : memref<144x64xbf16, #tpu.memory_space<vmem>>, vector<144x64xbf16>
    %cst_24 = arith.constant dense<0.000000e+00> : vector<144x8xf32>
    %42 = tpu.matmul %41, %40, %cst_24 {dimension_numbers = #tpu.dot_dimension_numbers<[1], [0], [0], [1], [0, 0, 1, 1], [], []>} : vector<144x64xbf16>, vector<64x8xbf16>, vector<144x8xf32> -> vector<144x8xf32>
    %43 = vector.extract_strided_slice %42 {offsets = [0, 0], sizes = [16, 8], strides = [1, 1]} : vector<144x8xf32> to vector<16x8xf32>
    %c0_25 = arith.constant 0 : index
    %c0_26 = arith.constant 0 : index
    %c0_27 = arith.constant 0 : index
    %44 = vector.load %arg8[%c0_25, %c0_26, %c0_27] : memref<9x1x8xf32, #tpu.memory_space<vmem>>, vector<1x1x8xf32>
    %45 = vector.shape_cast %44 : vector<1x1x8xf32> to vector<1x8xf32>
    %46 = vector.broadcast %45 : vector<1x8xf32> to vector<16x8xf32>
    %47 = arith.mulf %43, %46 : vector<16x8xf32>
    %48 = vector.extract_strided_slice %42 {offsets = [16, 0], sizes = [16, 8], strides = [1, 1]} : vector<144x8xf32> to vector<16x8xf32>
    %c1 = arith.constant 1 : index
    %c0_28 = arith.constant 0 : index
    %c0_29 = arith.constant 0 : index
    %49 = vector.load %arg8[%c1, %c0_28, %c0_29] : memref<9x1x8xf32, #tpu.memory_space<vmem>>, vector<1x1x8xf32>
    %50 = vector.shape_cast %49 : vector<1x1x8xf32> to vector<1x8xf32>
    %51 = vector.broadcast %50 : vector<1x8xf32> to vector<16x8xf32>
    %52 = arith.mulf %48, %51 : vector<16x8xf32>
    %53 = arith.addf %47, %52 : vector<16x8xf32>
    %54 = vector.extract_strided_slice %42 {offsets = [32, 0], sizes = [16, 8], strides = [1, 1]} : vector<144x8xf32> to vector<16x8xf32>
    %c2 = arith.constant 2 : index
    %c0_30 = arith.constant 0 : index
    %c0_31 = arith.constant 0 : index
    %55 = vector.load %arg8[%c2, %c0_30, %c0_31] : memref<9x1x8xf32, #tpu.memory_space<vmem>>, vector<1x1x8xf32>
    %56 = vector.shape_cast %55 : vector<1x1x8xf32> to vector<1x8xf32>
    %57 = vector.broadcast %56 : vector<1x8xf32> to vector<16x8xf32>
    %58 = arith.mulf %54, %57 : vector<16x8xf32>
    %59 = arith.addf %53, %58 : vector<16x8xf32>
    %60 = vector.extract_strided_slice %42 {offsets = [48, 0], sizes = [16, 8], strides = [1, 1]} : vector<144x8xf32> to vector<16x8xf32>
    %c3 = arith.constant 3 : index
    %c0_32 = arith.constant 0 : index
    %c0_33 = arith.constant 0 : index
    %61 = vector.load %arg8[%c3, %c0_32, %c0_33] : memref<9x1x8xf32, #tpu.memory_space<vmem>>, vector<1x1x8xf32>
    %62 = vector.shape_cast %61 : vector<1x1x8xf32> to vector<1x8xf32>
    %63 = vector.broadcast %62 : vector<1x8xf32> to vector<16x8xf32>
    %64 = arith.mulf %60, %63 : vector<16x8xf32>
    %65 = arith.addf %59, %64 : vector<16x8xf32>
    %66 = vector.extract_strided_slice %42 {offsets = [64, 0], sizes = [16, 8], strides = [1, 1]} : vector<144x8xf32> to vector<16x8xf32>
    %c4 = arith.constant 4 : index
    %c0_34 = arith.constant 0 : index
    %c0_35 = arith.constant 0 : index
    %67 = vector.load %arg8[%c4, %c0_34, %c0_35] : memref<9x1x8xf32, #tpu.memory_space<vmem>>, vector<1x1x8xf32>
    %68 = vector.shape_cast %67 : vector<1x1x8xf32> to vector<1x8xf32>
    %69 = vector.broadcast %68 : vector<1x8xf32> to vector<16x8xf32>
    %70 = arith.mulf %66, %69 : vector<16x8xf32>
    %71 = arith.addf %65, %70 : vector<16x8xf32>
    %72 = vector.extract_strided_slice %42 {offsets = [80, 0], sizes = [16, 8], strides = [1, 1]} : vector<144x8xf32> to vector<16x8xf32>
    %c5 = arith.constant 5 : index
    %c0_36 = arith.constant 0 : index
    %c0_37 = arith.constant 0 : index
    %73 = vector.load %arg8[%c5, %c0_36, %c0_37] : memref<9x1x8xf32, #tpu.memory_space<vmem>>, vector<1x1x8xf32>
    %74 = vector.shape_cast %73 : vector<1x1x8xf32> to vector<1x8xf32>
    %75 = vector.broadcast %74 : vector<1x8xf32> to vector<16x8xf32>
    %76 = arith.mulf %72, %75 : vector<16x8xf32>
    %77 = arith.addf %71, %76 : vector<16x8xf32>
    %78 = vector.extract_strided_slice %42 {offsets = [96, 0], sizes = [16, 8], strides = [1, 1]} : vector<144x8xf32> to vector<16x8xf32>
    %c6 = arith.constant 6 : index
    %c0_38 = arith.constant 0 : index
    %c0_39 = arith.constant 0 : index
    %79 = vector.load %arg8[%c6, %c0_38, %c0_39] : memref<9x1x8xf32, #tpu.memory_space<vmem>>, vector<1x1x8xf32>
    %80 = vector.shape_cast %79 : vector<1x1x8xf32> to vector<1x8xf32>
    %81 = vector.broadcast %80 : vector<1x8xf32> to vector<16x8xf32>
    %82 = arith.mulf %78, %81 : vector<16x8xf32>
    %83 = arith.addf %77, %82 : vector<16x8xf32>
    %84 = vector.extract_strided_slice %42 {offsets = [112, 0], sizes = [16, 8], strides = [1, 1]} : vector<144x8xf32> to vector<16x8xf32>
    %c7 = arith.constant 7 : index
    %c0_40 = arith.constant 0 : index
    %c0_41 = arith.constant 0 : index
    %85 = vector.load %arg8[%c7, %c0_40, %c0_41] : memref<9x1x8xf32, #tpu.memory_space<vmem>>, vector<1x1x8xf32>
    %86 = vector.shape_cast %85 : vector<1x1x8xf32> to vector<1x8xf32>
    %87 = vector.broadcast %86 : vector<1x8xf32> to vector<16x8xf32>
    %88 = arith.mulf %84, %87 : vector<16x8xf32>
    %89 = arith.addf %83, %88 : vector<16x8xf32>
    %90 = vector.extract_strided_slice %42 {offsets = [128, 0], sizes = [16, 8], strides = [1, 1]} : vector<144x8xf32> to vector<16x8xf32>
    %c8 = arith.constant 8 : index
    %c0_42 = arith.constant 0 : index
    %c0_43 = arith.constant 0 : index
    %91 = vector.load %arg8[%c8, %c0_42, %c0_43] : memref<9x1x8xf32, #tpu.memory_space<vmem>>, vector<1x1x8xf32>
    %92 = vector.shape_cast %91 : vector<1x1x8xf32> to vector<1x8xf32>
    %93 = vector.broadcast %92 : vector<1x8xf32> to vector<16x8xf32>
    %94 = arith.mulf %90, %93 : vector<16x8xf32>
    %95 = arith.addf %89, %94 : vector<16x8xf32>
    %96 = vector.broadcast %32 : vector<1x8xf32> to vector<16x8xf32>
    %97 = arith.addf %95, %96 : vector<16x8xf32>
    %98 = arith.truncf %97 : vector<16x8xf32> to vector<16x8xbf16>
    %cst_44 = arith.constant dense<0.000000e+00> : vector<16x16xf32>
    %99 = tpu.matmul %98, %33, %cst_44 {dimension_numbers = #tpu.dot_dimension_numbers<[1], [0], [0], [1], [0, 0, 1, 1], [], []>} : vector<16x8xbf16>, vector<8x16xbf16>, vector<16x16xf32> -> vector<16x16xf32>
    %100 = vector.broadcast %34 : vector<1x16xf32> to vector<16x16xf32>
    %101 = arith.addf %99, %100 : vector<16x16xf32>
    %cst_45 = arith.constant 0.000000e+00 : f32
    %102 = vector.broadcast %cst_45 : f32 to vector<16x16xf32>
    %103 = arith.maximumf %101, %102 : vector<16x16xf32>
    %104 = arith.truncf %103 : vector<16x16xf32> to vector<16x16xbf16>
    %c0_46 = arith.constant 0 : index
    %c0_47 = arith.constant 0 : index
    %105 = vector.load %arg12[%c0_46, %c0_47] : memref<16x8xbf16, #tpu.memory_space<vmem>>, vector<16x8xbf16>
    %c0_48 = arith.constant 0 : index
    %c0_49 = arith.constant 0 : index
    %106 = vector.load %arg13[%c0_48, %c0_49] : memref<1x8xf32, #tpu.memory_space<vmem>>, vector<1x8xf32>
    %c0_50 = arith.constant 0 : index
    %c0_51 = arith.constant 0 : index
    %107 = vector.load %arg16[%c0_50, %c0_51] : memref<1x8xf32, #tpu.memory_space<vmem>>, vector<1x8xf32>
    %c0_52 = arith.constant 0 : index
    %c0_53 = arith.constant 0 : index
    %108 = vector.load %arg17[%c0_52, %c0_53] : memref<8x16xbf16, #tpu.memory_space<vmem>>, vector<8x16xbf16>
    %c0_54 = arith.constant 0 : index
    %c0_55 = arith.constant 0 : index
    %109 = vector.load %arg18[%c0_54, %c0_55] : memref<1x16xf32, #tpu.memory_space<vmem>>, vector<1x16xf32>
    %c0_56 = arith.constant 0 : index
    %c0_57 = arith.constant 0 : index
    %110 = vector.load %arg19[%c0_56, %c0_57] : memref<16x16xbf16, #tpu.memory_space<vmem>>, vector<16x16xbf16>
    %cst_58 = arith.constant dense<0.000000e+00> : vector<16x8xf32>
    %111 = tpu.matmul %104, %105, %cst_58 {dimension_numbers = #tpu.dot_dimension_numbers<[1], [0], [0], [1], [0, 0, 1, 1], [], []>} : vector<16x16xbf16>, vector<16x8xbf16>, vector<16x8xf32> -> vector<16x8xf32>
    %112 = vector.broadcast %106 : vector<1x8xf32> to vector<16x8xf32>
    %113 = arith.addf %111, %112 : vector<16x8xf32>
    %cst_59 = arith.constant 0.000000e+00 : f32
    %114 = vector.broadcast %cst_59 : f32 to vector<16x8xf32>
    %115 = arith.maximumf %113, %114 : vector<16x8xf32>
    %116 = arith.truncf %115 : vector<16x8xf32> to vector<16x8xbf16>
    %c0_60 = arith.constant 0 : index
    %c0_61 = arith.constant 0 : index
    %117 = vector.load %arg14[%c0_60, %c0_61] : memref<128x16xbf16, #tpu.memory_space<vmem>>, vector<128x16xbf16>
    %cst_62 = arith.constant dense<0.000000e+00> : vector<128x8xf32>
    %118 = tpu.matmul %117, %116, %cst_62 {dimension_numbers = #tpu.dot_dimension_numbers<[1], [0], [0], [1], [0, 0, 1, 1], [], []>} : vector<128x16xbf16>, vector<16x8xbf16>, vector<128x8xf32> -> vector<128x8xf32>
    %119 = vector.extract_strided_slice %118 {offsets = [0, 0], sizes = [16, 8], strides = [1, 1]} : vector<128x8xf32> to vector<16x8xf32>
    %c0_63 = arith.constant 0 : index
    %c0_64 = arith.constant 0 : index
    %c0_65 = arith.constant 0 : index
    %120 = vector.load %arg15[%c0_63, %c0_64, %c0_65] : memref<9x1x8xf32, #tpu.memory_space<vmem>>, vector<1x1x8xf32>
    %121 = vector.shape_cast %120 : vector<1x1x8xf32> to vector<1x8xf32>
    %122 = vector.broadcast %121 : vector<1x8xf32> to vector<16x8xf32>
    %123 = arith.mulf %119, %122 : vector<16x8xf32>
    %124 = vector.extract_strided_slice %118 {offsets = [16, 0], sizes = [16, 8], strides = [1, 1]} : vector<128x8xf32> to vector<16x8xf32>
    %c1_66 = arith.constant 1 : index
    %c0_67 = arith.constant 0 : index
    %c0_68 = arith.constant 0 : index
    %125 = vector.load %arg15[%c1_66, %c0_67, %c0_68] : memref<9x1x8xf32, #tpu.memory_space<vmem>>, vector<1x1x8xf32>
    %126 = vector.shape_cast %125 : vector<1x1x8xf32> to vector<1x8xf32>
    %127 = vector.broadcast %126 : vector<1x8xf32> to vector<16x8xf32>
    %128 = arith.mulf %124, %127 : vector<16x8xf32>
    %129 = arith.addf %123, %128 : vector<16x8xf32>
    %130 = vector.extract_strided_slice %118 {offsets = [32, 0], sizes = [16, 8], strides = [1, 1]} : vector<128x8xf32> to vector<16x8xf32>
    %c2_69 = arith.constant 2 : index
    %c0_70 = arith.constant 0 : index
    %c0_71 = arith.constant 0 : index
    %131 = vector.load %arg15[%c2_69, %c0_70, %c0_71] : memref<9x1x8xf32, #tpu.memory_space<vmem>>, vector<1x1x8xf32>
    %132 = vector.shape_cast %131 : vector<1x1x8xf32> to vector<1x8xf32>
    %133 = vector.broadcast %132 : vector<1x8xf32> to vector<16x8xf32>
    %134 = arith.mulf %130, %133 : vector<16x8xf32>
    %135 = arith.addf %129, %134 : vector<16x8xf32>
    %136 = vector.extract_strided_slice %118 {offsets = [48, 0], sizes = [16, 8], strides = [1, 1]} : vector<128x8xf32> to vector<16x8xf32>
    %c3_72 = arith.constant 3 : index
    %c0_73 = arith.constant 0 : index
    %c0_74 = arith.constant 0 : index
    %137 = vector.load %arg15[%c3_72, %c0_73, %c0_74] : memref<9x1x8xf32, #tpu.memory_space<vmem>>, vector<1x1x8xf32>
    %138 = vector.shape_cast %137 : vector<1x1x8xf32> to vector<1x8xf32>
    %139 = vector.broadcast %138 : vector<1x8xf32> to vector<16x8xf32>
    %140 = arith.mulf %136, %139 : vector<16x8xf32>
    %141 = arith.addf %135, %140 : vector<16x8xf32>
    %142 = vector.extract_strided_slice %118 {offsets = [64, 0], sizes = [16, 8], strides = [1, 1]} : vector<128x8xf32> to vector<16x8xf32>
    %c5_75 = arith.constant 5 : index
    %c0_76 = arith.constant 0 : index
    %c0_77 = arith.constant 0 : index
    %143 = vector.load %arg15[%c5_75, %c0_76, %c0_77] : memref<9x1x8xf32, #tpu.memory_space<vmem>>, vector<1x1x8xf32>
    %144 = vector.shape_cast %143 : vector<1x1x8xf32> to vector<1x8xf32>
    %145 = vector.broadcast %144 : vector<1x8xf32> to vector<16x8xf32>
    %146 = arith.mulf %142, %145 : vector<16x8xf32>
    %147 = arith.addf %141, %146 : vector<16x8xf32>
    %148 = vector.extract_strided_slice %118 {offsets = [80, 0], sizes = [16, 8], strides = [1, 1]} : vector<128x8xf32> to vector<16x8xf32>
    %c6_78 = arith.constant 6 : index
    %c0_79 = arith.constant 0 : index
    %c0_80 = arith.constant 0 : index
    %149 = vector.load %arg15[%c6_78, %c0_79, %c0_80] : memref<9x1x8xf32, #tpu.memory_space<vmem>>, vector<1x1x8xf32>
    %150 = vector.shape_cast %149 : vector<1x1x8xf32> to vector<1x8xf32>
    %151 = vector.broadcast %150 : vector<1x8xf32> to vector<16x8xf32>
    %152 = arith.mulf %148, %151 : vector<16x8xf32>
    %153 = arith.addf %147, %152 : vector<16x8xf32>
    %154 = vector.extract_strided_slice %118 {offsets = [96, 0], sizes = [16, 8], strides = [1, 1]} : vector<128x8xf32> to vector<16x8xf32>
    %c7_81 = arith.constant 7 : index
    %c0_82 = arith.constant 0 : index
    %c0_83 = arith.constant 0 : index
    %155 = vector.load %arg15[%c7_81, %c0_82, %c0_83] : memref<9x1x8xf32, #tpu.memory_space<vmem>>, vector<1x1x8xf32>
    %156 = vector.shape_cast %155 : vector<1x1x8xf32> to vector<1x8xf32>
    %157 = vector.broadcast %156 : vector<1x8xf32> to vector<16x8xf32>
    %158 = arith.mulf %154, %157 : vector<16x8xf32>
    %159 = arith.addf %153, %158 : vector<16x8xf32>
    %160 = vector.extract_strided_slice %118 {offsets = [112, 0], sizes = [16, 8], strides = [1, 1]} : vector<128x8xf32> to vector<16x8xf32>
    %c8_84 = arith.constant 8 : index
    %c0_85 = arith.constant 0 : index
    %c0_86 = arith.constant 0 : index
    %161 = vector.load %arg15[%c8_84, %c0_85, %c0_86] : memref<9x1x8xf32, #tpu.memory_space<vmem>>, vector<1x1x8xf32>
    %162 = vector.shape_cast %161 : vector<1x1x8xf32> to vector<1x8xf32>
    %163 = vector.broadcast %162 : vector<1x8xf32> to vector<16x8xf32>
    %164 = arith.mulf %160, %163 : vector<16x8xf32>
    %165 = arith.addf %159, %164 : vector<16x8xf32>
    %c4_87 = arith.constant 4 : index
    %c0_88 = arith.constant 0 : index
    %c0_89 = arith.constant 0 : index
    %166 = vector.load %arg15[%c4_87, %c0_88, %c0_89] : memref<9x1x8xf32, #tpu.memory_space<vmem>>, vector<1x1x8xf32>
    %167 = vector.shape_cast %166 : vector<1x1x8xf32> to vector<1x8xf32>
    %168 = vector.broadcast %167 : vector<1x8xf32> to vector<16x8xf32>
    %169 = arith.mulf %115, %168 : vector<16x8xf32>
    %170 = arith.addf %165, %169 : vector<16x8xf32>
    %171 = vector.broadcast %107 : vector<1x8xf32> to vector<16x8xf32>
    %172 = arith.addf %170, %171 : vector<16x8xf32>
    %173 = arith.truncf %172 : vector<16x8xf32> to vector<16x8xbf16>
    %cst_90 = arith.constant dense<0.000000e+00> : vector<16x16xf32>
    %174 = tpu.matmul %173, %108, %cst_90 {dimension_numbers = #tpu.dot_dimension_numbers<[1], [0], [0], [1], [0, 0, 1, 1], [], []>} : vector<16x8xbf16>, vector<8x16xbf16>, vector<16x16xf32> -> vector<16x16xf32>
    %175 = vector.broadcast %109 : vector<1x16xf32> to vector<16x16xf32>
    %176 = arith.addf %174, %175 : vector<16x16xf32>
    %cst_91 = arith.constant 0.000000e+00 : f32
    %177 = vector.broadcast %cst_91 : f32 to vector<16x16xf32>
    %178 = arith.maximumf %176, %177 : vector<16x16xf32>
    %cst_92 = arith.constant dense<0.000000e+00> : vector<16x16xf32>
    %179 = tpu.matmul %104, %110, %cst_92 {dimension_numbers = #tpu.dot_dimension_numbers<[1], [0], [0], [1], [0, 0, 1, 1], [], []>} : vector<16x16xbf16>, vector<16x16xbf16>, vector<16x16xf32> -> vector<16x16xf32>
    %180 = arith.addf %178, %179 : vector<16x16xf32>
    %181 = arith.truncf %180 : vector<16x16xf32> to vector<16x16xbf16>
    %c0_93 = arith.constant 0 : index
    %c0_94 = arith.constant 0 : index
    %182 = vector.load %arg20[%c0_93, %c0_94] : memref<16x16xbf16, #tpu.memory_space<vmem>>, vector<16x16xbf16>
    %c0_95 = arith.constant 0 : index
    %c0_96 = arith.constant 0 : index
    %183 = vector.load %arg21[%c0_95, %c0_96] : memref<1x16xf32, #tpu.memory_space<vmem>>, vector<1x16xf32>
    %c0_97 = arith.constant 0 : index
    %c0_98 = arith.constant 0 : index
    %184 = vector.load %arg24[%c0_97, %c0_98] : memref<1x16xf32, #tpu.memory_space<vmem>>, vector<1x16xf32>
    %c0_99 = arith.constant 0 : index
    %c0_100 = arith.constant 0 : index
    %185 = vector.load %arg25[%c0_99, %c0_100] : memref<16x32xbf16, #tpu.memory_space<vmem>>, vector<16x32xbf16>
    %c0_101 = arith.constant 0 : index
    %c0_102 = arith.constant 0 : index
    %186 = vector.load %arg26[%c0_101, %c0_102] : memref<1x32xf32, #tpu.memory_space<vmem>>, vector<1x32xf32>
    %cst_103 = arith.constant dense<0.000000e+00> : vector<16x16xf32>
    %187 = tpu.matmul %181, %182, %cst_103 {dimension_numbers = #tpu.dot_dimension_numbers<[1], [0], [0], [1], [0, 0, 1, 1], [], []>} : vector<16x16xbf16>, vector<16x16xbf16>, vector<16x16xf32> -> vector<16x16xf32>
    %188 = vector.broadcast %183 : vector<1x16xf32> to vector<16x16xf32>
    %189 = arith.addf %187, %188 : vector<16x16xf32>
    %cst_104 = arith.constant 0.000000e+00 : f32
    %190 = vector.broadcast %cst_104 : f32 to vector<16x16xf32>
    %191 = arith.maximumf %189, %190 : vector<16x16xf32>
    %192 = arith.truncf %191 : vector<16x16xf32> to vector<16x16xbf16>
    %c0_105 = arith.constant 0 : index
    %c0_106 = arith.constant 0 : index
    %193 = vector.load %arg22[%c0_105, %c0_106] : memref<36x16xbf16, #tpu.memory_space<vmem>>, vector<36x16xbf16>
    %cst_107 = arith.constant dense<0.000000e+00> : vector<36x16xf32>
    %194 = tpu.matmul %193, %192, %cst_107 {dimension_numbers = #tpu.dot_dimension_numbers<[1], [0], [0], [1], [0, 0, 1, 1], [], []>} : vector<36x16xbf16>, vector<16x16xbf16>, vector<36x16xf32> -> vector<36x16xf32>
    %195 = vector.extract_strided_slice %194 {offsets = [0, 0], sizes = [4, 16], strides = [1, 1]} : vector<36x16xf32> to vector<4x16xf32>
    %c0_108 = arith.constant 0 : index
    %c0_109 = arith.constant 0 : index
    %c0_110 = arith.constant 0 : index
    %196 = vector.load %arg23[%c0_108, %c0_109, %c0_110] : memref<9x1x16xf32, #tpu.memory_space<vmem>>, vector<1x1x16xf32>
    %197 = vector.shape_cast %196 : vector<1x1x16xf32> to vector<1x16xf32>
    %198 = vector.broadcast %197 : vector<1x16xf32> to vector<4x16xf32>
    %199 = arith.mulf %195, %198 : vector<4x16xf32>
    %200 = vector.extract_strided_slice %194 {offsets = [4, 0], sizes = [4, 16], strides = [1, 1]} : vector<36x16xf32> to vector<4x16xf32>
    %c1_111 = arith.constant 1 : index
    %c0_112 = arith.constant 0 : index
    %c0_113 = arith.constant 0 : index
    %201 = vector.load %arg23[%c1_111, %c0_112, %c0_113] : memref<9x1x16xf32, #tpu.memory_space<vmem>>, vector<1x1x16xf32>
    %202 = vector.shape_cast %201 : vector<1x1x16xf32> to vector<1x16xf32>
    %203 = vector.broadcast %202 : vector<1x16xf32> to vector<4x16xf32>
    %204 = arith.mulf %200, %203 : vector<4x16xf32>
    %205 = arith.addf %199, %204 : vector<4x16xf32>
    %206 = vector.extract_strided_slice %194 {offsets = [8, 0], sizes = [4, 16], strides = [1, 1]} : vector<36x16xf32> to vector<4x16xf32>
    %c2_114 = arith.constant 2 : index
    %c0_115 = arith.constant 0 : index
    %c0_116 = arith.constant 0 : index
    %207 = vector.load %arg23[%c2_114, %c0_115, %c0_116] : memref<9x1x16xf32, #tpu.memory_space<vmem>>, vector<1x1x16xf32>
    %208 = vector.shape_cast %207 : vector<1x1x16xf32> to vector<1x16xf32>
    %209 = vector.broadcast %208 : vector<1x16xf32> to vector<4x16xf32>
    %210 = arith.mulf %206, %209 : vector<4x16xf32>
    %211 = arith.addf %205, %210 : vector<4x16xf32>
    %212 = vector.extract_strided_slice %194 {offsets = [12, 0], sizes = [4, 16], strides = [1, 1]} : vector<36x16xf32> to vector<4x16xf32>
    %c3_117 = arith.constant 3 : index
    %c0_118 = arith.constant 0 : index
    %c0_119 = arith.constant 0 : index
    %213 = vector.load %arg23[%c3_117, %c0_118, %c0_119] : memref<9x1x16xf32, #tpu.memory_space<vmem>>, vector<1x1x16xf32>
    %214 = vector.shape_cast %213 : vector<1x1x16xf32> to vector<1x16xf32>
    %215 = vector.broadcast %214 : vector<1x16xf32> to vector<4x16xf32>
    %216 = arith.mulf %212, %215 : vector<4x16xf32>
    %217 = arith.addf %211, %216 : vector<4x16xf32>
    %218 = vector.extract_strided_slice %194 {offsets = [16, 0], sizes = [4, 16], strides = [1, 1]} : vector<36x16xf32> to vector<4x16xf32>
    %c4_120 = arith.constant 4 : index
    %c0_121 = arith.constant 0 : index
    %c0_122 = arith.constant 0 : index
    %219 = vector.load %arg23[%c4_120, %c0_121, %c0_122] : memref<9x1x16xf32, #tpu.memory_space<vmem>>, vector<1x1x16xf32>
    %220 = vector.shape_cast %219 : vector<1x1x16xf32> to vector<1x16xf32>
    %221 = vector.broadcast %220 : vector<1x16xf32> to vector<4x16xf32>
    %222 = arith.mulf %218, %221 : vector<4x16xf32>
    %223 = arith.addf %217, %222 : vector<4x16xf32>
    %224 = vector.extract_strided_slice %194 {offsets = [20, 0], sizes = [4, 16], strides = [1, 1]} : vector<36x16xf32> to vector<4x16xf32>
    %c5_123 = arith.constant 5 : index
    %c0_124 = arith.constant 0 : index
    %c0_125 = arith.constant 0 : index
    %225 = vector.load %arg23[%c5_123, %c0_124, %c0_125] : memref<9x1x16xf32, #tpu.memory_space<vmem>>, vector<1x1x16xf32>
    %226 = vector.shape_cast %225 : vector<1x1x16xf32> to vector<1x16xf32>
    %227 = vector.broadcast %226 : vector<1x16xf32> to vector<4x16xf32>
    %228 = arith.mulf %224, %227 : vector<4x16xf32>
    %229 = arith.addf %223, %228 : vector<4x16xf32>
    %230 = vector.extract_strided_slice %194 {offsets = [24, 0], sizes = [4, 16], strides = [1, 1]} : vector<36x16xf32> to vector<4x16xf32>
    %c6_126 = arith.constant 6 : index
    %c0_127 = arith.constant 0 : index
    %c0_128 = arith.constant 0 : index
    %231 = vector.load %arg23[%c6_126, %c0_127, %c0_128] : memref<9x1x16xf32, #tpu.memory_space<vmem>>, vector<1x1x16xf32>
    %232 = vector.shape_cast %231 : vector<1x1x16xf32> to vector<1x16xf32>
    %233 = vector.broadcast %232 : vector<1x16xf32> to vector<4x16xf32>
    %234 = arith.mulf %230, %233 : vector<4x16xf32>
    %235 = arith.addf %229, %234 : vector<4x16xf32>
    %236 = vector.extract_strided_slice %194 {offsets = [28, 0], sizes = [4, 16], strides = [1, 1]} : vector<36x16xf32> to vector<4x16xf32>
    %c7_129 = arith.constant 7 : index
    %c0_130 = arith.constant 0 : index
    %c0_131 = arith.constant 0 : index
    %237 = vector.load %arg23[%c7_129, %c0_130, %c0_131] : memref<9x1x16xf32, #tpu.memory_space<vmem>>, vector<1x1x16xf32>
    %238 = vector.shape_cast %237 : vector<1x1x16xf32> to vector<1x16xf32>
    %239 = vector.broadcast %238 : vector<1x16xf32> to vector<4x16xf32>
    %240 = arith.mulf %236, %239 : vector<4x16xf32>
    %241 = arith.addf %235, %240 : vector<4x16xf32>
    %242 = vector.extract_strided_slice %194 {offsets = [32, 0], sizes = [4, 16], strides = [1, 1]} : vector<36x16xf32> to vector<4x16xf32>
    %c8_132 = arith.constant 8 : index
    %c0_133 = arith.constant 0 : index
    %c0_134 = arith.constant 0 : index
    %243 = vector.load %arg23[%c8_132, %c0_133, %c0_134] : memref<9x1x16xf32, #tpu.memory_space<vmem>>, vector<1x1x16xf32>
    %244 = vector.shape_cast %243 : vector<1x1x16xf32> to vector<1x16xf32>
    %245 = vector.broadcast %244 : vector<1x16xf32> to vector<4x16xf32>
    %246 = arith.mulf %242, %245 : vector<4x16xf32>
    %247 = arith.addf %241, %246 : vector<4x16xf32>
    %248 = vector.broadcast %184 : vector<1x16xf32> to vector<4x16xf32>
    %249 = arith.addf %247, %248 : vector<4x16xf32>
    %250 = arith.truncf %249 : vector<4x16xf32> to vector<4x16xbf16>
    %cst_135 = arith.constant dense<0.000000e+00> : vector<4x32xf32>
    %251 = tpu.matmul %250, %185, %cst_135 {dimension_numbers = #tpu.dot_dimension_numbers<[1], [0], [0], [1], [0, 0, 1, 1], [], []>} : vector<4x16xbf16>, vector<16x32xbf16>, vector<4x32xf32> -> vector<4x32xf32>
    %252 = vector.broadcast %186 : vector<1x32xf32> to vector<4x32xf32>
    %253 = arith.addf %251, %252 : vector<4x32xf32>
    %cst_136 = arith.constant 0.000000e+00 : f32
    %254 = vector.broadcast %cst_136 : f32 to vector<4x32xf32>
    %255 = arith.maximumf %253, %254 : vector<4x32xf32>
    %256 = arith.truncf %255 : vector<4x32xf32> to vector<4x32xbf16>
    %c0_137 = arith.constant 0 : index
    %c0_138 = arith.constant 0 : index
    %257 = vector.load %arg27[%c0_137, %c0_138] : memref<32x16xbf16, #tpu.memory_space<vmem>>, vector<32x16xbf16>
    %c0_139 = arith.constant 0 : index
    %c0_140 = arith.constant 0 : index
    %258 = vector.load %arg28[%c0_139, %c0_140] : memref<1x16xf32, #tpu.memory_space<vmem>>, vector<1x16xf32>
    %c0_141 = arith.constant 0 : index
    %c0_142 = arith.constant 0 : index
    %259 = vector.load %arg31[%c0_141, %c0_142] : memref<1x16xf32, #tpu.memory_space<vmem>>, vector<1x16xf32>
    %c0_143 = arith.constant 0 : index
    %c0_144 = arith.constant 0 : index
    %260 = vector.load %arg32[%c0_143, %c0_144] : memref<16x32xbf16, #tpu.memory_space<vmem>>, vector<16x32xbf16>
    %c0_145 = arith.constant 0 : index
    %c0_146 = arith.constant 0 : index
    %261 = vector.load %arg33[%c0_145, %c0_146] : memref<1x32xf32, #tpu.memory_space<vmem>>, vector<1x32xf32>
    %c0_147 = arith.constant 0 : index
    %c0_148 = arith.constant 0 : index
    %262 = vector.load %arg34[%c0_147, %c0_148] : memref<32x32xbf16, #tpu.memory_space<vmem>>, vector<32x32xbf16>
    %cst_149 = arith.constant dense<0.000000e+00> : vector<4x16xf32>
    %263 = tpu.matmul %256, %257, %cst_149 {dimension_numbers = #tpu.dot_dimension_numbers<[1], [0], [0], [1], [0, 0, 1, 1], [], []>} : vector<4x32xbf16>, vector<32x16xbf16>, vector<4x16xf32> -> vector<4x16xf32>
    %264 = vector.broadcast %258 : vector<1x16xf32> to vector<4x16xf32>
    %265 = arith.addf %263, %264 : vector<4x16xf32>
    %cst_150 = arith.constant 0.000000e+00 : f32
    %266 = vector.broadcast %cst_150 : f32 to vector<4x16xf32>
    %267 = arith.maximumf %265, %266 : vector<4x16xf32>
    %268 = arith.truncf %267 : vector<4x16xf32> to vector<4x16xbf16>
    %c0_151 = arith.constant 0 : index
    %c0_152 = arith.constant 0 : index
    %269 = vector.load %arg29[%c0_151, %c0_152] : memref<32x4xbf16, #tpu.memory_space<vmem>>, vector<32x4xbf16>
    %cst_153 = arith.constant dense<0.000000e+00> : vector<32x16xf32>
    %270 = tpu.matmul %269, %268, %cst_153 {dimension_numbers = #tpu.dot_dimension_numbers<[1], [0], [0], [1], [0, 0, 1, 1], [], []>} : vector<32x4xbf16>, vector<4x16xbf16>, vector<32x16xf32> -> vector<32x16xf32>
    %271 = vector.extract_strided_slice %270 {offsets = [0, 0], sizes = [4, 16], strides = [1, 1]} : vector<32x16xf32> to vector<4x16xf32>
    %c0_154 = arith.constant 0 : index
    %c0_155 = arith.constant 0 : index
    %c0_156 = arith.constant 0 : index
    %272 = vector.load %arg30[%c0_154, %c0_155, %c0_156] : memref<9x1x16xf32, #tpu.memory_space<vmem>>, vector<1x1x16xf32>
    %273 = vector.shape_cast %272 : vector<1x1x16xf32> to vector<1x16xf32>
    %274 = vector.broadcast %273 : vector<1x16xf32> to vector<4x16xf32>
    %275 = arith.mulf %271, %274 : vector<4x16xf32>
    %276 = vector.extract_strided_slice %270 {offsets = [4, 0], sizes = [4, 16], strides = [1, 1]} : vector<32x16xf32> to vector<4x16xf32>
    %c1_157 = arith.constant 1 : index
    %c0_158 = arith.constant 0 : index
    %c0_159 = arith.constant 0 : index
    %277 = vector.load %arg30[%c1_157, %c0_158, %c0_159] : memref<9x1x16xf32, #tpu.memory_space<vmem>>, vector<1x1x16xf32>
    %278 = vector.shape_cast %277 : vector<1x1x16xf32> to vector<1x16xf32>
    %279 = vector.broadcast %278 : vector<1x16xf32> to vector<4x16xf32>
    %280 = arith.mulf %276, %279 : vector<4x16xf32>
    %281 = arith.addf %275, %280 : vector<4x16xf32>
    %282 = vector.extract_strided_slice %270 {offsets = [8, 0], sizes = [4, 16], strides = [1, 1]} : vector<32x16xf32> to vector<4x16xf32>
    %c2_160 = arith.constant 2 : index
    %c0_161 = arith.constant 0 : index
    %c0_162 = arith.constant 0 : index
    %283 = vector.load %arg30[%c2_160, %c0_161, %c0_162] : memref<9x1x16xf32, #tpu.memory_space<vmem>>, vector<1x1x16xf32>
    %284 = vector.shape_cast %283 : vector<1x1x16xf32> to vector<1x16xf32>
    %285 = vector.broadcast %284 : vector<1x16xf32> to vector<4x16xf32>
    %286 = arith.mulf %282, %285 : vector<4x16xf32>
    %287 = arith.addf %281, %286 : vector<4x16xf32>
    %288 = vector.extract_strided_slice %270 {offsets = [12, 0], sizes = [4, 16], strides = [1, 1]} : vector<32x16xf32> to vector<4x16xf32>
    %c3_163 = arith.constant 3 : index
    %c0_164 = arith.constant 0 : index
    %c0_165 = arith.constant 0 : index
    %289 = vector.load %arg30[%c3_163, %c0_164, %c0_165] : memref<9x1x16xf32, #tpu.memory_space<vmem>>, vector<1x1x16xf32>
    %290 = vector.shape_cast %289 : vector<1x1x16xf32> to vector<1x16xf32>
    %291 = vector.broadcast %290 : vector<1x16xf32> to vector<4x16xf32>
    %292 = arith.mulf %288, %291 : vector<4x16xf32>
    %293 = arith.addf %287, %292 : vector<4x16xf32>
    %294 = vector.extract_strided_slice %270 {offsets = [16, 0], sizes = [4, 16], strides = [1, 1]} : vector<32x16xf32> to vector<4x16xf32>
    %c5_166 = arith.constant 5 : index
    %c0_167 = arith.constant 0 : index
    %c0_168 = arith.constant 0 : index
    %295 = vector.load %arg30[%c5_166, %c0_167, %c0_168] : memref<9x1x16xf32, #tpu.memory_space<vmem>>, vector<1x1x16xf32>
    %296 = vector.shape_cast %295 : vector<1x1x16xf32> to vector<1x16xf32>
    %297 = vector.broadcast %296 : vector<1x16xf32> to vector<4x16xf32>
    %298 = arith.mulf %294, %297 : vector<4x16xf32>
    %299 = arith.addf %293, %298 : vector<4x16xf32>
    %300 = vector.extract_strided_slice %270 {offsets = [20, 0], sizes = [4, 16], strides = [1, 1]} : vector<32x16xf32> to vector<4x16xf32>
    %c6_169 = arith.constant 6 : index
    %c0_170 = arith.constant 0 : index
    %c0_171 = arith.constant 0 : index
    %301 = vector.load %arg30[%c6_169, %c0_170, %c0_171] : memref<9x1x16xf32, #tpu.memory_space<vmem>>, vector<1x1x16xf32>
    %302 = vector.shape_cast %301 : vector<1x1x16xf32> to vector<1x16xf32>
    %303 = vector.broadcast %302 : vector<1x16xf32> to vector<4x16xf32>
    %304 = arith.mulf %300, %303 : vector<4x16xf32>
    %305 = arith.addf %299, %304 : vector<4x16xf32>
    %306 = vector.extract_strided_slice %270 {offsets = [24, 0], sizes = [4, 16], strides = [1, 1]} : vector<32x16xf32> to vector<4x16xf32>
    %c7_172 = arith.constant 7 : index
    %c0_173 = arith.constant 0 : index
    %c0_174 = arith.constant 0 : index
    %307 = vector.load %arg30[%c7_172, %c0_173, %c0_174] : memref<9x1x16xf32, #tpu.memory_space<vmem>>, vector<1x1x16xf32>
    %308 = vector.shape_cast %307 : vector<1x1x16xf32> to vector<1x16xf32>
    %309 = vector.broadcast %308 : vector<1x16xf32> to vector<4x16xf32>
    %310 = arith.mulf %306, %309 : vector<4x16xf32>
    %311 = arith.addf %305, %310 : vector<4x16xf32>
    %312 = vector.extract_strided_slice %270 {offsets = [28, 0], sizes = [4, 16], strides = [1, 1]} : vector<32x16xf32> to vector<4x16xf32>
    %c8_175 = arith.constant 8 : index
    %c0_176 = arith.constant 0 : index
    %c0_177 = arith.constant 0 : index
    %313 = vector.load %arg30[%c8_175, %c0_176, %c0_177] : memref<9x1x16xf32, #tpu.memory_space<vmem>>, vector<1x1x16xf32>
    %314 = vector.shape_cast %313 : vector<1x1x16xf32> to vector<1x16xf32>
    %315 = vector.broadcast %314 : vector<1x16xf32> to vector<4x16xf32>
    %316 = arith.mulf %312, %315 : vector<4x16xf32>
    %317 = arith.addf %311, %316 : vector<4x16xf32>
    %c4_178 = arith.constant 4 : index
    %c0_179 = arith.constant 0 : index
    %c0_180 = arith.constant 0 : index
    %318 = vector.load %arg30[%c4_178, %c0_179, %c0_180] : memref<9x1x16xf32, #tpu.memory_space<vmem>>, vector<1x1x16xf32>
    %319 = vector.shape_cast %318 : vector<1x1x16xf32> to vector<1x16xf32>
    %320 = vector.broadcast %319 : vector<1x16xf32> to vector<4x16xf32>
    %321 = arith.mulf %267, %320 : vector<4x16xf32>
    %322 = arith.addf %317, %321 : vector<4x16xf32>
    %323 = vector.broadcast %259 : vector<1x16xf32> to vector<4x16xf32>
    %324 = arith.addf %322, %323 : vector<4x16xf32>
    %325 = arith.truncf %324 : vector<4x16xf32> to vector<4x16xbf16>
    %cst_181 = arith.constant dense<0.000000e+00> : vector<4x32xf32>
    %326 = tpu.matmul %325, %260, %cst_181 {dimension_numbers = #tpu.dot_dimension_numbers<[1], [0], [0], [1], [0, 0, 1, 1], [], []>} : vector<4x16xbf16>, vector<16x32xbf16>, vector<4x32xf32> -> vector<4x32xf32>
    %327 = vector.broadcast %261 : vector<1x32xf32> to vector<4x32xf32>
    %328 = arith.addf %326, %327 : vector<4x32xf32>
    %cst_182 = arith.constant 0.000000e+00 : f32
    %329 = vector.broadcast %cst_182 : f32 to vector<4x32xf32>
    %330 = arith.maximumf %328, %329 : vector<4x32xf32>
    %cst_183 = arith.constant dense<0.000000e+00> : vector<4x32xf32>
    %331 = tpu.matmul %256, %262, %cst_183 {dimension_numbers = #tpu.dot_dimension_numbers<[1], [0], [0], [1], [0, 0, 1, 1], [], []>} : vector<4x32xbf16>, vector<32x32xbf16>, vector<4x32xf32> -> vector<4x32xf32>
    %332 = arith.addf %330, %331 : vector<4x32xf32>
    %333 = arith.truncf %332 : vector<4x32xf32> to vector<4x32xbf16>
    %c0_184 = arith.constant 0 : index
    %c0_185 = arith.constant 0 : index
    %334 = vector.load %arg35[%c0_184, %c0_185] : memref<32x32xbf16, #tpu.memory_space<vmem>>, vector<32x32xbf16>
    %c0_186 = arith.constant 0 : index
    %c0_187 = arith.constant 0 : index
    %335 = vector.load %arg36[%c0_186, %c0_187] : memref<1x32xf32, #tpu.memory_space<vmem>>, vector<1x32xf32>
    %c0_188 = arith.constant 0 : index
    %c0_189 = arith.constant 0 : index
    %336 = vector.load %arg39[%c0_188, %c0_189] : memref<1x32xf32, #tpu.memory_space<vmem>>, vector<1x32xf32>
    %c0_190 = arith.constant 0 : index
    %c0_191 = arith.constant 0 : index
    %337 = vector.load %arg40[%c0_190, %c0_191] : memref<32x64xbf16, #tpu.memory_space<vmem>>, vector<32x64xbf16>
    %c0_192 = arith.constant 0 : index
    %c0_193 = arith.constant 0 : index
    %338 = vector.load %arg41[%c0_192, %c0_193] : memref<1x64xf32, #tpu.memory_space<vmem>>, vector<1x64xf32>
    %cst_194 = arith.constant dense<0.000000e+00> : vector<4x32xf32>
    %339 = tpu.matmul %333, %334, %cst_194 {dimension_numbers = #tpu.dot_dimension_numbers<[1], [0], [0], [1], [0, 0, 1, 1], [], []>} : vector<4x32xbf16>, vector<32x32xbf16>, vector<4x32xf32> -> vector<4x32xf32>
    %340 = vector.broadcast %335 : vector<1x32xf32> to vector<4x32xf32>
    %341 = arith.addf %339, %340 : vector<4x32xf32>
    %cst_195 = arith.constant 0.000000e+00 : f32
    %342 = vector.broadcast %cst_195 : f32 to vector<4x32xf32>
    %343 = arith.maximumf %341, %342 : vector<4x32xf32>
    %344 = arith.truncf %343 : vector<4x32xf32> to vector<4x32xbf16>
    %c0_196 = arith.constant 0 : index
    %c0_197 = arith.constant 0 : index
    %345 = vector.load %arg37[%c0_196, %c0_197] : memref<4x4xbf16, #tpu.memory_space<vmem>>, vector<4x4xbf16>
    %cst_198 = arith.constant dense<0.000000e+00> : vector<4x32xf32>
    %346 = tpu.matmul %345, %344, %cst_198 {dimension_numbers = #tpu.dot_dimension_numbers<[1], [0], [0], [1], [0, 0, 1, 1], [], []>} : vector<4x4xbf16>, vector<4x32xbf16>, vector<4x32xf32> -> vector<4x32xf32>
    %347 = vector.extract_strided_slice %346 {offsets = [0, 0], sizes = [1, 32], strides = [1, 1]} : vector<4x32xf32> to vector<1x32xf32>
    %c4_199 = arith.constant 4 : index
    %c0_200 = arith.constant 0 : index
    %c0_201 = arith.constant 0 : index
    %348 = vector.load %arg38[%c4_199, %c0_200, %c0_201] : memref<9x1x32xf32, #tpu.memory_space<vmem>>, vector<1x1x32xf32>
    %349 = vector.shape_cast %348 : vector<1x1x32xf32> to vector<1x32xf32>
    %350 = arith.mulf %347, %349 : vector<1x32xf32>
    %351 = vector.extract_strided_slice %346 {offsets = [1, 0], sizes = [1, 32], strides = [1, 1]} : vector<4x32xf32> to vector<1x32xf32>
    %c5_202 = arith.constant 5 : index
    %c0_203 = arith.constant 0 : index
    %c0_204 = arith.constant 0 : index
    %352 = vector.load %arg38[%c5_202, %c0_203, %c0_204] : memref<9x1x32xf32, #tpu.memory_space<vmem>>, vector<1x1x32xf32>
    %353 = vector.shape_cast %352 : vector<1x1x32xf32> to vector<1x32xf32>
    %354 = arith.mulf %351, %353 : vector<1x32xf32>
    %355 = arith.addf %350, %354 : vector<1x32xf32>
    %356 = vector.extract_strided_slice %346 {offsets = [2, 0], sizes = [1, 32], strides = [1, 1]} : vector<4x32xf32> to vector<1x32xf32>
    %c7_205 = arith.constant 7 : index
    %c0_206 = arith.constant 0 : index
    %c0_207 = arith.constant 0 : index
    %357 = vector.load %arg38[%c7_205, %c0_206, %c0_207] : memref<9x1x32xf32, #tpu.memory_space<vmem>>, vector<1x1x32xf32>
    %358 = vector.shape_cast %357 : vector<1x1x32xf32> to vector<1x32xf32>
    %359 = arith.mulf %356, %358 : vector<1x32xf32>
    %360 = arith.addf %355, %359 : vector<1x32xf32>
    %361 = vector.extract_strided_slice %346 {offsets = [3, 0], sizes = [1, 32], strides = [1, 1]} : vector<4x32xf32> to vector<1x32xf32>
    %c8_208 = arith.constant 8 : index
    %c0_209 = arith.constant 0 : index
    %c0_210 = arith.constant 0 : index
    %362 = vector.load %arg38[%c8_208, %c0_209, %c0_210] : memref<9x1x32xf32, #tpu.memory_space<vmem>>, vector<1x1x32xf32>
    %363 = vector.shape_cast %362 : vector<1x1x32xf32> to vector<1x32xf32>
    %364 = arith.mulf %361, %363 : vector<1x32xf32>
    %365 = arith.addf %360, %364 : vector<1x32xf32>
    %366 = arith.addf %365, %336 : vector<1x32xf32>
    %367 = arith.truncf %366 : vector<1x32xf32> to vector<1x32xbf16>
    %cst_211 = arith.constant dense<0.000000e+00> : vector<1x64xf32>
    %368 = tpu.matmul %367, %337, %cst_211 {dimension_numbers = #tpu.dot_dimension_numbers<[1], [0], [0], [1], [0, 0, 1, 1], [], []>} : vector<1x32xbf16>, vector<32x64xbf16>, vector<1x64xf32> -> vector<1x64xf32>
    %369 = arith.addf %368, %338 : vector<1x64xf32>
    %cst_212 = arith.constant 0.000000e+00 : f32
    %370 = vector.broadcast %cst_212 : f32 to vector<1x64xf32>
    %371 = arith.maximumf %369, %370 : vector<1x64xf32>
    %372 = arith.truncf %371 : vector<1x64xf32> to vector<1x64xbf16>
    %c0_213 = arith.constant 0 : index
    %c0_214 = arith.constant 0 : index
    %373 = vector.load %arg42[%c0_213, %c0_214] : memref<64x32xbf16, #tpu.memory_space<vmem>>, vector<64x32xbf16>
    %c0_215 = arith.constant 0 : index
    %c0_216 = arith.constant 0 : index
    %374 = vector.load %arg43[%c0_215, %c0_216] : memref<1x32xf32, #tpu.memory_space<vmem>>, vector<1x32xf32>
    %c0_217 = arith.constant 0 : index
    %c0_218 = arith.constant 0 : index
    %375 = vector.load %arg45[%c0_217, %c0_218] : memref<1x32xf32, #tpu.memory_space<vmem>>, vector<1x32xf32>
    %c0_219 = arith.constant 0 : index
    %c0_220 = arith.constant 0 : index
    %376 = vector.load %arg46[%c0_219, %c0_220] : memref<32x64xbf16, #tpu.memory_space<vmem>>, vector<32x64xbf16>
    %c0_221 = arith.constant 0 : index
    %c0_222 = arith.constant 0 : index
    %377 = vector.load %arg47[%c0_221, %c0_222] : memref<1x64xf32, #tpu.memory_space<vmem>>, vector<1x64xf32>
    %c0_223 = arith.constant 0 : index
    %c0_224 = arith.constant 0 : index
    %378 = vector.load %arg48[%c0_223, %c0_224] : memref<64x64xbf16, #tpu.memory_space<vmem>>, vector<64x64xbf16>
    %cst_225 = arith.constant dense<0.000000e+00> : vector<1x32xf32>
    %379 = tpu.matmul %372, %373, %cst_225 {dimension_numbers = #tpu.dot_dimension_numbers<[1], [0], [0], [1], [0, 0, 1, 1], [], []>} : vector<1x64xbf16>, vector<64x32xbf16>, vector<1x32xf32> -> vector<1x32xf32>
    %380 = arith.addf %379, %374 : vector<1x32xf32>
    %cst_226 = arith.constant 0.000000e+00 : f32
    %381 = vector.broadcast %cst_226 : f32 to vector<1x32xf32>
    %382 = arith.maximumf %380, %381 : vector<1x32xf32>
    %c4_227 = arith.constant 4 : index
    %c0_228 = arith.constant 0 : index
    %c0_229 = arith.constant 0 : index
    %383 = vector.load %arg44[%c4_227, %c0_228, %c0_229] : memref<9x1x32xf32, #tpu.memory_space<vmem>>, vector<1x1x32xf32>
    %384 = vector.shape_cast %383 : vector<1x1x32xf32> to vector<1x32xf32>
    %385 = arith.mulf %382, %384 : vector<1x32xf32>
    %386 = arith.addf %385, %375 : vector<1x32xf32>
    %387 = arith.truncf %386 : vector<1x32xf32> to vector<1x32xbf16>
    %cst_230 = arith.constant dense<0.000000e+00> : vector<1x64xf32>
    %388 = tpu.matmul %387, %376, %cst_230 {dimension_numbers = #tpu.dot_dimension_numbers<[1], [0], [0], [1], [0, 0, 1, 1], [], []>} : vector<1x32xbf16>, vector<32x64xbf16>, vector<1x64xf32> -> vector<1x64xf32>
    %389 = arith.addf %388, %377 : vector<1x64xf32>
    %cst_231 = arith.constant 0.000000e+00 : f32
    %390 = vector.broadcast %cst_231 : f32 to vector<1x64xf32>
    %391 = arith.maximumf %389, %390 : vector<1x64xf32>
    %cst_232 = arith.constant dense<0.000000e+00> : vector<1x64xf32>
    %392 = tpu.matmul %372, %378, %cst_232 {dimension_numbers = #tpu.dot_dimension_numbers<[1], [0], [0], [1], [0, 0, 1, 1], [], []>} : vector<1x64xbf16>, vector<64x64xbf16>, vector<1x64xf32> -> vector<1x64xf32>
    %393 = arith.addf %391, %392 : vector<1x64xf32>
    %394 = arith.truncf %393 : vector<1x64xf32> to vector<1x64xbf16>
    %c0_233 = arith.constant 0 : index
    %c0_234 = arith.constant 0 : index
    %395 = vector.load %arg49[%c0_233, %c0_234] : memref<64x128xbf16, #tpu.memory_space<vmem>>, vector<64x128xbf16>
    %c0_235 = arith.constant 0 : index
    %c0_236 = arith.constant 0 : index
    %396 = vector.load %arg50[%c0_235, %c0_236] : memref<1x128xf32, #tpu.memory_space<vmem>>, vector<1x128xf32>
    %c0_237 = arith.constant 0 : index
    %c0_238 = arith.constant 0 : index
    %397 = vector.load %arg51[%c0_237, %c0_238] : memref<128x16xbf16, #tpu.memory_space<vmem>>, vector<128x16xbf16>
    %c0_239 = arith.constant 0 : index
    %c0_240 = arith.constant 0 : index
    %398 = vector.load %arg52[%c0_239, %c0_240] : memref<1x16xf32, #tpu.memory_space<vmem>>, vector<1x16xf32>
    %cst_241 = arith.constant dense<0.000000e+00> : vector<1x128xf32>
    %399 = tpu.matmul %394, %395, %cst_241 {dimension_numbers = #tpu.dot_dimension_numbers<[1], [0], [0], [1], [0, 0, 1, 1], [], []>} : vector<1x64xbf16>, vector<64x128xbf16>, vector<1x128xf32> -> vector<1x128xf32>
    %400 = arith.addf %399, %396 : vector<1x128xf32>
    %cst_242 = arith.constant 0.000000e+00 : f32
    %401 = vector.broadcast %cst_242 : f32 to vector<1x128xf32>
    %402 = arith.maximumf %400, %401 : vector<1x128xf32>
    %cst_243 = arith.constant dense<0.000000e+00> : vector<128xf32>
    %403 = vector.multi_reduction <add>, %402, %cst_243 [0] : vector<1x128xf32> to vector<128xf32>
    %404 = vector.shape_cast %403 : vector<128xf32> to vector<1x128xf32>
    %cst_244 = arith.constant 1.000000e+00 : f32
    %405 = vector.broadcast %cst_244 : f32 to vector<1x128xf32>
    %406 = arith.divf %404, %405 : vector<1x128xf32>
    %407 = arith.truncf %406 : vector<1x128xf32> to vector<1x128xbf16>
    %cst_245 = arith.constant dense<0.000000e+00> : vector<1x16xf32>
    %408 = tpu.matmul %407, %397, %cst_245 {dimension_numbers = #tpu.dot_dimension_numbers<[1], [0], [0], [1], [0, 0, 1, 1], [], []>} : vector<1x128xbf16>, vector<128x16xbf16>, vector<1x16xf32> -> vector<1x16xf32>
    %409 = arith.addf %408, %398 : vector<1x16xf32>
    %c0_246 = arith.constant 0 : index
    %c0_247 = arith.constant 0 : index
    %c0_248 = arith.constant 0 : index
    %410 = vector.load %arg53[%c0_246, %c0_247, %c0_248] : memref<1x1x16xf32, #tpu.memory_space<vmem>>, vector<1x1x16xf32>
    %411 = vector.shape_cast %410 : vector<1x1x16xf32> to vector<1x16xf32>
    %412 = vector.shape_cast %409 : vector<1x16xf32> to vector<1x1x16xf32>
    tpu.vector_store %arg53[%c0_246, %c0_247, %c0_248], %412 {strides = array<i32>} : memref<1x1x16xf32, #tpu.memory_space<vmem>>, vector<1x1x16xf32>,
    return
  }
  func.func @transform_0(%arg0: i32) -> (i32, i32, i32) {
    %c0_i32 = arith.constant 0 : i32
    %c0_i32_0 = arith.constant 0 : i32
    %c0_i32_1 = arith.constant 0 : i32
    return %arg0, %c0_i32, %c0_i32_0 : i32, i32, i32
  }
  func.func @transform_1(%arg0: i32) -> (i32, i32) {
    %c0_i32 = arith.constant 0 : i32
    %c0_i32_0 = arith.constant 0 : i32
    %c0_i32_1 = arith.constant 0 : i32
    return %c0_i32, %c0_i32_0 : i32, i32
  }
  func.func @transform_2(%arg0: i32) -> (i32, i32) {
    %c0_i32 = arith.constant 0 : i32
    %c0_i32_0 = arith.constant 0 : i32
    %c0_i32_1 = arith.constant 0 : i32
    return %c0_i32, %c0_i32_0 : i32, i32
  }
  func.func @transform_3(%arg0: i32) -> (i32, i32) {
    %c0_i32 = arith.constant 0 : i32
    %c0_i32_0 = arith.constant 0 : i32
    %c0_i32_1 = arith.constant 0 : i32
    return %c0_i32, %c0_i32_0 : i32, i32
  }
  func.func @transform_4(%arg0: i32) -> (i32, i32) {
    %c0_i32 = arith.constant 0 : i32
    %c0_i32_0 = arith.constant 0 : i32
    %c0_i32_1 = arith.constant 0 : i32
    return %c0_i32, %c0_i32_0 : i32, i32
  }
  func.func @transform_5(%arg0: i32) -> (i32, i32) {
    %c0_i32 = arith.constant 0 : i32
    %c0_i32_0 = arith.constant 0 : i32
    %c0_i32_1 = arith.constant 0 : i32
    return %c0_i32, %c0_i32_0 : i32, i32
  }
  func.func @transform_6(%arg0: i32) -> (i32, i32) {
    %c0_i32 = arith.constant 0 : i32
    %c0_i32_0 = arith.constant 0 : i32
    %c0_i32_1 = arith.constant 0 : i32
    return %c0_i32, %c0_i32_0 : i32, i32
  }
  func.func @transform_7(%arg0: i32) -> (i32, i32, i32) {
    %c0_i32 = arith.constant 0 : i32
    %c0_i32_0 = arith.constant 0 : i32
    %c0_i32_1 = arith.constant 0 : i32
    %c0_i32_2 = arith.constant 0 : i32
    return %c0_i32, %c0_i32_0, %c0_i32_1 : i32, i32, i32
  }
  func.func @transform_8(%arg0: i32) -> (i32, i32) {
    %c0_i32 = arith.constant 0 : i32
    %c0_i32_0 = arith.constant 0 : i32
    %c0_i32_1 = arith.constant 0 : i32
    return %c0_i32, %c0_i32_0 : i32, i32
  }
  func.func @transform_9(%arg0: i32) -> (i32, i32) {
    %c0_i32 = arith.constant 0 : i32
    %c0_i32_0 = arith.constant 0 : i32
    %c0_i32_1 = arith.constant 0 : i32
    return %c0_i32, %c0_i32_0 : i32, i32
  }
  func.func @transform_10(%arg0: i32) -> (i32, i32) {
    %c0_i32 = arith.constant 0 : i32
    %c0_i32_0 = arith.constant 0 : i32
    %c0_i32_1 = arith.constant 0 : i32
    return %c0_i32, %c0_i32_0 : i32, i32
  }
  func.func @transform_11(%arg0: i32) -> (i32, i32) {
    %c0_i32 = arith.constant 0 : i32
    %c0_i32_0 = arith.constant 0 : i32
    %c0_i32_1 = arith.constant 0 : i32
    return %c0_i32, %c0_i32_0 : i32, i32
  }
  func.func @transform_12(%arg0: i32) -> (i32, i32) {
    %c0_i32 = arith.constant 0 : i32
    %c0_i32_0 = arith.constant 0 : i32
    %c0_i32_1 = arith.constant 0 : i32
    return %c0_i32, %c0_i32_0 : i32, i32
  }
  func.func @transform_13(%arg0: i32) -> (i32, i32) {
    %c0_i32 = arith.constant 0 : i32
    %c0_i32_0 = arith.constant 0 : i32
    %c0_i32_1 = arith.constant 0 : i32
    return %c0_i32, %c0_i32_0 : i32, i32
  }
  func.func @transform_14(%arg0: i32) -> (i32, i32, i32) {
    %c0_i32 = arith.constant 0 : i32
    %c0_i32_0 = arith.constant 0 : i32
    %c0_i32_1 = arith.constant 0 : i32
    %c0_i32_2 = arith.constant 0 : i32
    return %c0_i32, %c0_i32_0, %c0_i32_1 : i32, i32, i32
  }
  func.func @transform_15(%arg0: i32) -> (i32, i32) {
    %c0_i32 = arith.constant 0 : i32
    %c0_i32_0 = arith.constant 0 : i32
    %c0_i32_1 = arith.constant 0 : i32
    return %c0_i32, %c0_i32_0 : i32, i32
  }
  func.func @transform_16(%arg0: i32) -> (i32, i32) {
    %c0_i32 = arith.constant 0 : i32
    %c0_i32_0 = arith.constant 0 : i32
    %c0_i32_1 = arith.constant 0 : i32
    return %c0_i32, %c0_i32_0 : i32, i32
  }
  func.func @transform_17(%arg0: i32) -> (i32, i32) {
    %c0_i32 = arith.constant 0 : i32
    %c0_i32_0 = arith.constant 0 : i32
    %c0_i32_1 = arith.constant 0 : i32
    return %c0_i32, %c0_i32_0 : i32, i32
  }
  func.func @transform_18(%arg0: i32) -> (i32, i32) {
    %c0_i32 = arith.constant 0 : i32
    %c0_i32_0 = arith.constant 0 : i32
    %c0_i32_1 = arith.constant 0 : i32
    return %c0_i32, %c0_i32_0 : i32, i32
  }
  func.func @transform_19(%arg0: i32) -> (i32, i32) {
    %c0_i32 = arith.constant 0 : i32
    %c0_i32_0 = arith.constant 0 : i32
    %c0_i32_1 = arith.constant 0 : i32
    return %c0_i32, %c0_i32_0 : i32, i32
  }
  func.func @transform_20(%arg0: i32) -> (i32, i32) {
    %c0_i32 = arith.constant 0 : i32
    %c0_i32_0 = arith.constant 0 : i32
    %c0_i32_1 = arith.constant 0 : i32
    return %c0_i32, %c0_i32_0 : i32, i32
  }
  func.func @transform_21(%arg0: i32) -> (i32, i32) {
    %c0_i32 = arith.constant 0 : i32
    %c0_i32_0 = arith.constant 0 : i32
    %c0_i32_1 = arith.constant 0 : i32
    return %c0_i32, %c0_i32_0 : i32, i32
  }
  func.func @transform_22(%arg0: i32) -> (i32, i32, i32) {
    %c0_i32 = arith.constant 0 : i32
    %c0_i32_0 = arith.constant 0 : i32
    %c0_i32_1 = arith.constant 0 : i32
    %c0_i32_2 = arith.constant 0 : i32
    return %c0_i32, %c0_i32_0, %c0_i32_1 : i32, i32, i32
  }
  func.func @transform_23(%arg0: i32) -> (i32, i32) {
    %c0_i32 = arith.constant 0 : i32
    %c0_i32_0 = arith.constant 0 : i32
    %c0_i32_1 = arith.constant 0 : i32
    return %c0_i32, %c0_i32_0 : i32, i32
  }
  func.func @transform_24(%arg0: i32) -> (i32, i32) {
    %c0_i32 = arith.constant 0 : i32
    %c0_i32_0 = arith.constant 0 : i32
    %c0_i32_1 = arith.constant 0 : i32
    return %c0_i32, %c0_i32_0 : i32, i32
  }
  func.func @transform_25(%arg0: i32) -> (i32, i32) {
    %c0_i32 = arith.constant 0 : i32
    %c0_i32_0 = arith.constant 0 : i32
    %c0_i32_1 = arith.constant 0 : i32
    return %c0_i32, %c0_i32_0 : i32, i32
  }
  func.func @transform_26(%arg0: i32) -> (i32, i32) {
    %c0_i32 = arith.constant 0 : i32
    %c0_i32_0 = arith.constant 0 : i32
    %c0_i32_1 = arith.constant 0 : i32
    return %c0_i32, %c0_i32_0 : i32, i32
  }
  func.func @transform_27(%arg0: i32) -> (i32, i32) {
    %c0_i32 = arith.constant 0 : i32
    %c0_i32_0 = arith.constant 0 : i32
    %c0_i32_1 = arith.constant 0 : i32
    return %c0_i32, %c0_i32_0 : i32, i32
  }
  func.func @transform_28(%arg0: i32) -> (i32, i32) {
    %c0_i32 = arith.constant 0 : i32
    %c0_i32_0 = arith.constant 0 : i32
    %c0_i32_1 = arith.constant 0 : i32
    return %c0_i32, %c0_i32_0 : i32, i32
  }
  func.func @transform_29(%arg0: i32) -> (i32, i32, i32) {
    %c0_i32 = arith.constant 0 : i32
    %c0_i32_0 = arith.constant 0 : i32
    %c0_i32_1 = arith.constant 0 : i32
    %c0_i32_2 = arith.constant 0 : i32
    return %c0_i32, %c0_i32_0, %c0_i32_1 : i32, i32, i32
  }
  func.func @transform_30(%arg0: i32) -> (i32, i32) {
    %c0_i32 = arith.constant 0 : i32
    %c0_i32_0 = arith.constant 0 : i32
    %c0_i32_1 = arith.constant 0 : i32
    return %c0_i32, %c0_i32_0 : i32, i32
  }
  func.func @transform_31(%arg0: i32) -> (i32, i32) {
    %c0_i32 = arith.constant 0 : i32
    %c0_i32_0 = arith.constant 0 : i32
    %c0_i32_1 = arith.constant 0 : i32
    return %c0_i32, %c0_i32_0 : i32, i32
  }
  func.func @transform_32(%arg0: i32) -> (i32, i32) {
    %c0_i32 = arith.constant 0 : i32
    %c0_i32_0 = arith.constant 0 : i32
    %c0_i32_1 = arith.constant 0 : i32
    return %c0_i32, %c0_i32_0 : i32, i32
  }
  func.func @transform_33(%arg0: i32) -> (i32, i32) {
    %c0_i32 = arith.constant 0 : i32
    %c0_i32_0 = arith.constant 0 : i32
    %c0_i32_1 = arith.constant 0 : i32
    return %c0_i32, %c0_i32_0 : i32, i32
  }
  func.func @transform_34(%arg0: i32) -> (i32, i32) {
    %c0_i32 = arith.constant 0 : i32
    %c0_i32_0 = arith.constant 0 : i32
    %c0_i32_1 = arith.constant 0 : i32
    return %c0_i32, %c0_i32_0 : i32, i32
  }
  func.func @transform_35(%arg0: i32) -> (i32, i32) {
    %c0_i32 = arith.constant 0 : i32
    %c0_i32_0 = arith.constant 0 : i32
    %c0_i32_1 = arith.constant 0 : i32
    return %c0_i32, %c0_i32_0 : i32, i32
  }
  func.func @transform_36(%arg0: i32) -> (i32, i32) {
    %c0_i32 = arith.constant 0 : i32
    %c0_i32_0 = arith.constant 0 : i32
    %c0_i32_1 = arith.constant 0 : i32
    return %c0_i32, %c0_i32_0 : i32, i32
  }
  func.func @transform_37(%arg0: i32) -> (i32, i32, i32) {
    %c0_i32 = arith.constant 0 : i32
    %c0_i32_0 = arith.constant 0 : i32
    %c0_i32_1 = arith.constant 0 : i32
    %c0_i32_2 = arith.constant 0 : i32
    return %c0_i32, %c0_i32_0, %c0_i32_1 : i32, i32, i32
  }
  func.func @transform_38(%arg0: i32) -> (i32, i32) {
    %c0_i32 = arith.constant 0 : i32
    %c0_i32_0 = arith.constant 0 : i32
    %c0_i32_1 = arith.constant 0 : i32
    return %c0_i32, %c0_i32_0 : i32, i32
  }
  func.func @transform_39(%arg0: i32) -> (i32, i32) {
    %c0_i32 = arith.constant 0 : i32
    %c0_i32_0 = arith.constant 0 : i32
    %c0_i32_1 = arith.constant 0 : i32
    return %c0_i32, %c0_i32_0 : i32, i32
  }
  func.func @transform_40(%arg0: i32) -> (i32, i32) {
    %c0_i32 = arith.constant 0 : i32
    %c0_i32_0 = arith.constant 0 : i32
    %c0_i32_1 = arith.constant 0 : i32
    return %c0_i32, %c0_i32_0 : i32, i32
  }
  func.func @transform_41(%arg0: i32) -> (i32, i32) {
    %c0_i32 = arith.constant 0 : i32
    %c0_i32_0 = arith.constant 0 : i32
    %c0_i32_1 = arith.constant 0 : i32
    return %c0_i32, %c0_i32_0 : i32, i32
  }
  func.func @transform_42(%arg0: i32) -> (i32, i32) {
    %c0_i32 = arith.constant 0 : i32
    %c0_i32_0 = arith.constant 0 : i32
    %c0_i32_1 = arith.constant 0 : i32
    return %c0_i32, %c0_i32_0 : i32, i32
  }
  func.func @transform_43(%arg0: i32) -> (i32, i32, i32) {
    %c0_i32 = arith.constant 0 : i32
    %c0_i32_0 = arith.constant 0 : i32
    %c0_i32_1 = arith.constant 0 : i32
    %c0_i32_2 = arith.constant 0 : i32
    return %c0_i32, %c0_i32_0, %c0_i32_1 : i32, i32, i32
  }
  func.func @transform_44(%arg0: i32) -> (i32, i32) {
    %c0_i32 = arith.constant 0 : i32
    %c0_i32_0 = arith.constant 0 : i32
    %c0_i32_1 = arith.constant 0 : i32
    return %c0_i32, %c0_i32_0 : i32, i32
  }
  func.func @transform_45(%arg0: i32) -> (i32, i32) {
    %c0_i32 = arith.constant 0 : i32
    %c0_i32_0 = arith.constant 0 : i32
    %c0_i32_1 = arith.constant 0 : i32
    return %c0_i32, %c0_i32_0 : i32, i32
  }
  func.func @transform_46(%arg0: i32) -> (i32, i32) {
    %c0_i32 = arith.constant 0 : i32
    %c0_i32_0 = arith.constant 0 : i32
    %c0_i32_1 = arith.constant 0 : i32
    return %c0_i32, %c0_i32_0 : i32, i32
  }
  func.func @transform_47(%arg0: i32) -> (i32, i32) {
    %c0_i32 = arith.constant 0 : i32
    %c0_i32_0 = arith.constant 0 : i32
    %c0_i32_1 = arith.constant 0 : i32
    return %c0_i32, %c0_i32_0 : i32, i32
  }
  func.func @transform_48(%arg0: i32) -> (i32, i32) {
    %c0_i32 = arith.constant 0 : i32
    %c0_i32_0 = arith.constant 0 : i32
    %c0_i32_1 = arith.constant 0 : i32
    return %c0_i32, %c0_i32_0 : i32, i32
  }
  func.func @transform_49(%arg0: i32) -> (i32, i32) {
    %c0_i32 = arith.constant 0 : i32
    %c0_i32_0 = arith.constant 0 : i32
    %c0_i32_1 = arith.constant 0 : i32
    return %c0_i32, %c0_i32_0 : i32, i32
  }
  func.func @transform_50(%arg0: i32) -> (i32, i32) {
    %c0_i32 = arith.constant 0 : i32
    %c0_i32_0 = arith.constant 0 : i32
    %c0_i32_1 = arith.constant 0 : i32
    return %c0_i32, %c0_i32_0 : i32, i32
  }
  func.func @transform_51(%arg0: i32) -> (i32, i32) {
    %c0_i32 = arith.constant 0 : i32
    %c0_i32_0 = arith.constant 0 : i32
    %c0_i32_1 = arith.constant 0 : i32
    return %c0_i32, %c0_i32_0 : i32, i32
  }
  func.func @transform_52(%arg0: i32) -> (i32, i32, i32) {
    %c0_i32 = arith.constant 0 : i32
    %c0_i32_0 = arith.constant 0 : i32
    %c0_i32_1 = arith.constant 0 : i32
    return %arg0, %c0_i32, %c0_i32_0 : i32, i32, i32
  }
}

</mosaic_0001>

<llo_original>
// kernel: _lambda_.1
$region0: #{_lambda_.1}
  #allocation0 [shape = 'u32[]', space=smem, size = 0x4, offset = 0x4, fixed_abs, tag = 'smem constant byte address 0x4 - core index']
  #allocation1 [shape = 'u32[144,128]{1,0:T(1,128)}', space=vmem, size = 0x12000, scoped, tag = 'internal scratch']
  %s0 = inlined_call_operand.smem [shape: u32[53], index: -1, kind: input, shape index: {}]
  %s1 = sld [smem:[%s0]]
  %s2 = scalar_lea.smem %s0, 1
  %s3 = sld [smem:[%s2]]
  %s4 = scalar_lea.smem %s0, 2
  %s5 = sld [smem:[%s4]]
  %s6 = scalar_lea.smem %s0, 3
  %s7 = sld [smem:[%s6]]
  %s8 = scalar_lea.smem %s0, 4
  %s9 = sld [smem:[%s8]]
  %s10 = scalar_lea.smem %s0, 5
  %s11 = sld [smem:[%s10]]
  %s12 = scalar_lea.smem %s0, 6
  %s13 = sld [smem:[%s12]]
  %s14 = scalar_lea.smem %s0, 7
  %s15 = sld [smem:[%s14]]
  %s16 = scalar_lea.smem %s0, 8
  %s17 = sld [smem:[%s16]]
  %s18 = scalar_lea.smem %s0, 9
  %s19 = sld [smem:[%s18]]
  %s20 = scalar_lea.smem %s0, 10
  %s21 = sld [smem:[%s20]]
  %s22 = scalar_lea.smem %s0, 11
  %s23 = sld [smem:[%s22]]
  %s24 = scalar_lea.smem %s0, 12
  %s25 = sld [smem:[%s24]]
  %s26 = scalar_lea.smem %s0, 13
  %s27 = sld [smem:[%s26]]
  %s28 = scalar_lea.smem %s0, 14
  %s29 = sld [smem:[%s28]]
  %s30 = scalar_lea.smem %s0, 15
  %s31 = sld [smem:[%s30]]
  %s32 = scalar_lea.smem %s0, 16
  %s33 = sld [smem:[%s32]]
  %s34 = scalar_lea.smem %s0, 17
  %s35 = sld [smem:[%s34]]
  %s36 = scalar_lea.smem %s0, 18
  %s37 = sld [smem:[%s36]]
  %s38 = scalar_lea.smem %s0, 19
  %s39 = sld [smem:[%s38]]
  %s40 = scalar_lea.smem %s0, 20
  %s41 = sld [smem:[%s40]]
  %s42 = scalar_lea.smem %s0, 21
  %s43 = sld [smem:[%s42]]
  %s44 = scalar_lea.smem %s0, 22
  %s45 = sld [smem:[%s44]]
  %s46 = scalar_lea.smem %s0, 23
  %s47 = sld [smem:[%s46]]
  %s48 = scalar_lea.smem %s0, 24
  %s49 = sld [smem:[%s48]]
  %s50 = scalar_lea.smem %s0, 25
  %s51 = sld [smem:[%s50]]
  %s52 = scalar_lea.smem %s0, 26
  %s53 = sld [smem:[%s52]]
  %s54 = scalar_lea.smem %s0, 27
  %s55 = sld [smem:[%s54]]
  %s56 = scalar_lea.smem %s0, 28
  %s57 = sld [smem:[%s56]]
  %s58 = scalar_lea.smem %s0, 29
  %s59 = sld [smem:[%s58]]
  %s60 = scalar_lea.smem %s0, 30
  %s61 = sld [smem:[%s60]]
  %s62 = scalar_lea.smem %s0, 31
  %s63 = sld [smem:[%s62]]
  %s64 = scalar_lea.smem %s0, 32
  %s65 = sld [smem:[%s64]]
  %s66 = scalar_lea.smem %s0, 33
  %s67 = sld [smem:[%s66]]
  %s68 = scalar_lea.smem %s0, 34
  %s69 = sld [smem:[%s68]]
  %s70 = scalar_lea.smem %s0, 35
  %s71 = sld [smem:[%s70]]
  %s72 = scalar_lea.smem %s0, 36
  %s73 = sld [smem:[%s72]]
  %s74 = scalar_lea.smem %s0, 37
  %s75 = sld [smem:[%s74]]
  %s76 = scalar_lea.smem %s0, 38
  %s77 = sld [smem:[%s76]]
  %s78 = scalar_lea.smem %s0, 39
  %s79 = sld [smem:[%s78]]
  %s80 = scalar_lea.smem %s0, 40
  %s81 = sld [smem:[%s80]]
  %s82 = scalar_lea.smem %s0, 41
  %s83 = sld [smem:[%s82]]
  %s84 = scalar_lea.smem %s0, 42
  %s85 = sld [smem:[%s84]]
  %s86 = scalar_lea.smem %s0, 43
  %s87 = sld [smem:[%s86]]
  %s88 = scalar_lea.smem %s0, 44
  %s89 = sld [smem:[%s88]]
  %s90 = scalar_lea.smem %s0, 45
  %s91 = sld [smem:[%s90]]
  %s92 = scalar_lea.smem %s0, 46
  %s93 = sld [smem:[%s92]]
  %s94 = scalar_lea.smem %s0, 47
  %s95 = sld [smem:[%s94]]
  %s96 = scalar_lea.smem %s0, 48
  %s97 = sld [smem:[%s96]]
  %s98 = scalar_lea.smem %s0, 49
  %s99 = sld [smem:[%s98]]
  %s100 = scalar_lea.smem %s0, 50
  %s101 = sld [smem:[%s100]]
  %s102 = scalar_lea.smem %s0, 51
  %s103 = sld [smem:[%s102]]
  %s104 = scalar_lea.smem %s0, 52
  %s105 = sld [smem:[%s104]]
  %s106 = sld [smem:[#allocation0]]
  $region285: #{_lambda_.1} parent=0
    _
  %s108 = ssub.s32 1, %s106
  %s109 = scalar_select 0, %s108, %s106
  $region1: #{_lambda_.1} parent=0
    #allocation2 [shape = 'u8[512]{0}', space=vmem, size = 0x400, scoped, tag = 'input window, operand 23, single buffered']
    #allocation3 [shape = 's32[2]{0}', space=sflag, size = 0x8, scoped, tag = 'scoped memory for _lambda_.1']
    #allocation4 [shape = 's32[2]{0}', space=sflag, size = 0x8, scoped, tag = 'scoped memory for _lambda_.1']
    #allocation5 [shape = 'u8[512]{0}', space=vmem, size = 0x400, scoped, tag = 'input window, operand 25, single buffered']
    #allocation6 [shape = 's32[1]{0}', space=sflag, size = 0x4, scoped, tag = 'scoped memory for _lambda_.1']
    #allocation7 [shape = 'u8[512]{0}', space=vmem, size = 0x400, scoped, tag = 'input window, operand 27, single buffered']
    #allocation8 [shape = 'u8[512]{0}', space=vmem, size = 0x400, scoped, tag = 'input window, operand 30, single buffered']
    #allocation9 [shape = 's32[1]{0}', space=sflag, size = 0x4, scoped, tag = 'scoped memory for _lambda_.1']
    #allocation10 [shape = 'u8[512]{0}', space=vmem, size = 0x400, scoped, tag = 'input window, operand 32, single buffered']
    #allocation11 [shape = 'u8[512]{0}', space=vmem, size = 0x400, scoped, tag = 'input window, operand 35, single buffered']
    #allocation12 [shape = 's32[1]{0}', space=sflag, size = 0x4, scoped, tag = 'scoped memory for _lambda_.1']
    #allocation13 [shape = 'u8[512]{0}', space=vmem, size = 0x400, scoped, tag = 'input window, operand 38, single buffered']
    #allocation14 [shape = 'u8[512]{0}', space=vmem, size = 0x400, scoped, tag = 'input window, operand 40, single buffered']
    #allocation15 [shape = 's32[1]{0}', space=sflag, size = 0x4, scoped, tag = 'scoped memory for _lambda_.1']
    #allocation16 [shape = 'u8[512]{0}', space=vmem, size = 0x400, scoped, tag = 'input window, operand 42, single buffered']
    #allocation17 [shape = 'u8[512]{0}', space=vmem, size = 0x400, scoped, tag = 'input window, operand 44, single buffered']
    #allocation18 [shape = 's32[1]{0}', space=sflag, size = 0x4, scoped, tag = 'scoped memory for _lambda_.1']
    #allocation19 [shape = 'u8[512]{0}', space=vmem, size = 0x400, scoped, tag = 'input window, operand 46, single buffered']
    #allocation20 [shape = 'u8[1024]{0}', space=vmem, size = 0x400, scoped, tag = 'output window, operand 0']
    %110 = vsyncpa [#allocation3], 0
    %111 = vsyncpa [#allocation6], 0
    %112 = vsyncpa [#allocation9], 0
    %113 = vsyncpa [#allocation12], 0
    %114 = vsyncpa [#allocation15], 0
    %115 = vsyncpa [#allocation18], 0
    %116 = vsyncpa [#allocation4], 0
    %s117 = scalar_lea.sflag [#allocation4], 1
    %118 = vsyncpa %s117, 0
    loop: start=0, step=1, limit=4
    $region2: #{_lambda_.1} parent=1 // loop_pre_header
      _
    $region3: #{_lambda_.1} parent=1 // loop_header
      %s120 = sphi 0, %s124
      %p121 = scmp.ge.s32.totalorder %s120, 4
      %s130 = sphi 0, %s132
      %s133 = sphi 0, %s130
      %s134 = sphi 0, %s133
      %s150 = sphi 0, %s134
      %s154 = sphi 0, %s154
      %s156 = sphi 0, %s154
      %s157 = sphi 0, %s156
      %s171 = sphi 0, %s157
      %s175 = sphi 0, %s175
      %s177 = sphi 0, %s175
      %s178 = sphi 0, %s177
      %s192 = sphi 0, %s178
      %s196 = sphi 0, %s196
      %s198 = sphi 0, %s196
      %s199 = sphi 0, %s198
      %s213 = sphi 0, %s199
      %s217 = sphi 0, %s217
      %s219 = sphi 0, %s217
      %s220 = sphi 0, %s219
      %s234 = sphi 0, %s220
      %s238 = sphi 0, %s238
      %s240 = sphi 0, %s238
      %s241 = sphi 0, %s240
      %s255 = sphi 0, %s241
      %s259 = sphi 0, %s259
      %s261 = sphi 0, %s259
      %s262 = sphi 0, %s261
      %s276 = sphi 0, %s262
      %s280 = sphi 0, %s280
      %s282 = sphi 0, %s280
      %s283 = sphi 0, %s282
      %s297 = sphi 0, %s283
      %s301 = sphi 0, %s301
      %s303 = sphi 0, %s301
      %s304 = sphi 0, %s303
      %s318 = sphi 0, %s304
      %s322 = sphi 0, %s322
      %s324 = sphi 0, %s322
      %s325 = sphi 0, %s324
      %s339 = sphi 0, %s325
      %s343 = sphi 0, %s343
      %s345 = sphi 0, %s343
      %s346 = sphi 0, %s345
      %s360 = sphi 0, %s346
      %s364 = sphi 0, %s364
      %s366 = sphi 0, %s364
      %s367 = sphi 0, %s366
      %s381 = sphi 0, %s367
      %s385 = sphi 0, %s385
      %s387 = sphi 0, %s385
      %s388 = sphi 0, %s387
      %s402 = sphi 0, %s388
      %s406 = sphi 0, %s406
      %s408 = sphi 0, %s406
      %s409 = sphi 0, %s408
      %s423 = sphi 0, %s409
      %s427 = sphi 0, %s427
      %s429 = sphi 0, %s427
      %s430 = sphi 0, %s429
      %s444 = sphi 0, %s430
      %s448 = sphi 0, %s448
      %s450 = sphi 0, %s448
      %s451 = sphi 0, %s450
      %s465 = sphi 0, %s451
      %s469 = sphi 0, %s469
      %s471 = sphi 0, %s469
      %s472 = sphi 0, %s471
      %s486 = sphi 0, %s472
      %s490 = sphi 0, %s490
      %s492 = sphi 0, %s490
      %s493 = sphi 0, %s492
      %s507 = sphi 0, %s493
      %s511 = sphi 0, %s511
      %s513 = sphi 0, %s511
      %s514 = sphi 0, %s513
      %s528 = sphi 0, %s514
      %s532 = sphi 0, %s532
      %s534 = sphi 0, %s532
      %s535 = sphi 0, %s534
      %s549 = sphi 0, %s535
      %s553 = sphi 0, %s553
      %s555 = sphi 0, %s553
      %s556 = sphi 0, %s555
      %s570 = sphi 0, %s556
      %s574 = sphi 0, %s574
      %s576 = sphi 0, %s574
      %s577 = sphi 0, %s576
      %s591 = sphi 0, %s577
      %s595 = sphi 0, %s595
      %s597 = sphi 0, %s595
      %s598 = sphi 0, %s597
      %s612 = sphi 0, %s598
      %s616 = sphi 0, %s616
      %s618 = sphi 0, %s616
      %s619 = sphi 0, %s618
      %s633 = sphi 0, %s619
      %s637 = sphi 0, %s637
      %s639 = sphi 0, %s637
      %s640 = sphi 0, %s639
      %s654 = sphi 0, %s640
      %s658 = sphi 0, %s658
      %s660 = sphi 0, %s658
      %s661 = sphi 0, %s660
      %s675 = sphi 0, %s661
      %s679 = sphi 0, %s679
      %s681 = sphi 0, %s679
      %s682 = sphi 0, %s681
      %s696 = sphi 0, %s682
      %s700 = sphi 0, %s700
      %s702 = sphi 0, %s700
      %s703 = sphi 0, %s702
      %s717 = sphi 0, %s703
      %s721 = sphi 0, %s721
      %s723 = sphi 0, %s721
      %s724 = sphi 0, %s723
      %s738 = sphi 0, %s724
      %s742 = sphi 0, %s742
      %s744 = sphi 0, %s742
      %s745 = sphi 0, %s744
      %s759 = sphi 0, %s745
      %s763 = sphi 0, %s763
      %s765 = sphi 0, %s763
      %s766 = sphi 0, %s765
      %s780 = sphi 0, %s766
      %s784 = sphi 0, %s784
      %s786 = sphi 0, %s784
      %s787 = sphi 0, %s786
      %s801 = sphi 0, %s787
      %s805 = sphi 0, %s805
      %s807 = sphi 0, %s805
      %s808 = sphi 0, %s807
      %s822 = sphi 0, %s808
      %s826 = sphi 0, %s826
      %s828 = sphi 0, %s826
      %s829 = sphi 0, %s828
      %s843 = sphi 0, %s829
      %s847 = sphi 0, %s847
      %s849 = sphi 0, %s847
      %s850 = sphi 0, %s849
      %s864 = sphi 0, %s850
      %s868 = sphi 0, %s868
      %s870 = sphi 0, %s868
      %s871 = sphi 0, %s870
      %s885 = sphi 0, %s871
      %s889 = sphi 0, %s889
      %s891 = sphi 0, %s889
      %s892 = sphi 0, %s891
      %s906 = sphi 0, %s892
      %s910 = sphi 0, %s910
      %s912 = sphi 0, %s910
      %s913 = sphi 0, %s912
      %s927 = sphi 0, %s913
      %s931 = sphi 0, %s931
      %s933 = sphi 0, %s931
      %s934 = sphi 0, %s933
      %s948 = sphi 0, %s934
      %s952 = sphi 0, %s952
      %s954 = sphi 0, %s952
      %s955 = sphi 0, %s954
      %s969 = sphi 0, %s955
      %s973 = sphi 0, %s973
      %s975 = sphi 0, %s973
      %s976 = sphi 0, %s975
      %s990 = sphi 0, %s976
      %s994 = sphi 0, %s994
      %s996 = sphi 0, %s994
      %s997 = sphi 0, %s996
      %s1011 = sphi 0, %s997
      %s1015 = sphi 0, %s1015
      %s1017 = sphi 0, %s1015
      %s1018 = sphi 0, %s1017
      %s1032 = sphi 0, %s1018
      %s1036 = sphi 0, %s1036
      %s1038 = sphi 0, %s1036
      %s1039 = sphi 0, %s1038
      %s1053 = sphi 0, %s1039
      %s1057 = sphi 0, %s1057
      %s1059 = sphi 0, %s1057
      %s1060 = sphi 0, %s1059
      %s1074 = sphi 0, %s1060
      %s1078 = sphi 0, %s1078
      %s1080 = sphi 0, %s1078
      %s1081 = sphi 0, %s1080
      %s1095 = sphi 0, %s1081
      %s1099 = sphi 0, %s1099
      %s1101 = sphi 0, %s1099
      %s1102 = sphi 0, %s1101
      %s1116 = sphi 0, %s1102
      %s1120 = sphi 0, %s1120
      %s1122 = sphi 0, %s1120
      %s1123 = sphi 0, %s1122
      %s1137 = sphi 0, %s1123
      %s1141 = sphi 0, %s1141
      %s1143 = sphi 0, %s1141
      %s1144 = sphi 0, %s1143
      %s1158 = sphi 0, %s1144
      %s1162 = sphi 0, %s1162
      %s1164 = sphi 0, %s1162
      %s1165 = sphi 0, %s1164
      %s1179 = sphi 0, %s1165
      %s1183 = sphi 0, %s1183
      %s1185 = sphi 0, %s1183
      %s1186 = sphi 0, %s1185
      %s1200 = sphi 0, %s1186
      %s1204 = sphi 0, %s1204
      %s1206 = sphi 0, %s1204
      %s1207 = sphi 0, %s1206
      %s1221 = sphi 0, %s1207
      %s1227 = sphi 0, %s1229
      %s1230 = sphi 0, %s1227
      %s1231 = sphi 0, %s1230
      %s1247 = sphi 0, %s1231
    $region4: #{_lambda_.1} parent=1 // loop_header_branch
      %123 = sbr.rel (%p121) target = $region8
    $region5: #{_lambda_.1} parent=1 // loop_body
      %s125 = ssub.s32 %s120, 1
      %s126 = ssub.s32 %s120, 2
      %s127 = sadd.s32 %s120, 1
      %s128 = ssub.s32 %s120, %s127
      %p129 = scmp.eq.s32.totalorder %s128, 0
      %s131 = sadd.s32 %s130, 1
      %s132 = scalar_select %p129, %s130, %s131
      %p135 = pneg %p129
      %p136 = scmp.eq.s32.totalorder %s120, 1
      %p137 = por %p135, %p136
      %p138 = scmp.ne.s32.totalorder %s130, %s133
      %p139 = scmp.eq.s32.totalorder %s120, 0
      %p140 = por %p138, %p139
      %p141 = scmp.ne.s32.totalorder %s130, %s133
      %p142 = scmp.eq.s32.totalorder %s125, 1
      %p143 = por %p141, %p142
      %p144 = scmp.ne.s32.totalorder %s133, %s134
      %p145 = scmp.eq.s32.totalorder %s125, 0
      %p146 = por %p144, %p145
      %p147 = scmp.ne.s32.totalorder %s133, %s134
      %p148 = scmp.eq.s32.totalorder %s126, 1
      %p149 = por %p147, %p148
      %p151 = scmp.ne.s32.totalorder %s134, %s150
      %p152 = scmp.eq.s32.totalorder %s126, 0
      %p153 = por %p151, %p152
      %s155 = sadd.s32 %s154, 1
      %p158 = scmp.eq.s32.totalorder %s120, 1
      %p159 = scmp.ne.s32.totalorder %s154, %s156
      %p160 = scmp.eq.s32.totalorder %s120, 0
      %p161 = por %p159, %p160
      %p162 = scmp.ne.s32.totalorder %s154, %s156
      %p163 = scmp.eq.s32.totalorder %s125, 1
      %p164 = por %p162, %p163
      %p165 = scmp.ne.s32.totalorder %s156, %s157
      %p166 = scmp.eq.s32.totalorder %s125, 0
      %p167 = por %p165, %p166
      %p168 = scmp.ne.s32.totalorder %s156, %s157
      %p169 = scmp.eq.s32.totalorder %s126, 1
      %p170 = por %p168, %p169
      %p172 = scmp.ne.s32.totalorder %s157, %s171
      %p173 = scmp.eq.s32.totalorder %s126, 0
      %p174 = por %p172, %p173
      %s176 = sadd.s32 %s175, 1
      %p179 = scmp.eq.s32.totalorder %s120, 1
      %p180 = scmp.ne.s32.totalorder %s175, %s177
      %p181 = scmp.eq.s32.totalorder %s120, 0
      %p182 = por %p180, %p181
      %p183 = scmp.ne.s32.totalorder %s175, %s177
      %p184 = scmp.eq.s32.totalorder %s125, 1
      %p185 = por %p183, %p184
      %p186 = scmp.ne.s32.totalorder %s177, %s178
      %p187 = scmp.eq.s32.totalorder %s125, 0
      %p188 = por %p186, %p187
      %p189 = scmp.ne.s32.totalorder %s177, %s178
      %p190 = scmp.eq.s32.totalorder %s126, 1
      %p191 = por %p189, %p190
      %p193 = scmp.ne.s32.totalorder %s178, %s192
      %p194 = scmp.eq.s32.totalorder %s126, 0
      %p195 = por %p193, %p194
      %s197 = sadd.s32 %s196, 1
      %p200 = scmp.eq.s32.totalorder %s120, 1
      %p201 = scmp.ne.s32.totalorder %s196, %s198
      %p202 = scmp.eq.s32.totalorder %s120, 0
      %p203 = por %p201, %p202
      %p204 = scmp.ne.s32.totalorder %s196, %s198
      %p205 = scmp.eq.s32.totalorder %s125, 1
      %p206 = por %p204, %p205
      %p207 = scmp.ne.s32.totalorder %s198, %s199
      %p208 = scmp.eq.s32.totalorder %s125, 0
      %p209 = por %p207, %p208
      %p210 = scmp.ne.s32.totalorder %s198, %s199
      %p211 = scmp.eq.s32.totalorder %s126, 1
      %p212 = por %p210, %p211
      %p214 = scmp.ne.s32.totalorder %s199, %s213
      %p215 = scmp.eq.s32.totalorder %s126, 0
      %p216 = por %p214, %p215
      %s218 = sadd.s32 %s217, 1
      %p221 = scmp.eq.s32.totalorder %s120, 1
      %p222 = scmp.ne.s32.totalorder %s217, %s219
      %p223 = scmp.eq.s32.totalorder %s120, 0
      %p224 = por %p222, %p223
      %p225 = scmp.ne.s32.totalorder %s217, %s219
      %p226 = scmp.eq.s32.totalorder %s125, 1
      %p227 = por %p225, %p226
      %p228 = scmp.ne.s32.totalorder %s219, %s220
      %p229 = scmp.eq.s32.totalorder %s125, 0
      %p230 = por %p228, %p229
      %p231 = scmp.ne.s32.totalorder %s219, %s220
      %p232 = scmp.eq.s32.totalorder %s126, 1
      %p233 = por %p231, %p232
      %p235 = scmp.ne.s32.totalorder %s220, %s234
      %p236 = scmp.eq.s32.totalorder %s126, 0
      %p237 = por %p235, %p236
      %s239 = sadd.s32 %s238, 1
      %p242 = scmp.eq.s32.totalorder %s120, 1
      %p243 = scmp.ne.s32.totalorder %s238, %s240
      %p244 = scmp.eq.s32.totalorder %s120, 0
      %p245 = por %p243, %p244
      %p246 = scmp.ne.s32.totalorder %s238, %s240
      %p247 = scmp.eq.s32.totalorder %s125, 1
      %p248 = por %p246, %p247
      %p249 = scmp.ne.s32.totalorder %s240, %s241
      %p250 = scmp.eq.s32.totalorder %s125, 0
      %p251 = por %p249, %p250
      %p252 = scmp.ne.s32.totalorder %s240, %s241
      %p253 = scmp.eq.s32.totalorder %s126, 1
      %p254 = por %p252, %p253
      %p256 = scmp.ne.s32.totalorder %s241, %s255
      %p257 = scmp.eq.s32.totalorder %s126, 0
      %p258 = por %p256, %p257
      %s260 = sadd.s32 %s259, 1
      %p263 = scmp.eq.s32.totalorder %s120, 1
      %p264 = scmp.ne.s32.totalorder %s259, %s261
      %p265 = scmp.eq.s32.totalorder %s120, 0
      %p266 = por %p264, %p265
      %p267 = scmp.ne.s32.totalorder %s259, %s261
      %p268 = scmp.eq.s32.totalorder %s125, 1
      %p269 = por %p267, %p268
      %p270 = scmp.ne.s32.totalorder %s261, %s262
      %p271 = scmp.eq.s32.totalorder %s125, 0
      %p272 = por %p270, %p271
      %p273 = scmp.ne.s32.totalorder %s261, %s262
      %p274 = scmp.eq.s32.totalorder %s126, 1
      %p275 = por %p273, %p274
      %p277 = scmp.ne.s32.totalorder %s262, %s276
      %p278 = scmp.eq.s32.totalorder %s126, 0
      %p279 = por %p277, %p278
      %s281 = sadd.s32 %s280, 1
      %p284 = scmp.eq.s32.totalorder %s120, 1
      %p285 = scmp.ne.s32.totalorder %s280, %s282
      %p286 = scmp.eq.s32.totalorder %s120, 0
      %p287 = por %p285, %p286
      %p288 = scmp.ne.s32.totalorder %s280, %s282
      %p289 = scmp.eq.s32.totalorder %s125, 1
      %p290 = por %p288, %p289
      %p291 = scmp.ne.s32.totalorder %s282, %s283
      %p292 = scmp.eq.s32.totalorder %s125, 0
      %p293 = por %p291, %p292
      %p294 = scmp.ne.s32.totalorder %s282, %s283
      %p295 = scmp.eq.s32.totalorder %s126, 1
      %p296 = por %p294, %p295
      %p298 = scmp.ne.s32.totalorder %s283, %s297
      %p299 = scmp.eq.s32.totalorder %s126, 0
      %p300 = por %p298, %p299
      %s302 = sadd.s32 %s301, 1
      %p305 = scmp.eq.s32.totalorder %s120, 1
      %p306 = scmp.ne.s32.totalorder %s301, %s303
      %p307 = scmp.eq.s32.totalorder %s120, 0
      %p308 = por %p306, %p307
      %p309 = scmp.ne.s32.totalorder %s301, %s303
      %p310 = scmp.eq.s32.totalorder %s125, 1
      %p311 = por %p309, %p310
      %p312 = scmp.ne.s32.totalorder %s303, %s304
      %p313 = scmp.eq.s32.totalorder %s125, 0
      %p314 = por %p312, %p313
      %p315 = scmp.ne.s32.totalorder %s303, %s304
      %p316 = scmp.eq.s32.totalorder %s126, 1
      %p317 = por %p315, %p316
      %p319 = scmp.ne.s32.totalorder %s304, %s318
      %p320 = scmp.eq.s32.totalorder %s126, 0
      %p321 = por %p319, %p320
      %s323 = sadd.s32 %s322, 1
      %p326 = scmp.eq.s32.totalorder %s120, 1
      %p327 = scmp.ne.s32.totalorder %s322, %s324
      %p328 = scmp.eq.s32.totalorder %s120, 0
      %p329 = por %p327, %p328
      %p330 = scmp.ne.s32.totalorder %s322, %s324
      %p331 = scmp.eq.s32.totalorder %s125, 1
      %p332 = por %p330, %p331
      %p333 = scmp.ne.s32.totalorder %s324, %s325
      %p334 = scmp.eq.s32.totalorder %s125, 0
      %p335 = por %p333, %p334
      %p336 = scmp.ne.s32.totalorder %s324, %s325
      %p337 = scmp.eq.s32.totalorder %s126, 1
      %p338 = por %p336, %p337
      %p340 = scmp.ne.s32.totalorder %s325, %s339
      %p341 = scmp.eq.s32.totalorder %s126, 0
      %p342 = por %p340, %p341
      %s344 = sadd.s32 %s343, 1
      %p347 = scmp.eq.s32.totalorder %s120, 1
      %p348 = scmp.ne.s32.totalorder %s343, %s345
      %p349 = scmp.eq.s32.totalorder %s120, 0
      %p350 = por %p348, %p349
      %p351 = scmp.ne.s32.totalorder %s343, %s345
      %p352 = scmp.eq.s32.totalorder %s125, 1
      %p353 = por %p351, %p352
      %p354 = scmp.ne.s32.totalorder %s345, %s346
      %p355 = scmp.eq.s32.totalorder %s125, 0
      %p356 = por %p354, %p355
      %p357 = scmp.ne.s32.totalorder %s345, %s346
      %p358 = scmp.eq.s32.totalorder %s126, 1
      %p359 = por %p357, %p358
      %p361 = scmp.ne.s32.totalorder %s346, %s360
      %p362 = scmp.eq.s32.totalorder %s126, 0
      %p363 = por %p361, %p362
      %s365 = sadd.s32 %s364, 1
      %p368 = scmp.eq.s32.totalorder %s120, 1
      %p369 = scmp.ne.s32.totalorder %s364, %s366
      %p370 = scmp.eq.s32.totalorder %s120, 0
      %p371 = por %p369, %p370
      %p372 = scmp.ne.s32.totalorder %s364, %s366
      %p373 = scmp.eq.s32.totalorder %s125, 1
      %p374 = por %p372, %p373
      %p375 = scmp.ne.s32.totalorder %s366, %s367
      %p376 = scmp.eq.s32.totalorder %s125, 0
      %p377 = por %p375, %p376
      %p378 = scmp.ne.s32.totalorder %s366, %s367
      %p379 = scmp.eq.s32.totalorder %s126, 1
      %p380 = por %p378, %p379
      %p382 = scmp.ne.s32.totalorder %s367, %s381
      %p383 = scmp.eq.s32.totalorder %s126, 0
      %p384 = por %p382, %p383
      %s386 = sadd.s32 %s385, 1
      %p389 = scmp.eq.s32.totalorder %s120, 1
      %p390 = scmp.ne.s32.totalorder %s385, %s387
      %p391 = scmp.eq.s32.totalorder %s120, 0
      %p392 = por %p390, %p391
      %p393 = scmp.ne.s32.totalorder %s385, %s387
      %p394 = scmp.eq.s32.totalorder %s125, 1
      %p395 = por %p393, %p394
      %p396 = scmp.ne.s32.totalorder %s387, %s388
      %p397 = scmp.eq.s32.totalorder %s125, 0
      %p398 = por %p396, %p397
      %p399 = scmp.ne.s32.totalorder %s387, %s388
      %p400 = scmp.eq.s32.totalorder %s126, 1
      %p401 = por %p399, %p400
      %p403 = scmp.ne.s32.totalorder %s388, %s402
      %p404 = scmp.eq.s32.totalorder %s126, 0
      %p405 = por %p403, %p404
      %s407 = sadd.s32 %s406, 1
      %p410 = scmp.eq.s32.totalorder %s120, 1
      %p411 = scmp.ne.s32.totalorder %s406, %s408
      %p412 = scmp.eq.s32.totalorder %s120, 0
      %p413 = por %p411, %p412
      %p414 = scmp.ne.s32.totalorder %s406, %s408
      %p415 = scmp.eq.s32.totalorder %s125, 1
      %p416 = por %p414, %p415
      %p417 = scmp.ne.s32.totalorder %s408, %s409
      %p418 = scmp.eq.s32.totalorder %s125, 0
      %p419 = por %p417, %p418
      %p420 = scmp.ne.s32.totalorder %s408, %s409
      %p421 = scmp.eq.s32.totalorder %s126, 1
      %p422 = por %p420, %p421
      %p424 = scmp.ne.s32.totalorder %s409, %s423
      %p425 = scmp.eq.s32.totalorder %s126, 0
      %p426 = por %p424, %p425
      %s428 = sadd.s32 %s427, 1
      %p431 = scmp.eq.s32.totalorder %s120, 1
      %p432 = scmp.ne.s32.totalorder %s427, %s429
      %p433 = scmp.eq.s32.totalorder %s120, 0
      %p434 = por %p432, %p433
      %p435 = scmp.ne.s32.totalorder %s427, %s429
      %p436 = scmp.eq.s32.totalorder %s125, 1
      %p437 = por %p435, %p436
      %p438 = scmp.ne.s32.totalorder %s429, %s430
      %p439 = scmp.eq.s32.totalorder %s125, 0
      %p440 = por %p438, %p439
      %p441 = scmp.ne.s32.totalorder %s429, %s430
      %p442 = scmp.eq.s32.totalorder %s126, 1
      %p443 = por %p441, %p442
      %p445 = scmp.ne.s32.totalorder %s430, %s444
      %p446 = scmp.eq.s32.totalorder %s126, 0
      %p447 = por %p445, %p446
      %s449 = sadd.s32 %s448, 1
      %p452 = scmp.eq.s32.totalorder %s120, 1
      %p453 = scmp.ne.s32.totalorder %s448, %s450
      %p454 = scmp.eq.s32.totalorder %s120, 0
      %p455 = por %p453, %p454
      %p456 = scmp.ne.s32.totalorder %s448, %s450
      %p457 = scmp.eq.s32.totalorder %s125, 1
      %p458 = por %p456, %p457
      %p459 = scmp.ne.s32.totalorder %s450, %s451
      %p460 = scmp.eq.s32.totalorder %s125, 0
      %p461 = por %p459, %p460
      %p462 = scmp.ne.s32.totalorder %s450, %s451
      %p463 = scmp.eq.s32.totalorder %s126, 1
      %p464 = por %p462, %p463
      %p466 = scmp.ne.s32.totalorder %s451, %s465
      %p467 = scmp.eq.s32.totalorder %s126, 0
      %p468 = por %p466, %p467
      %s470 = sadd.s32 %s469, 1
      %p473 = scmp.eq.s32.totalorder %s120, 1
      %p474 = scmp.ne.s32.totalorder %s469, %s471
      %p475 = scmp.eq.s32.totalorder %s120, 0
      %p476 = por %p474, %p475
      %p477 = scmp.ne.s32.totalorder %s469, %s471
      %p478 = scmp.eq.s32.totalorder %s125, 1
      %p479 = por %p477, %p478
      %p480 = scmp.ne.s32.totalorder %s471, %s472
      %p481 = scmp.eq.s32.totalorder %s125, 0
      %p482 = por %p480, %p481
      %p483 = scmp.ne.s32.totalorder %s471, %s472
      %p484 = scmp.eq.s32.totalorder %s126, 1
      %p485 = por %p483, %p484
      %p487 = scmp.ne.s32.totalorder %s472, %s486
      %p488 = scmp.eq.s32.totalorder %s126, 0
      %p489 = por %p487, %p488
      %s491 = sadd.s32 %s490, 1
      %p494 = scmp.eq.s32.totalorder %s120, 1
      %p495 = scmp.ne.s32.totalorder %s490, %s492
      %p496 = scmp.eq.s32.totalorder %s120, 0
      %p497 = por %p495, %p496
      %p498 = scmp.ne.s32.totalorder %s490, %s492
      %p499 = scmp.eq.s32.totalorder %s125, 1
      %p500 = por %p498, %p499
      %p501 = scmp.ne.s32.totalorder %s492, %s493
      %p502 = scmp.eq.s32.totalorder %s125, 0
      %p503 = por %p501, %p502
      %p504 = scmp.ne.s32.totalorder %s492, %s493
      %p505 = scmp.eq.s32.totalorder %s126, 1
      %p506 = por %p504, %p505
      %p508 = scmp.ne.s32.totalorder %s493, %s507
      %p509 = scmp.eq.s32.totalorder %s126, 0
      %p510 = por %p508, %p509
      %s512 = sadd.s32 %s511, 1
      %p515 = scmp.eq.s32.totalorder %s120, 1
      %p516 = scmp.ne.s32.totalorder %s511, %s513
      %p517 = scmp.eq.s32.totalorder %s120, 0
      %p518 = por %p516, %p517
      %p519 = scmp.ne.s32.totalorder %s511, %s513
      %p520 = scmp.eq.s32.totalorder %s125, 1
      %p521 = por %p519, %p520
      %p522 = scmp.ne.s32.totalorder %s513, %s514
      %p523 = scmp.eq.s32.totalorder %s125, 0
      %p524 = por %p522, %p523
      %p525 = scmp.ne.s32.totalorder %s513, %s514
      %p526 = scmp.eq.s32.totalorder %s126, 1
      %p527 = por %p525, %p526
      %p529 = scmp.ne.s32.totalorder %s514, %s528
      %p530 = scmp.eq.s32.totalorder %s126, 0
      %p531 = por %p529, %p530
      %s533 = sadd.s32 %s532, 1
      %p536 = scmp.eq.s32.totalorder %s120, 1
      %p537 = scmp.ne.s32.totalorder %s532, %s534
      %p538 = scmp.eq.s32.totalorder %s120, 0
      %p539 = por %p537, %p538
      %p540 = scmp.ne.s32.totalorder %s532, %s534
      %p541 = scmp.eq.s32.totalorder %s125, 1
      %p542 = por %p540, %p541
      %p543 = scmp.ne.s32.totalorder %s534, %s535
      %p544 = scmp.eq.s32.totalorder %s125, 0
      %p545 = por %p543, %p544
      %p546 = scmp.ne.s32.totalorder %s534, %s535
      %p547 = scmp.eq.s32.totalorder %s126, 1
      %p548 = por %p546, %p547
      %p550 = scmp.ne.s32.totalorder %s535, %s549
      %p551 = scmp.eq.s32.totalorder %s126, 0
      %p552 = por %p550, %p551
      %s554 = sadd.s32 %s553, 1
      %p557 = scmp.eq.s32.totalorder %s120, 1
      %p558 = scmp.ne.s32.totalorder %s553, %s555
      %p559 = scmp.eq.s32.totalorder %s120, 0
      %p560 = por %p558, %p559
      %p561 = scmp.ne.s32.totalorder %s553, %s555
      %p562 = scmp.eq.s32.totalorder %s125, 1
      %p563 = por %p561, %p562
      %p564 = scmp.ne.s32.totalorder %s555, %s556
      %p565 = scmp.eq.s32.totalorder %s125, 0
      %p566 = por %p564, %p565
      %p567 = scmp.ne.s32.totalorder %s555, %s556
      %p568 = scmp.eq.s32.totalorder %s126, 1
      %p569 = por %p567, %p568
      %p571 = scmp.ne.s32.totalorder %s556, %s570
      %p572 = scmp.eq.s32.totalorder %s126, 0
      %p573 = por %p571, %p572
      %s575 = sadd.s32 %s574, 1
      %p578 = scmp.eq.s32.totalorder %s120, 1
      %p579 = scmp.ne.s32.totalorder %s574, %s576
      %p580 = scmp.eq.s32.totalorder %s120, 0
      %p581 = por %p579, %p580
      %p582 = scmp.ne.s32.totalorder %s574, %s576
      %p583 = scmp.eq.s32.totalorder %s125, 1
      %p584 = por %p582, %p583
      %p585 = scmp.ne.s32.totalorder %s576, %s577
      %p586 = scmp.eq.s32.totalorder %s125, 0
      %p587 = por %p585, %p586
      %p588 = scmp.ne.s32.totalorder %s576, %s577
      %p589 = scmp.eq.s32.totalorder %s126, 1
      %p590 = por %p588, %p589
      %p592 = scmp.ne.s32.totalorder %s577, %s591
      %p593 = scmp.eq.s32.totalorder %s126, 0
      %p594 = por %p592, %p593
      %s596 = sadd.s32 %s595, 1
      %p599 = scmp.eq.s32.totalorder %s120, 1
      %p600 = scmp.ne.s32.totalorder %s595, %s597
      %p601 = scmp.eq.s32.totalorder %s120, 0
      %p602 = por %p600, %p601
      %p603 = scmp.ne.s32.totalorder %s595, %s597
      %p604 = scmp.eq.s32.totalorder %s125, 1
      %p605 = por %p603, %p604
      %p606 = scmp.ne.s32.totalorder %s597, %s598
      %p607 = scmp.eq.s32.totalorder %s125, 0
      %p608 = por %p606, %p607
      %p609 = scmp.ne.s32.totalorder %s597, %s598
      %p610 = scmp.eq.s32.totalorder %s126, 1
      %p611 = por %p609, %p610
      %p613 = scmp.ne.s32.totalorder %s598, %s612
      %p614 = scmp.eq.s32.totalorder %s126, 0
      %p615 = por %p613, %p614
      %s617 = sadd.s32 %s616, 1
      %p620 = scmp.eq.s32.totalorder %s120, 1
      %p621 = scmp.ne.s32.totalorder %s616, %s618
      %p622 = scmp.eq.s32.totalorder %s120, 0
      %p623 = por %p621, %p622
      %p624 = scmp.ne.s32.totalorder %s616, %s618
      %p625 = scmp.eq.s32.totalorder %s125, 1
      %p626 = por %p624, %p625
      %p627 = scmp.ne.s32.totalorder %s618, %s619
      %p628 = scmp.eq.s32.totalorder %s125, 0
      %p629 = por %p627, %p628
      %p630 = scmp.ne.s32.totalorder %s618, %s619
      %p631 = scmp.eq.s32.totalorder %s126, 1
      %p632 = por %p630, %p631
      %p634 = scmp.ne.s32.totalorder %s619, %s633
      %p635 = scmp.eq.s32.totalorder %s126, 0
      %p636 = por %p634, %p635
      %s638 = sadd.s32 %s637, 1
      %p641 = scmp.eq.s32.totalorder %s120, 1
      %p642 = scmp.ne.s32.totalorder %s637, %s639
      %p643 = scmp.eq.s32.totalorder %s120, 0
      %p644 = por %p642, %p643
      %p645 = scmp.ne.s32.totalorder %s637, %s639
      %p646 = scmp.eq.s32.totalorder %s125, 1
      %p647 = por %p645, %p646
      %p648 = scmp.ne.s32.totalorder %s639, %s640
      %p649 = scmp.eq.s32.totalorder %s125, 0
      %p650 = por %p648, %p649
      %p651 = scmp.ne.s32.totalorder %s639, %s640
      %p652 = scmp.eq.s32.totalorder %s126, 1
      %p653 = por %p651, %p652
      %p655 = scmp.ne.s32.totalorder %s640, %s654
      %p656 = scmp.eq.s32.totalorder %s126, 0
      %p657 = por %p655, %p656
      %s659 = sadd.s32 %s658, 1
      %p662 = scmp.eq.s32.totalorder %s120, 1
      %p663 = scmp.ne.s32.totalorder %s658, %s660
      %p664 = scmp.eq.s32.totalorder %s120, 0
      %p665 = por %p663, %p664
      %p666 = scmp.ne.s32.totalorder %s658, %s660
      %p667 = scmp.eq.s32.totalorder %s125, 1
      %p668 = por %p666, %p667
      %p669 = scmp.ne.s32.totalorder %s660, %s661
      %p670 = scmp.eq.s32.totalorder %s125, 0
      %p671 = por %p669, %p670
      %p672 = scmp.ne.s32.totalorder %s660, %s661
      %p673 = scmp.eq.s32.totalorder %s126, 1
      %p674 = por %p672, %p673
      %p676 = scmp.ne.s32.totalorder %s661, %s675
      %p677 = scmp.eq.s32.totalorder %s126, 0
      %p678 = por %p676, %p677
      %s680 = sadd.s32 %s679, 1
      %p683 = scmp.eq.s32.totalorder %s120, 1
      %p684 = scmp.ne.s32.totalorder %s679, %s681
      %p685 = scmp.eq.s32.totalorder %s120, 0
      %p686 = por %p684, %p685
      %p687 = scmp.ne.s32.totalorder %s679, %s681
      %p688 = scmp.eq.s32.totalorder %s125, 1
      %p689 = por %p687, %p688
      %p690 = scmp.ne.s32.totalorder %s681, %s682
      %p691 = scmp.eq.s32.totalorder %s125, 0
      %p692 = por %p690, %p691
      %p693 = scmp.ne.s32.totalorder %s681, %s682
      %p694 = scmp.eq.s32.totalorder %s126, 1
      %p695 = por %p693, %p694
      %p697 = scmp.ne.s32.totalorder %s682, %s696
      %p698 = scmp.eq.s32.totalorder %s126, 0
      %p699 = por %p697, %p698
      %s701 = sadd.s32 %s700, 1
      %p704 = scmp.eq.s32.totalorder %s120, 1
      %p705 = scmp.ne.s32.totalorder %s700, %s702
      %p706 = scmp.eq.s32.totalorder %s120, 0
      %p707 = por %p705, %p706
      %p708 = scmp.ne.s32.totalorder %s700, %s702
      %p709 = scmp.eq.s32.totalorder %s125, 1
      %p710 = por %p708, %p709
      %p711 = scmp.ne.s32.totalorder %s702, %s703
      %p712 = scmp.eq.s32.totalorder %s125, 0
      %p713 = por %p711, %p712
      %p714 = scmp.ne.s32.totalorder %s702, %s703
      %p715 = scmp.eq.s32.totalorder %s126, 1
      %p716 = por %p714, %p715
      %p718 = scmp.ne.s32.totalorder %s703, %s717
      %p719 = scmp.eq.s32.totalorder %s126, 0
      %p720 = por %p718, %p719
      %s722 = sadd.s32 %s721, 1
      %p725 = scmp.eq.s32.totalorder %s120, 1
      %p726 = scmp.ne.s32.totalorder %s721, %s723
      %p727 = scmp.eq.s32.totalorder %s120, 0
      %p728 = por %p726, %p727
      %p729 = scmp.ne.s32.totalorder %s721, %s723
      %p730 = scmp.eq.s32.totalorder %s125, 1
      %p731 = por %p729, %p730
      %p732 = scmp.ne.s32.totalorder %s723, %s724
      %p733 = scmp.eq.s32.totalorder %s125, 0
      %p734 = por %p732, %p733
      %p735 = scmp.ne.s32.totalorder %s723, %s724
      %p736 = scmp.eq.s32.totalorder %s126, 1
      %p737 = por %p735, %p736
      %p739 = scmp.ne.s32.totalorder %s724, %s738
      %p740 = scmp.eq.s32.totalorder %s126, 0
      %p741 = por %p739, %p740
      %s743 = sadd.s32 %s742, 1
      %p746 = scmp.eq.s32.totalorder %s120, 1
      %p747 = scmp.ne.s32.totalorder %s742, %s744
      %p748 = scmp.eq.s32.totalorder %s120, 0
      %p749 = por %p747, %p748
      %p750 = scmp.ne.s32.totalorder %s742, %s744
      %p751 = scmp.eq.s32.totalorder %s125, 1
      %p752 = por %p750, %p751
      %p753 = scmp.ne.s32.totalorder %s744, %s745
      %p754 = scmp.eq.s32.totalorder %s125, 0
      %p755 = por %p753, %p754
      %p756 = scmp.ne.s32.totalorder %s744, %s745
      %p757 = scmp.eq.s32.totalorder %s126, 1
      %p758 = por %p756, %p757
      %p760 = scmp.ne.s32.totalorder %s745, %s759
      %p761 = scmp.eq.s32.totalorder %s126, 0
      %p762 = por %p760, %p761
      %s764 = sadd.s32 %s763, 1
      %p767 = scmp.eq.s32.totalorder %s120, 1
      %p768 = scmp.ne.s32.totalorder %s763, %s765
      %p769 = scmp.eq.s32.totalorder %s120, 0
      %p770 = por %p768, %p769
      %p771 = scmp.ne.s32.totalorder %s763, %s765
      %p772 = scmp.eq.s32.totalorder %s125, 1
      %p773 = por %p771, %p772
      %p774 = scmp.ne.s32.totalorder %s765, %s766
      %p775 = scmp.eq.s32.totalorder %s125, 0
      %p776 = por %p774, %p775
      %p777 = scmp.ne.s32.totalorder %s765, %s766
      %p778 = scmp.eq.s32.totalorder %s126, 1
      %p779 = por %p777, %p778
      %p781 = scmp.ne.s32.totalorder %s766, %s780
      %p782 = scmp.eq.s32.totalorder %s126, 0
      %p783 = por %p781, %p782
      %s785 = sadd.s32 %s784, 1
      %p788 = scmp.eq.s32.totalorder %s120, 1
      %p789 = scmp.ne.s32.totalorder %s784, %s786
      %p790 = scmp.eq.s32.totalorder %s120, 0
      %p791 = por %p789, %p790
      %p792 = scmp.ne.s32.totalorder %s784, %s786
      %p793 = scmp.eq.s32.totalorder %s125, 1
      %p794 = por %p792, %p793
      %p795 = scmp.ne.s32.totalorder %s786, %s787
      %p796 = scmp.eq.s32.totalorder %s125, 0
      %p797 = por %p795, %p796
      %p798 = scmp.ne.s32.totalorder %s786, %s787
      %p799 = scmp.eq.s32.totalorder %s126, 1
      %p800 = por %p798, %p799
      %p802 = scmp.ne.s32.totalorder %s787, %s801
      %p803 = scmp.eq.s32.totalorder %s126, 0
      %p804 = por %p802, %p803
      %s806 = sadd.s32 %s805, 1
      %p809 = scmp.eq.s32.totalorder %s120, 1
      %p810 = scmp.ne.s32.totalorder %s805, %s807
      %p811 = scmp.eq.s32.totalorder %s120, 0
      %p812 = por %p810, %p811
      %p813 = scmp.ne.s32.totalorder %s805, %s807
      %p814 = scmp.eq.s32.totalorder %s125, 1
      %p815 = por %p813, %p814
      %p816 = scmp.ne.s32.totalorder %s807, %s808
      %p817 = scmp.eq.s32.totalorder %s125, 0
      %p818 = por %p816, %p817
      %p819 = scmp.ne.s32.totalorder %s807, %s808
      %p820 = scmp.eq.s32.totalorder %s126, 1
      %p821 = por %p819, %p820
      %p823 = scmp.ne.s32.totalorder %s808, %s822
      %p824 = scmp.eq.s32.totalorder %s126, 0
      %p825 = por %p823, %p824
      %s827 = sadd.s32 %s826, 1
      %p830 = scmp.eq.s32.totalorder %s120, 1
      %p831 = scmp.ne.s32.totalorder %s826, %s828
      %p832 = scmp.eq.s32.totalorder %s120, 0
      %p833 = por %p831, %p832
      %p834 = scmp.ne.s32.totalorder %s826, %s828
      %p835 = scmp.eq.s32.totalorder %s125, 1
      %p836 = por %p834, %p835
      %p837 = scmp.ne.s32.totalorder %s828, %s829
      %p838 = scmp.eq.s32.totalorder %s125, 0
      %p839 = por %p837, %p838
      %p840 = scmp.ne.s32.totalorder %s828, %s829
      %p841 = scmp.eq.s32.totalorder %s126, 1
      %p842 = por %p840, %p841
      %p844 = scmp.ne.s32.totalorder %s829, %s843
      %p845 = scmp.eq.s32.totalorder %s126, 0
      %p846 = por %p844, %p845
      %s848 = sadd.s32 %s847, 1
      %p851 = scmp.eq.s32.totalorder %s120, 1
      %p852 = scmp.ne.s32.totalorder %s847, %s849
      %p853 = scmp.eq.s32.totalorder %s120, 0
      %p854 = por %p852, %p853
      %p855 = scmp.ne.s32.totalorder %s847, %s849
      %p856 = scmp.eq.s32.totalorder %s125, 1
      %p857 = por %p855, %p856
      %p858 = scmp.ne.s32.totalorder %s849, %s850
      %p859 = scmp.eq.s32.totalorder %s125, 0
      %p860 = por %p858, %p859
      %p861 = scmp.ne.s32.totalorder %s849, %s850
      %p862 = scmp.eq.s32.totalorder %s126, 1
      %p863 = por %p861, %p862
      %p865 = scmp.ne.s32.totalorder %s850, %s864
      %p866 = scmp.eq.s32.totalorder %s126, 0
      %p867 = por %p865, %p866
      %s869 = sadd.s32 %s868, 1
      %p872 = scmp.eq.s32.totalorder %s120, 1
      %p873 = scmp.ne.s32.totalorder %s868, %s870
      %p874 = scmp.eq.s32.totalorder %s120, 0
      %p875 = por %p873, %p874
      %p876 = scmp.ne.s32.totalorder %s868, %s870
      %p877 = scmp.eq.s32.totalorder %s125, 1
      %p878 = por %p876, %p877
      %p879 = scmp.ne.s32.totalorder %s870, %s871
      %p880 = scmp.eq.s32.totalorder %s125, 0
      %p881 = por %p879, %p880
      %p882 = scmp.ne.s32.totalorder %s870, %s871
      %p883 = scmp.eq.s32.totalorder %s126, 1
      %p884 = por %p882, %p883
      %p886 = scmp.ne.s32.totalorder %s871, %s885
      %p887 = scmp.eq.s32.totalorder %s126, 0
      %p888 = por %p886, %p887
      %s890 = sadd.s32 %s889, 1
      %p893 = scmp.eq.s32.totalorder %s120, 1
      %p894 = scmp.ne.s32.totalorder %s889, %s891
      %p895 = scmp.eq.s32.totalorder %s120, 0
      %p896 = por %p894, %p895
      %p897 = scmp.ne.s32.totalorder %s889, %s891
      %p898 = scmp.eq.s32.totalorder %s125, 1
      %p899 = por %p897, %p898
      %p900 = scmp.ne.s32.totalorder %s891, %s892
      %p901 = scmp.eq.s32.totalorder %s125, 0
      %p902 = por %p900, %p901
      %p903 = scmp.ne.s32.totalorder %s891, %s892
      %p904 = scmp.eq.s32.totalorder %s126, 1
      %p905 = por %p903, %p904
      %p907 = scmp.ne.s32.totalorder %s892, %s906
      %p908 = scmp.eq.s32.totalorder %s126, 0
      %p909 = por %p907, %p908
      %s911 = sadd.s32 %s910, 1
      %p914 = scmp.eq.s32.totalorder %s120, 1
      %p915 = scmp.ne.s32.totalorder %s910, %s912
      %p916 = scmp.eq.s32.totalorder %s120, 0
      %p917 = por %p915, %p916
      %p918 = scmp.ne.s32.totalorder %s910, %s912
      %p919 = scmp.eq.s32.totalorder %s125, 1
      %p920 = por %p918, %p919
      %p921 = scmp.ne.s32.totalorder %s912, %s913
      %p922 = scmp.eq.s32.totalorder %s125, 0
      %p923 = por %p921, %p922
      %p924 = scmp.ne.s32.totalorder %s912, %s913
      %p925 = scmp.eq.s32.totalorder %s126, 1
      %p926 = por %p924, %p925
      %p928 = scmp.ne.s32.totalorder %s913, %s927
      %p929 = scmp.eq.s32.totalorder %s126, 0
      %p930 = por %p928, %p929
      %s932 = sadd.s32 %s931, 1
      %p935 = scmp.eq.s32.totalorder %s120, 1
      %p936 = scmp.ne.s32.totalorder %s931, %s933
      %p937 = scmp.eq.s32.totalorder %s120, 0
      %p938 = por %p936, %p937
      %p939 = scmp.ne.s32.totalorder %s931, %s933
      %p940 = scmp.eq.s32.totalorder %s125, 1
      %p941 = por %p939, %p940
      %p942 = scmp.ne.s32.totalorder %s933, %s934
      %p943 = scmp.eq.s32.totalorder %s125, 0
      %p944 = por %p942, %p943
      %p945 = scmp.ne.s32.totalorder %s933, %s934
      %p946 = scmp.eq.s32.totalorder %s126, 1
      %p947 = por %p945, %p946
      %p949 = scmp.ne.s32.totalorder %s934, %s948
      %p950 = scmp.eq.s32.totalorder %s126, 0
      %p951 = por %p949, %p950
      %s953 = sadd.s32 %s952, 1
      %p956 = scmp.eq.s32.totalorder %s120, 1
      %p957 = scmp.ne.s32.totalorder %s952, %s954
      %p958 = scmp.eq.s32.totalorder %s120, 0
      %p959 = por %p957, %p958
      %p960 = scmp.ne.s32.totalorder %s952, %s954
      %p961 = scmp.eq.s32.totalorder %s125, 1
      %p962 = por %p960, %p961
      %p963 = scmp.ne.s32.totalorder %s954, %s955
      %p964 = scmp.eq.s32.totalorder %s125, 0
      %p965 = por %p963, %p964
      %p966 = scmp.ne.s32.totalorder %s954, %s955
      %p967 = scmp.eq.s32.totalorder %s126, 1
      %p968 = por %p966, %p967
      %p970 = scmp.ne.s32.totalorder %s955, %s969
      %p971 = scmp.eq.s32.totalorder %s126, 0
      %p972 = por %p970, %p971
      %s974 = sadd.s32 %s973, 1
      %p977 = scmp.eq.s32.totalorder %s120, 1
      %p978 = scmp.ne.s32.totalorder %s973, %s975
      %p979 = scmp.eq.s32.totalorder %s120, 0
      %p980 = por %p978, %p979
      %p981 = scmp.ne.s32.totalorder %s973, %s975
      %p982 = scmp.eq.s32.totalorder %s125, 1
      %p983 = por %p981, %p982
      %p984 = scmp.ne.s32.totalorder %s975, %s976
      %p985 = scmp.eq.s32.totalorder %s125, 0
      %p986 = por %p984, %p985
      %p987 = scmp.ne.s32.totalorder %s975, %s976
      %p988 = scmp.eq.s32.totalorder %s126, 1
      %p989 = por %p987, %p988
      %p991 = scmp.ne.s32.totalorder %s976, %s990
      %p992 = scmp.eq.s32.totalorder %s126, 0
      %p993 = por %p991, %p992
      %s995 = sadd.s32 %s994, 1
      %p998 = scmp.eq.s32.totalorder %s120, 1
      %p999 = scmp.ne.s32.totalorder %s994, %s996
      %p1000 = scmp.eq.s32.totalorder %s120, 0
      %p1001 = por %p999, %p1000
      %p1002 = scmp.ne.s32.totalorder %s994, %s996
      %p1003 = scmp.eq.s32.totalorder %s125, 1
      %p1004 = por %p1002, %p1003
      %p1005 = scmp.ne.s32.totalorder %s996, %s997
      %p1006 = scmp.eq.s32.totalorder %s125, 0
      %p1007 = por %p1005, %p1006
      %p1008 = scmp.ne.s32.totalorder %s996, %s997
      %p1009 = scmp.eq.s32.totalorder %s126, 1
      %p1010 = por %p1008, %p1009
      %p1012 = scmp.ne.s32.totalorder %s997, %s1011
      %p1013 = scmp.eq.s32.totalorder %s126, 0
      %p1014 = por %p1012, %p1013
      %s1016 = sadd.s32 %s1015, 1
      %p1019 = scmp.eq.s32.totalorder %s120, 1
      %p1020 = scmp.ne.s32.totalorder %s1015, %s1017
      %p1021 = scmp.eq.s32.totalorder %s120, 0
      %p1022 = por %p1020, %p1021
      %p1023 = scmp.ne.s32.totalorder %s1015, %s1017
      %p1024 = scmp.eq.s32.totalorder %s125, 1
      %p1025 = por %p1023, %p1024
      %p1026 = scmp.ne.s32.totalorder %s1017, %s1018
      %p1027 = scmp.eq.s32.totalorder %s125, 0
      %p1028 = por %p1026, %p1027
      %p1029 = scmp.ne.s32.totalorder %s1017, %s1018
      %p1030 = scmp.eq.s32.totalorder %s126, 1
      %p1031 = por %p1029, %p1030
      %p1033 = scmp.ne.s32.totalorder %s1018, %s1032
      %p1034 = scmp.eq.s32.totalorder %s126, 0
      %p1035 = por %p1033, %p1034
      %s1037 = sadd.s32 %s1036, 1
      %p1040 = scmp.eq.s32.totalorder %s120, 1
      %p1041 = scmp.ne.s32.totalorder %s1036, %s1038
      %p1042 = scmp.eq.s32.totalorder %s120, 0
      %p1043 = por %p1041, %p1042
      %p1044 = scmp.ne.s32.totalorder %s1036, %s1038
      %p1045 = scmp.eq.s32.totalorder %s125, 1
      %p1046 = por %p1044, %p1045
      %p1047 = scmp.ne.s32.totalorder %s1038, %s1039
      %p1048 = scmp.eq.s32.totalorder %s125, 0
      %p1049 = por %p1047, %p1048
      %p1050 = scmp.ne.s32.totalorder %s1038, %s1039
      %p1051 = scmp.eq.s32.totalorder %s126, 1
      %p1052 = por %p1050, %p1051
      %p1054 = scmp.ne.s32.totalorder %s1039, %s1053
      %p1055 = scmp.eq.s32.totalorder %s126, 0
      %p1056 = por %p1054, %p1055
      %s1058 = sadd.s32 %s1057, 1
      %p1061 = scmp.eq.s32.totalorder %s120, 1
      %p1062 = scmp.ne.s32.totalorder %s1057, %s1059
      %p1063 = scmp.eq.s32.totalorder %s120, 0
      %p1064 = por %p1062, %p1063
      %p1065 = scmp.ne.s32.totalorder %s1057, %s1059
      %p1066 = scmp.eq.s32.totalorder %s125, 1
      %p1067 = por %p1065, %p1066
      %p1068 = scmp.ne.s32.totalorder %s1059, %s1060
      %p1069 = scmp.eq.s32.totalorder %s125, 0
      %p1070 = por %p1068, %p1069
      %p1071 = scmp.ne.s32.totalorder %s1059, %s1060
      %p1072 = scmp.eq.s32.totalorder %s126, 1
      %p1073 = por %p1071, %p1072
      %p1075 = scmp.ne.s32.totalorder %s1060, %s1074
      %p1076 = scmp.eq.s32.totalorder %s126, 0
      %p1077 = por %p1075, %p1076
      %s1079 = sadd.s32 %s1078, 1
      %p1082 = scmp.eq.s32.totalorder %s120, 1
      %p1083 = scmp.ne.s32.totalorder %s1078, %s1080
      %p1084 = scmp.eq.s32.totalorder %s120, 0
      %p1085 = por %p1083, %p1084
      %p1086 = scmp.ne.s32.totalorder %s1078, %s1080
      %p1087 = scmp.eq.s32.totalorder %s125, 1
      %p1088 = por %p1086, %p1087
      %p1089 = scmp.ne.s32.totalorder %s1080, %s1081
      %p1090 = scmp.eq.s32.totalorder %s125, 0
      %p1091 = por %p1089, %p1090
      %p1092 = scmp.ne.s32.totalorder %s1080, %s1081
      %p1093 = scmp.eq.s32.totalorder %s126, 1
      %p1094 = por %p1092, %p1093
      %p1096 = scmp.ne.s32.totalorder %s1081, %s1095
      %p1097 = scmp.eq.s32.totalorder %s126, 0
      %p1098 = por %p1096, %p1097
      %s1100 = sadd.s32 %s1099, 1
      %p1103 = scmp.eq.s32.totalorder %s120, 1
      %p1104 = scmp.ne.s32.totalorder %s1099, %s1101
      %p1105 = scmp.eq.s32.totalorder %s120, 0
      %p1106 = por %p1104, %p1105
      %p1107 = scmp.ne.s32.totalorder %s1099, %s1101
      %p1108 = scmp.eq.s32.totalorder %s125, 1
      %p1109 = por %p1107, %p1108
      %p1110 = scmp.ne.s32.totalorder %s1101, %s1102
      %p1111 = scmp.eq.s32.totalorder %s125, 0
      %p1112 = por %p1110, %p1111
      %p1113 = scmp.ne.s32.totalorder %s1101, %s1102
      %p1114 = scmp.eq.s32.totalorder %s126, 1
      %p1115 = por %p1113, %p1114
      %p1117 = scmp.ne.s32.totalorder %s1102, %s1116
      %p1118 = scmp.eq.s32.totalorder %s126, 0
      %p1119 = por %p1117, %p1118
      %s1121 = sadd.s32 %s1120, 1
      %p1124 = scmp.eq.s32.totalorder %s120, 1
      %p1125 = scmp.ne.s32.totalorder %s1120, %s1122
      %p1126 = scmp.eq.s32.totalorder %s120, 0
      %p1127 = por %p1125, %p1126
      %p1128 = scmp.ne.s32.totalorder %s1120, %s1122
      %p1129 = scmp.eq.s32.totalorder %s125, 1
      %p1130 = por %p1128, %p1129
      %p1131 = scmp.ne.s32.totalorder %s1122, %s1123
      %p1132 = scmp.eq.s32.totalorder %s125, 0
      %p1133 = por %p1131, %p1132
      %p1134 = scmp.ne.s32.totalorder %s1122, %s1123
      %p1135 = scmp.eq.s32.totalorder %s126, 1
      %p1136 = por %p1134, %p1135
      %p1138 = scmp.ne.s32.totalorder %s1123, %s1137
      %p1139 = scmp.eq.s32.totalorder %s126, 0
      %p1140 = por %p1138, %p1139
      %s1142 = sadd.s32 %s1141, 1
      %p1145 = scmp.eq.s32.totalorder %s120, 1
      %p1146 = scmp.ne.s32.totalorder %s1141, %s1143
      %p1147 = scmp.eq.s32.totalorder %s120, 0
      %p1148 = por %p1146, %p1147
      %p1149 = scmp.ne.s32.totalorder %s1141, %s1143
      %p1150 = scmp.eq.s32.totalorder %s125, 1
      %p1151 = por %p1149, %p1150
      %p1152 = scmp.ne.s32.totalorder %s1143, %s1144
      %p1153 = scmp.eq.s32.totalorder %s125, 0
      %p1154 = por %p1152, %p1153
      %p1155 = scmp.ne.s32.totalorder %s1143, %s1144
      %p1156 = scmp.eq.s32.totalorder %s126, 1
      %p1157 = por %p1155, %p1156
      %p1159 = scmp.ne.s32.totalorder %s1144, %s1158
      %p1160 = scmp.eq.s32.totalorder %s126, 0
      %p1161 = por %p1159, %p1160
      %s1163 = sadd.s32 %s1162, 1
      %p1166 = scmp.eq.s32.totalorder %s120, 1
      %p1167 = scmp.ne.s32.totalorder %s1162, %s1164
      %p1168 = scmp.eq.s32.totalorder %s120, 0
      %p1169 = por %p1167, %p1168
      %p1170 = scmp.ne.s32.totalorder %s1162, %s1164
      %p1171 = scmp.eq.s32.totalorder %s125, 1
      %p1172 = por %p1170, %p1171
      %p1173 = scmp.ne.s32.totalorder %s1164, %s1165
      %p1174 = scmp.eq.s32.totalorder %s125, 0
      %p1175 = por %p1173, %p1174
      %p1176 = scmp.ne.s32.totalorder %s1164, %s1165
      %p1177 = scmp.eq.s32.totalorder %s126, 1
      %p1178 = por %p1176, %p1177
      %p1180 = scmp.ne.s32.totalorder %s1165, %s1179
      %p1181 = scmp.eq.s32.totalorder %s126, 0
      %p1182 = por %p1180, %p1181
      %s1184 = sadd.s32 %s1183, 1
      %p1187 = scmp.eq.s32.totalorder %s120, 1
      %p1188 = scmp.ne.s32.totalorder %s1183, %s1185
      %p1189 = scmp.eq.s32.totalorder %s120, 0
      %p1190 = por %p1188, %p1189
      %p1191 = scmp.ne.s32.totalorder %s1183, %s1185
      %p1192 = scmp.eq.s32.totalorder %s125, 1
      %p1193 = por %p1191, %p1192
      %p1194 = scmp.ne.s32.totalorder %s1185, %s1186
      %p1195 = scmp.eq.s32.totalorder %s125, 0
      %p1196 = por %p1194, %p1195
      %p1197 = scmp.ne.s32.totalorder %s1185, %s1186
      %p1198 = scmp.eq.s32.totalorder %s126, 1
      %p1199 = por %p1197, %p1198
      %p1201 = scmp.ne.s32.totalorder %s1186, %s1200
      %p1202 = scmp.eq.s32.totalorder %s126, 0
      %p1203 = por %p1201, %p1202
      %s1205 = sadd.s32 %s1204, 1
      %p1208 = scmp.eq.s32.totalorder %s120, 1
      %p1209 = scmp.ne.s32.totalorder %s1204, %s1206
      %p1210 = scmp.eq.s32.totalorder %s120, 0
      %p1211 = por %p1209, %p1210
      %p1212 = scmp.ne.s32.totalorder %s1204, %s1206
      %p1213 = scmp.eq.s32.totalorder %s125, 1
      %p1214 = por %p1212, %p1213
      %p1215 = scmp.ne.s32.totalorder %s1206, %s1207
      %p1216 = scmp.eq.s32.totalorder %s125, 0
      %p1217 = por %p1215, %p1216
      %p1218 = scmp.ne.s32.totalorder %s1206, %s1207
      %p1219 = scmp.eq.s32.totalorder %s126, 1
      %p1220 = por %p1218, %p1219
      %p1222 = scmp.ne.s32.totalorder %s1207, %s1221
      %p1223 = scmp.eq.s32.totalorder %s126, 0
      %p1224 = por %p1222, %p1223
      %s1225 = ssub.s32 %s120, %s127
      %p1226 = scmp.eq.s32.totalorder %s1225, 0
      %s1228 = sadd.s32 %s1227, 1
      %s1229 = scalar_select %p1226, %s1227, %s1228
      %p1232 = pneg %p1226
      %p1233 = scmp.eq.s32.totalorder %s120, 1
      %p1234 = por %p1232, %p1233
      %p1235 = scmp.ne.s32.totalorder %s1227, %s1230
      %p1236 = scmp.eq.s32.totalorder %s120, 0
      %p1237 = por %p1235, %p1236
      %p1238 = scmp.ne.s32.totalorder %s1227, %s1230
      %p1239 = scmp.eq.s32.totalorder %s125, 1
      %p1240 = por %p1238, %p1239
      %p1241 = scmp.ne.s32.totalorder %s1230, %s1231
      %p1242 = scmp.eq.s32.totalorder %s125, 0
      %p1243 = por %p1241, %p1242
      %p1244 = scmp.ne.s32.totalorder %s1230, %s1231
      %p1245 = scmp.eq.s32.totalorder %s126, 1
      %p1246 = por %p1244, %p1245
      %p1248 = scmp.ne.s32.totalorder %s1231, %s1247
      %p1249 = scmp.eq.s32.totalorder %s126, 0
      %p1250 = por %p1248, %p1249
      %p1251 = scmp.le.s32.totalorder 1, %s120
      %p1252 = scmp.lt.s32.totalorder %s120, 3
      %p1253 = pnand %p1251, %p1252
      %p1254 = pneg %p1253
      // Predicated region
      $region9: #{_lambda_.1} parent=5 // pred_check
        _
      $region10: #{_lambda_.1} parent=5 // pred_check_branch
        %1256 = sbr.rel (%p1253) target = $region12
      $region11: #{_lambda_.1} parent=5 // pred_region
        %s1257 = ssub.s32 %s120, 1
        // Predicated region
        $region13: #{_lambda_.1} parent=11 // pred_check
          %p1258 = pneg %p167
        $region14: #{_lambda_.1} parent=11 // pred_check_branch
          %1260 = sbr.rel (%p1258) target = $region16
        $region15: #{_lambda_.1} parent=11 // pred_region
          _
        $region16: #{_lambda_.1} parent=11 // pred_fallthru
          _
        // Predicated region
        $region17: #{_lambda_.1} parent=11 // pred_check
          %p1261 = pneg %p188
        $region18: #{_lambda_.1} parent=11 // pred_check_branch
          %1263 = sbr.rel (%p1261) target = $region20
        $region19: #{_lambda_.1} parent=11 // pred_region
          _
        $region20: #{_lambda_.1} parent=11 // pred_fallthru
          _
        // Predicated region
        $region21: #{_lambda_.1} parent=11 // pred_check
          %p1264 = pneg %p209
        $region22: #{_lambda_.1} parent=11 // pred_check_branch
          %1266 = sbr.rel (%p1264) target = $region24
        $region23: #{_lambda_.1} parent=11 // pred_region
          _
        $region24: #{_lambda_.1} parent=11 // pred_fallthru
          _
        // Predicated region
        $region25: #{_lambda_.1} parent=11 // pred_check
          %p1267 = pneg %p230
        $region26: #{_lambda_.1} parent=11 // pred_check_branch
          %1269 = sbr.rel (%p1267) target = $region28
        $region27: #{_lambda_.1} parent=11 // pred_region
          _
        $region28: #{_lambda_.1} parent=11 // pred_fallthru
          _
        // Predicated region
        $region29: #{_lambda_.1} parent=11 // pred_check
          %p1270 = pneg %p251
        $region30: #{_lambda_.1} parent=11 // pred_check_branch
          %1272 = sbr.rel (%p1270) target = $region32
        $region31: #{_lambda_.1} parent=11 // pred_region
          _
        $region32: #{_lambda_.1} parent=11 // pred_fallthru
          _
        // Predicated region
        $region33: #{_lambda_.1} parent=11 // pred_check
          %p1273 = pneg %p272
        $region34: #{_lambda_.1} parent=11 // pred_check_branch
          %1275 = sbr.rel (%p1273) target = $region36
        $region35: #{_lambda_.1} parent=11 // pred_region
          _
        $region36: #{_lambda_.1} parent=11 // pred_fallthru
          _
        // Predicated region
        $region37: #{_lambda_.1} parent=11 // pred_check
          %p1276 = pneg %p293
        $region38: #{_lambda_.1} parent=11 // pred_check_branch
          %1278 = sbr.rel (%p1276) target = $region40
        $region39: #{_lambda_.1} parent=11 // pred_region
          _
        $region40: #{_lambda_.1} parent=11 // pred_fallthru
          _
        // Predicated region
        $region41: #{_lambda_.1} parent=11 // pred_check
          %p1279 = pneg %p314
        $region42: #{_lambda_.1} parent=11 // pred_check_branch
          %1281 = sbr.rel (%p1279) target = $region44
        $region43: #{_lambda_.1} parent=11 // pred_region
          _
        $region44: #{_lambda_.1} parent=11 // pred_fallthru
          _
        // Predicated region
        $region45: #{_lambda_.1} parent=11 // pred_check
          %p1282 = pneg %p335
        $region46: #{_lambda_.1} parent=11 // pred_check_branch
          %1284 = sbr.rel (%p1282) target = $region48
        $region47: #{_lambda_.1} parent=11 // pred_region
          _
        $region48: #{_lambda_.1} parent=11 // pred_fallthru
          _
        // Predicated region
        $region49: #{_lambda_.1} parent=11 // pred_check
          %p1285 = pneg %p356
        $region50: #{_lambda_.1} parent=11 // pred_check_branch
          %1287 = sbr.rel (%p1285) target = $region52
        $region51: #{_lambda_.1} parent=11 // pred_region
          _
        $region52: #{_lambda_.1} parent=11 // pred_fallthru
          _
        // Predicated region
        $region53: #{_lambda_.1} parent=11 // pred_check
          %p1288 = pneg %p377
        $region54: #{_lambda_.1} parent=11 // pred_check_branch
          %1290 = sbr.rel (%p1288) target = $region56
        $region55: #{_lambda_.1} parent=11 // pred_region
          _
        $region56: #{_lambda_.1} parent=11 // pred_fallthru
          _
        // Predicated region
        $region57: #{_lambda_.1} parent=11 // pred_check
          %p1291 = pneg %p398
        $region58: #{_lambda_.1} parent=11 // pred_check_branch
          %1293 = sbr.rel (%p1291) target = $region60
        $region59: #{_lambda_.1} parent=11 // pred_region
          _
        $region60: #{_lambda_.1} parent=11 // pred_fallthru
          _
        // Predicated region
        $region61: #{_lambda_.1} parent=11 // pred_check
          %p1294 = pneg %p419
        $region62: #{_lambda_.1} parent=11 // pred_check_branch
          %1296 = sbr.rel (%p1294) target = $region64
        $region63: #{_lambda_.1} parent=11 // pred_region
          _
        $region64: #{_lambda_.1} parent=11 // pred_fallthru
          _
        // Predicated region
        $region65: #{_lambda_.1} parent=11 // pred_check
          %p1297 = pneg %p440
        $region66: #{_lambda_.1} parent=11 // pred_check_branch
          %1299 = sbr.rel (%p1297) target = $region68
        $region67: #{_lambda_.1} parent=11 // pred_region
          _
        $region68: #{_lambda_.1} parent=11 // pred_fallthru
          _
        // Predicated region
        $region69: #{_lambda_.1} parent=11 // pred_check
          %p1300 = pneg %p461
        $region70: #{_lambda_.1} parent=11 // pred_check_branch
          %1302 = sbr.rel (%p1300) target = $region72
        $region71: #{_lambda_.1} parent=11 // pred_region
          _
        $region72: #{_lambda_.1} parent=11 // pred_fallthru
          _
        // Predicated region
        $region73: #{_lambda_.1} parent=11 // pred_check
          %p1303 = pneg %p482
        $region74: #{_lambda_.1} parent=11 // pred_check_branch
          %1305 = sbr.rel (%p1303) target = $region76
        $region75: #{_lambda_.1} parent=11 // pred_region
          _
        $region76: #{_lambda_.1} parent=11 // pred_fallthru
          _
        // Predicated region
        $region77: #{_lambda_.1} parent=11 // pred_check
          %p1306 = pneg %p503
        $region78: #{_lambda_.1} parent=11 // pred_check_branch
          %1308 = sbr.rel (%p1306) target = $region80
        $region79: #{_lambda_.1} parent=11 // pred_region
          _
        $region80: #{_lambda_.1} parent=11 // pred_fallthru
          _
        // Predicated region
        $region81: #{_lambda_.1} parent=11 // pred_check
          %p1309 = pneg %p524
        $region82: #{_lambda_.1} parent=11 // pred_check_branch
          %1311 = sbr.rel (%p1309) target = $region84
        $region83: #{_lambda_.1} parent=11 // pred_region
          _
        $region84: #{_lambda_.1} parent=11 // pred_fallthru
          _
        // Predicated region
        $region85: #{_lambda_.1} parent=11 // pred_check
          %p1312 = pneg %p545
        $region86: #{_lambda_.1} parent=11 // pred_check_branch
          %1314 = sbr.rel (%p1312) target = $region88
        $region87: #{_lambda_.1} parent=11 // pred_region
          _
        $region88: #{_lambda_.1} parent=11 // pred_fallthru
          _
        // Predicated region
        $region89: #{_lambda_.1} parent=11 // pred_check
          %p1315 = pneg %p566
        $region90: #{_lambda_.1} parent=11 // pred_check_branch
          %1317 = sbr.rel (%p1315) target = $region92
        $region91: #{_lambda_.1} parent=11 // pred_region
          _
        $region92: #{_lambda_.1} parent=11 // pred_fallthru
          _
        // Predicated region
        $region93: #{_lambda_.1} parent=11 // pred_check
          %p1318 = pneg %p587
        $region94: #{_lambda_.1} parent=11 // pred_check_branch
          %1320 = sbr.rel (%p1318) target = $region96
        $region95: #{_lambda_.1} parent=11 // pred_region
          _
        $region96: #{_lambda_.1} parent=11 // pred_fallthru
          _
        // Predicated region
        $region97: #{_lambda_.1} parent=11 // pred_check
          %p1321 = pneg %p608
        $region98: #{_lambda_.1} parent=11 // pred_check_branch
          %1323 = sbr.rel (%p1321) target = $region100
        $region99: #{_lambda_.1} parent=11 // pred_region
          _
        $region100: #{_lambda_.1} parent=11 // pred_fallthru
          _
        // Predicated region
        $region101: #{_lambda_.1} parent=11 // pred_check
          %p1324 = pneg %p629
        $region102: #{_lambda_.1} parent=11 // pred_check_branch
          %1326 = sbr.rel (%p1324) target = $region104
        $region103: #{_lambda_.1} parent=11 // pred_region
          %s1328 = ssub.s32 16, 16
          %1329 = vsyncadd [#allocation3], %s1328
          %s1331 = sshll.u32 [#allocation2], 4
          %s1332 = int_to_ptr.vmem [resolvable:$true] %s1331
          %1334 = dma.hbm_to_vmem [thread:$0]  %s47, 16, %s1332, [#allocation3]
        $region104: #{_lambda_.1} parent=11 // pred_fallthru
          _
        // Predicated region
        $region105: #{_lambda_.1} parent=11 // pred_check
          %p1335 = pneg %p650
        $region106: #{_lambda_.1} parent=11 // pred_check_branch
          %1337 = sbr.rel (%p1335) target = $region108
        $region107: #{_lambda_.1} parent=11 // pred_region
          _
        $region108: #{_lambda_.1} parent=11 // pred_fallthru
          _
        // Predicated region
        $region109: #{_lambda_.1} parent=11 // pred_check
          %p1338 = pneg %p671
        $region110: #{_lambda_.1} parent=11 // pred_check_branch
          %1340 = sbr.rel (%p1338) target = $region112
        $region111: #{_lambda_.1} parent=11 // pred_region
          %s1342 = ssub.s32 16, 16
          %1343 = vsyncadd [#allocation6], %s1342
          %s1345 = sshll.u32 [#allocation5], 4
          %s1346 = int_to_ptr.vmem [resolvable:$true] %s1345
          %1348 = dma.hbm_to_vmem [thread:$0]  %s51, 16, %s1346, [#allocation6]
        $region112: #{_lambda_.1} parent=11 // pred_fallthru
          _
        // Predicated region
        $region113: #{_lambda_.1} parent=11 // pred_check
          %p1349 = pneg %p692
        $region114: #{_lambda_.1} parent=11 // pred_check_branch
          %1351 = sbr.rel (%p1349) target = $region116
        $region115: #{_lambda_.1} parent=11 // pred_region
          _
        $region116: #{_lambda_.1} parent=11 // pred_fallthru
          _
        // Predicated region
        $region117: #{_lambda_.1} parent=11 // pred_check
          %p1352 = pneg %p713
        $region118: #{_lambda_.1} parent=11 // pred_check_branch
          %1354 = sbr.rel (%p1352) target = $region120
        $region119: #{_lambda_.1} parent=11 // pred_region
          %s1356 = ssub.s32 16, 16
          %1357 = vsyncadd [#allocation6], %s1356
          %s1359 = sshll.u32 [#allocation7], 4
          %s1360 = int_to_ptr.vmem [resolvable:$true] %s1359
          %1362 = dma.hbm_to_vmem [thread:$0]  %s55, 16, %s1360, [#allocation6]
        $region120: #{_lambda_.1} parent=11 // pred_fallthru
          _
        // Predicated region
        $region121: #{_lambda_.1} parent=11 // pred_check
          %p1363 = pneg %p734
        $region122: #{_lambda_.1} parent=11 // pred_check_branch
          %1365 = sbr.rel (%p1363) target = $region124
        $region123: #{_lambda_.1} parent=11 // pred_region
          _
        $region124: #{_lambda_.1} parent=11 // pred_fallthru
          _
        // Predicated region
        $region125: #{_lambda_.1} parent=11 // pred_check
          %p1366 = pneg %p755
        $region126: #{_lambda_.1} parent=11 // pred_check_branch
          %1368 = sbr.rel (%p1366) target = $region128
        $region127: #{_lambda_.1} parent=11 // pred_region
          _
        $region128: #{_lambda_.1} parent=11 // pred_fallthru
          _
        // Predicated region
        $region129: #{_lambda_.1} parent=11 // pred_check
          %p1369 = pneg %p776
        $region130: #{_lambda_.1} parent=11 // pred_check_branch
          %1371 = sbr.rel (%p1369) target = $region132
        $region131: #{_lambda_.1} parent=11 // pred_region
          %s1373 = ssub.s32 16, 16
          %1374 = vsyncadd [#allocation9], %s1373
          %s1376 = sshll.u32 [#allocation8], 4
          %s1377 = int_to_ptr.vmem [resolvable:$true] %s1376
          %1379 = dma.hbm_to_vmem [thread:$0]  %s61, 16, %s1377, [#allocation9]
        $region132: #{_lambda_.1} parent=11 // pred_fallthru
          _
        // Predicated region
        $region133: #{_lambda_.1} parent=11 // pred_check
          %p1380 = pneg %p797
        $region134: #{_lambda_.1} parent=11 // pred_check_branch
          %1382 = sbr.rel (%p1380) target = $region136
        $region135: #{_lambda_.1} parent=11 // pred_region
          _
        $region136: #{_lambda_.1} parent=11 // pred_fallthru
          _
        // Predicated region
        $region137: #{_lambda_.1} parent=11 // pred_check
          %p1383 = pneg %p818
        $region138: #{_lambda_.1} parent=11 // pred_check_branch
          %1385 = sbr.rel (%p1383) target = $region140
        $region139: #{_lambda_.1} parent=11 // pred_region
          %s1387 = ssub.s32 16, 16
          %1388 = vsyncadd [#allocation9], %s1387
          %s1390 = sshll.u32 [#allocation10], 4
          %s1391 = int_to_ptr.vmem [resolvable:$true] %s1390
          %1393 = dma.hbm_to_vmem [thread:$0]  %s65, 16, %s1391, [#allocation9]
        $region140: #{_lambda_.1} parent=11 // pred_fallthru
          _
        // Predicated region
        $region141: #{_lambda_.1} parent=11 // pred_check
          %p1394 = pneg %p839
        $region142: #{_lambda_.1} parent=11 // pred_check_branch
          %1396 = sbr.rel (%p1394) target = $region144
        $region143: #{_lambda_.1} parent=11 // pred_region
          _
        $region144: #{_lambda_.1} parent=11 // pred_fallthru
          _
        // Predicated region
        $region145: #{_lambda_.1} parent=11 // pred_check
          %p1397 = pneg %p860
        $region146: #{_lambda_.1} parent=11 // pred_check_branch
          %1399 = sbr.rel (%p1397) target = $region148
        $region147: #{_lambda_.1} parent=11 // pred_region
          _
        $region148: #{_lambda_.1} parent=11 // pred_fallthru
          _
        // Predicated region
        $region149: #{_lambda_.1} parent=11 // pred_check
          %p1400 = pneg %p881
        $region150: #{_lambda_.1} parent=11 // pred_check_branch
          %1402 = sbr.rel (%p1400) target = $region152
        $region151: #{_lambda_.1} parent=11 // pred_region
          %s1404 = ssub.s32 16, 16
          %1405 = vsyncadd [#allocation12], %s1404
          %s1407 = sshll.u32 [#allocation11], 4
          %s1408 = int_to_ptr.vmem [resolvable:$true] %s1407
          %1410 = dma.hbm_to_vmem [thread:$0]  %s71, 16, %s1408, [#allocation12]
        $region152: #{_lambda_.1} parent=11 // pred_fallthru
          _
        // Predicated region
        $region153: #{_lambda_.1} parent=11 // pred_check
          %p1411 = pneg %p902
        $region154: #{_lambda_.1} parent=11 // pred_check_branch
          %1413 = sbr.rel (%p1411) target = $region156
        $region155: #{_lambda_.1} parent=11 // pred_region
          _
        $region156: #{_lambda_.1} parent=11 // pred_fallthru
          _
        // Predicated region
        $region157: #{_lambda_.1} parent=11 // pred_check
          %p1414 = pneg %p923
        $region158: #{_lambda_.1} parent=11 // pred_check_branch
          %1416 = sbr.rel (%p1414) target = $region160
        $region159: #{_lambda_.1} parent=11 // pred_region
          _
        $region160: #{_lambda_.1} parent=11 // pred_fallthru
          _
        // Predicated region
        $region161: #{_lambda_.1} parent=11 // pred_check
          %p1417 = pneg %p944
        $region162: #{_lambda_.1} parent=11 // pred_check_branch
          %1419 = sbr.rel (%p1417) target = $region164
        $region163: #{_lambda_.1} parent=11 // pred_region
          %s1421 = ssub.s32 16, 16
          %1422 = vsyncadd [#allocation12], %s1421
          %s1424 = sshll.u32 [#allocation13], 4
          %s1425 = int_to_ptr.vmem [resolvable:$true] %s1424
          %1427 = dma.hbm_to_vmem [thread:$0]  %s77, 16, %s1425, [#allocation12]
        $region164: #{_lambda_.1} parent=11 // pred_fallthru
          _
        // Predicated region
        $region165: #{_lambda_.1} parent=11 // pred_check
          %p1428 = pneg %p965
        $region166: #{_lambda_.1} parent=11 // pred_check_branch
          %1430 = sbr.rel (%p1428) target = $region168
        $region167: #{_lambda_.1} parent=11 // pred_region
          _
        $region168: #{_lambda_.1} parent=11 // pred_fallthru
          _
        // Predicated region
        $region169: #{_lambda_.1} parent=11 // pred_check
          %p1431 = pneg %p986
        $region170: #{_lambda_.1} parent=11 // pred_check_branch
          %1433 = sbr.rel (%p1431) target = $region172
        $region171: #{_lambda_.1} parent=11 // pred_region
          %s1435 = ssub.s32 16, 16
          %1436 = vsyncadd [#allocation15], %s1435
          %s1438 = sshll.u32 [#allocation14], 4
          %s1439 = int_to_ptr.vmem [resolvable:$true] %s1438
          %1441 = dma.hbm_to_vmem [thread:$0]  %s81, 16, %s1439, [#allocation15]
        $region172: #{_lambda_.1} parent=11 // pred_fallthru
          _
        // Predicated region
        $region173: #{_lambda_.1} parent=11 // pred_check
          %p1442 = pneg %p1007
        $region174: #{_lambda_.1} parent=11 // pred_check_branch
          %1444 = sbr.rel (%p1442) target = $region176
        $region175: #{_lambda_.1} parent=11 // pred_region
          _
        $region176: #{_lambda_.1} parent=11 // pred_fallthru
          _
        // Predicated region
        $region177: #{_lambda_.1} parent=11 // pred_check
          %p1445 = pneg %p1028
        $region178: #{_lambda_.1} parent=11 // pred_check_branch
          %1447 = sbr.rel (%p1445) target = $region180
        $region179: #{_lambda_.1} parent=11 // pred_region
          %s1449 = ssub.s32 16, 16
          %1450 = vsyncadd [#allocation15], %s1449
          %s1452 = sshll.u32 [#allocation16], 4
          %s1453 = int_to_ptr.vmem [resolvable:$true] %s1452
          %1455 = dma.hbm_to_vmem [thread:$0]  %s85, 16, %s1453, [#allocation15]
        $region180: #{_lambda_.1} parent=11 // pred_fallthru
          _
        // Predicated region
        $region181: #{_lambda_.1} parent=11 // pred_check
          %p1456 = pneg %p1049
        $region182: #{_lambda_.1} parent=11 // pred_check_branch
          %1458 = sbr.rel (%p1456) target = $region184
        $region183: #{_lambda_.1} parent=11 // pred_region
          _
        $region184: #{_lambda_.1} parent=11 // pred_fallthru
          _
        // Predicated region
        $region185: #{_lambda_.1} parent=11 // pred_check
          %p1459 = pneg %p1070
        $region186: #{_lambda_.1} parent=11 // pred_check_branch
          %1461 = sbr.rel (%p1459) target = $region188
        $region187: #{_lambda_.1} parent=11 // pred_region
          %s1463 = ssub.s32 16, 16
          %1464 = vsyncadd [#allocation18], %s1463
          %s1466 = sshll.u32 [#allocation17], 4
          %s1467 = int_to_ptr.vmem [resolvable:$true] %s1466
          %1469 = dma.hbm_to_vmem [thread:$0]  %s89, 16, %s1467, [#allocation18]
        $region188: #{_lambda_.1} parent=11 // pred_fallthru
          _
        // Predicated region
        $region189: #{_lambda_.1} parent=11 // pred_check
          %p1470 = pneg %p1091
        $region190: #{_lambda_.1} parent=11 // pred_check_branch
          %1472 = sbr.rel (%p1470) target = $region192
        $region191: #{_lambda_.1} parent=11 // pred_region
          _
        $region192: #{_lambda_.1} parent=11 // pred_fallthru
          _
        // Predicated region
        $region193: #{_lambda_.1} parent=11 // pred_check
          %p1473 = pneg %p1112
        $region194: #{_lambda_.1} parent=11 // pred_check_branch
          %1475 = sbr.rel (%p1473) target = $region196
        $region195: #{_lambda_.1} parent=11 // pred_region
          %s1477 = ssub.s32 16, 16
          %1478 = vsyncadd [#allocation18], %s1477
          %s1480 = sshll.u32 [#allocation19], 4
          %s1481 = int_to_ptr.vmem [resolvable:$true] %s1480
          %1483 = dma.hbm_to_vmem [thread:$0]  %s93, 16, %s1481, [#allocation18]
        $region196: #{_lambda_.1} parent=11 // pred_fallthru
          _
        // Predicated region
        $region197: #{_lambda_.1} parent=11 // pred_check
          %p1484 = pneg %p1133
        $region198: #{_lambda_.1} parent=11 // pred_check_branch
          %1486 = sbr.rel (%p1484) target = $region200
        $region199: #{_lambda_.1} parent=11 // pred_region
          _
        $region200: #{_lambda_.1} parent=11 // pred_fallthru
          _
        // Predicated region
        $region201: #{_lambda_.1} parent=11 // pred_check
          %p1487 = pneg %p1154
        $region202: #{_lambda_.1} parent=11 // pred_check_branch
          %1489 = sbr.rel (%p1487) target = $region204
        $region203: #{_lambda_.1} parent=11 // pred_region
          _
        $region204: #{_lambda_.1} parent=11 // pred_fallthru
          _
        // Predicated region
        $region205: #{_lambda_.1} parent=11 // pred_check
          %p1490 = pneg %p1175
        $region206: #{_lambda_.1} parent=11 // pred_check_branch
          %1492 = sbr.rel (%p1490) target = $region208
        $region207: #{_lambda_.1} parent=11 // pred_region
          _
        $region208: #{_lambda_.1} parent=11 // pred_fallthru
          _
        // Predicated region
        $region209: #{_lambda_.1} parent=11 // pred_check
          %p1493 = pneg %p1196
        $region210: #{_lambda_.1} parent=11 // pred_check_branch
          %1495 = sbr.rel (%p1493) target = $region212
        $region211: #{_lambda_.1} parent=11 // pred_region
          _
        $region212: #{_lambda_.1} parent=11 // pred_fallthru
          _
        // Predicated region
        $region213: #{_lambda_.1} parent=11 // pred_check
          %p1496 = pneg %p1217
        $region214: #{_lambda_.1} parent=11 // pred_check_branch
          %1498 = sbr.rel (%p1496) target = $region216
        $region215: #{_lambda_.1} parent=11 // pred_region
          _
        $region216: #{_lambda_.1} parent=11 // pred_fallthru
          _
      $region12: #{_lambda_.1} parent=5 // pred_fallthru
        _
      %p1499 = scmp.lt.s32.totalorder %s120, 2
      // Predicated region
      $region217: #{_lambda_.1} parent=5 // pred_check
        %p1500 = pneg %p1499
      $region218: #{_lambda_.1} parent=5 // pred_check_branch
        %1502 = sbr.rel (%p1500) target = $region220
      $region219: #{_lambda_.1} parent=5 // pred_region
        // Predicated region
        $region221: #{_lambda_.1} parent=219 // pred_check
          %p1503 = pneg %p140
        $region222: #{_lambda_.1} parent=219 // pred_check_branch
          %1505 = sbr.rel (%p1503) target = $region224
        $region223: #{_lambda_.1} parent=219 // pred_region
          %p1506 = scmp.lt.s32.totalorder %s120, 1
          %s1507 = scalar_select %p1506, %s120, 1
          %s1508 = smul.addr %s1507, 32
          %s1509 = smul.addr %s1508, 4
          %s1510 = scalar_lea.vmem %s1, %s1509
        $region224: #{_lambda_.1} parent=219 // pred_fallthru
          _
      $region220: #{_lambda_.1} parent=5 // pred_fallthru
        _
      %p1511 = scmp.le.s32.totalorder 1, %s120
      %p1512 = scmp.lt.s32.totalorder %s120, 3
      %p1513 = pnand %p1511, %p1512
      %p1514 = pneg %p1513
      // Predicated region
      $region225: #{_lambda_.1} parent=5 // pred_check
        _
      $region226: #{_lambda_.1} parent=5 // pred_check_branch
        %1516 = sbr.rel (%p1513) target = $region228
      $region227: #{_lambda_.1} parent=5 // pred_region
        %s1517 = ssub.s32 %s120, 1
        // Predicated region
        $region229: #{_lambda_.1} parent=227 // pred_check
          %p1518 = pneg %p629
        $region230: #{_lambda_.1} parent=227 // pred_check_branch
          %1520 = sbr.rel (%p1518) target = $region232
        $region231: #{_lambda_.1} parent=227 // pred_region
          %1521 = dma.done [#allocation3], 16
        $region232: #{_lambda_.1} parent=227 // pred_fallthru
          _
        // Predicated region
        $region233: #{_lambda_.1} parent=227 // pred_check
          %p1522 = pneg %p671
        $region234: #{_lambda_.1} parent=227 // pred_check_branch
          %1524 = sbr.rel (%p1522) target = $region236
        $region235: #{_lambda_.1} parent=227 // pred_region
          %1525 = dma.done [#allocation6], 16
        $region236: #{_lambda_.1} parent=227 // pred_fallthru
          _
        // Predicated region
        $region237: #{_lambda_.1} parent=227 // pred_check
          %p1526 = pneg %p713
        $region238: #{_lambda_.1} parent=227 // pred_check_branch
          %1528 = sbr.rel (%p1526) target = $region240
        $region239: #{_lambda_.1} parent=227 // pred_region
          %1529 = dma.done [#allocation6], 16
        $region240: #{_lambda_.1} parent=227 // pred_fallthru
          _
        // Predicated region
        $region241: #{_lambda_.1} parent=227 // pred_check
          %p1530 = pneg %p776
        $region242: #{_lambda_.1} parent=227 // pred_check_branch
          %1532 = sbr.rel (%p1530) target = $region244
        $region243: #{_lambda_.1} parent=227 // pred_region
          %1533 = dma.done [#allocation9], 16
        $region244: #{_lambda_.1} parent=227 // pred_fallthru
          _
        // Predicated region
        $region245: #{_lambda_.1} parent=227 // pred_check
          %p1534 = pneg %p818
        $region246: #{_lambda_.1} parent=227 // pred_check_branch
          %1536 = sbr.rel (%p1534) target = $region248
        $region247: #{_lambda_.1} parent=227 // pred_region
          %1537 = dma.done [#allocation9], 16
        $region248: #{_lambda_.1} parent=227 // pred_fallthru
          _
        // Predicated region
        $region249: #{_lambda_.1} parent=227 // pred_check
          %p1538 = pneg %p881
        $region250: #{_lambda_.1} parent=227 // pred_check_branch
          %1540 = sbr.rel (%p1538) target = $region252
        $region251: #{_lambda_.1} parent=227 // pred_region
          %1541 = dma.done [#allocation12], 16
        $region252: #{_lambda_.1} parent=227 // pred_fallthru
          _
        // Predicated region
        $region253: #{_lambda_.1} parent=227 // pred_check
          %p1542 = pneg %p944
        $region254: #{_lambda_.1} parent=227 // pred_check_branch
          %1544 = sbr.rel (%p1542) target = $region256
        $region255: #{_lambda_.1} parent=227 // pred_region
          %1545 = dma.done [#allocation12], 16
        $region256: #{_lambda_.1} parent=227 // pred_fallthru
          _
        // Predicated region
        $region257: #{_lambda_.1} parent=227 // pred_check
          %p1546 = pneg %p986
        $region258: #{_lambda_.1} parent=227 // pred_check_branch
          %1548 = sbr.rel (%p1546) target = $region260
        $region259: #{_lambda_.1} parent=227 // pred_region
          %1549 = dma.done [#allocation15], 16
        $region260: #{_lambda_.1} parent=227 // pred_fallthru
          _
        // Predicated region
        $region261: #{_lambda_.1} parent=227 // pred_check
          %p1550 = pneg %p1028
        $region262: #{_lambda_.1} parent=227 // pred_check_branch
          %1552 = sbr.rel (%p1550) target = $region264
        $region263: #{_lambda_.1} parent=227 // pred_region
          %1553 = dma.done [#allocation15], 16
        $region264: #{_lambda_.1} parent=227 // pred_fallthru
          _
        // Predicated region
        $region265: #{_lambda_.1} parent=227 // pred_check
          %p1554 = pneg %p1070
        $region266: #{_lambda_.1} parent=227 // pred_check_branch
          %1556 = sbr.rel (%p1554) target = $region268
        $region267: #{_lambda_.1} parent=227 // pred_region
          %1557 = dma.done [#allocation18], 16
        $region268: #{_lambda_.1} parent=227 // pred_fallthru
          _
        // Predicated region
        $region269: #{_lambda_.1} parent=227 // pred_check
          %p1558 = pneg %p1112
        $region270: #{_lambda_.1} parent=227 // pred_check_branch
          %1560 = sbr.rel (%p1558) target = $region272
        $region271: #{_lambda_.1} parent=227 // pred_region
          %1561 = dma.done [#allocation18], 16
        $region272: #{_lambda_.1} parent=227 // pred_fallthru
          _
        %p1562 = scmp.lt.s32.totalorder %s125, 1
        %s1563 = scalar_select %p1562, %s125, 1
        %s1564 = smul.addr %s1563, 32
        %s1565 = smul.addr %s1564, 4
        %s1566 = scalar_lea.vmem %s1, %s1565
        %p1567 = pneg %p146
        %p1568 = pneg %p143
        %p1569 = pneg %p167
        %p1570 = pneg %p164
        %p1571 = pneg %p188
        %p1572 = pneg %p185
        %p1573 = pneg %p209
        %p1574 = pneg %p206
        %p1575 = pneg %p230
        %p1576 = pneg %p227
        %p1577 = pneg %p251
        %p1578 = pneg %p248
        %p1579 = pneg %p272
        %p1580 = pneg %p269
        %p1581 = pneg %p293
        %p1582 = pneg %p290
        %p1583 = pneg %p314
        %p1584 = pneg %p311
        %p1585 = pneg %p335
        %p1586 = pneg %p332
        %p1587 = pneg %p356
        %p1588 = pneg %p353
        %p1589 = pneg %p377
        %p1590 = pneg %p374
        %p1591 = pneg %p398
        %p1592 = pneg %p395
        %p1593 = pneg %p419
        %p1594 = pneg %p416
        %p1595 = pneg %p440
        %p1596 = pneg %p437
        %p1597 = pneg %p461
        %p1598 = pneg %p458
        %p1599 = pneg %p482
        %p1600 = pneg %p479
        %p1601 = pneg %p503
        %p1602 = pneg %p500
        %p1603 = pneg %p524
        %p1604 = pneg %p521
        %p1605 = pneg %p545
        %p1606 = pneg %p542
        %p1607 = pneg %p566
        %p1608 = pneg %p563
        %p1609 = pneg %p587
        %p1610 = pneg %p584
        %p1611 = pneg %p608
        %p1612 = pneg %p605
        %p1613 = pneg %p629
        %p1614 = pneg %p626
        %p1615 = pneg %p650
        %p1616 = pneg %p647
        %p1617 = pneg %p671
        %p1618 = pneg %p668
        %p1619 = pneg %p692
        %p1620 = pneg %p689
        %p1621 = pneg %p713
        %p1622 = pneg %p710
        %p1623 = pneg %p734
        %p1624 = pneg %p731
        %p1625 = pneg %p755
        %p1626 = pneg %p752
        %p1627 = pneg %p776
        %p1628 = pneg %p773
        %p1629 = pneg %p797
        %p1630 = pneg %p794
        %p1631 = pneg %p818
        %p1632 = pneg %p815
        %p1633 = pneg %p839
        %p1634 = pneg %p836
        %p1635 = pneg %p860
        %p1636 = pneg %p857
        %p1637 = pneg %p881
        %p1638 = pneg %p878
        %p1639 = pneg %p902
        %p1640 = pneg %p899
        %p1641 = pneg %p923
        %p1642 = pneg %p920
        %p1643 = pneg %p944
        %p1644 = pneg %p941
        %p1645 = pneg %p965
        %p1646 = pneg %p962
        %p1647 = pneg %p986
        %p1648 = pneg %p983
        %p1649 = pneg %p1007
        %p1650 = pneg %p1004
        %p1651 = pneg %p1028
        %p1652 = pneg %p1025
        %p1653 = pneg %p1049
        %p1654 = pneg %p1046
        %p1655 = pneg %p1070
        %p1656 = pneg %p1067
        %p1657 = pneg %p1091
        %p1658 = pneg %p1088
        %p1659 = pneg %p1112
        %p1660 = pneg %p1109
        %p1661 = pneg %p1133
        %p1662 = pneg %p1130
        %p1663 = pneg %p1154
        %p1664 = pneg %p1151
        %p1665 = pneg %p1175
        %p1666 = pneg %p1172
        %p1667 = pneg %p1196
        %p1668 = pneg %p1193
        %p1669 = pneg %p1217
        %p1670 = pneg %p1214
        %p1671 = pneg %p1243
        %p1672 = pneg %p1240
        %s1673 = sand.u32 %s1230, 1
        %s1674 = scalar_lea.sflag [#allocation4], %s1673
        %s1675 = sand.u32 %s1230, 1
        %s1676 = scalar_lea.vmem [#allocation20], %s1675
        %p1677 = scmp.lt.s32.totalorder %s125, 1
        %s1678 = scalar_select %p1677, %s125, 1
        %s1679 = smul.addr %s1678, 32
        %s1680 = smul.addr %s1679, 4
        %s1681 = scalar_lea.vmem %s1, %s1680
        %v1683 = vld [vmem:[%s1681] sm:$0xf]
        %v1684 = vld [vmem:[%s1681 + $0x4] sm:$0xf]
        %v1685 = vld [vmem:[%s1681 + $0x8] sm:$0xf]
        %v1686 = vld [vmem:[%s1681 + $0xc] sm:$0xf]
        %v1687 = vld [vmem:[%s1681 + $0x10] sm:$0xf]
        %v1688 = vld [vmem:[%s1681 + $0x14] sm:$0xf]
        %v1689 = vld [vmem:[%s1681 + $0x18] sm:$0xf]
        %v1690 = vld [vmem:[%s1681 + $0x1c] sm:$0xf]
        %v1691 = vld [vmem:[%s1681 + $0x20] sm:$0xf]
        %v1692 = vld [vmem:[%s1681 + $0x24] sm:$0xf]
        %v1693 = vld [vmem:[%s1681 + $0x28] sm:$0xf]
        %v1694 = vld [vmem:[%s1681 + $0x2c] sm:$0xf]
        %v1695 = vld [vmem:[%s1681 + $0x30] sm:$0xf]
        %v1696 = vld [vmem:[%s1681 + $0x34] sm:$0xf]
        %v1697 = vld [vmem:[%s1681 + $0x38] sm:$0xf]
        %v1698 = vld [vmem:[%s1681 + $0x3c] sm:$0xf]
        %v1699 = vld [vmem:[%s1681 + $0x40] sm:$0xf]
        %v1700 = vld [vmem:[%s1681 + $0x44] sm:$0xf]
        %v1701 = vld [vmem:[%s1681 + $0x48] sm:$0xf]
        %v1702 = vld [vmem:[%s1681 + $0x4c] sm:$0xf]
        %v1703 = vld [vmem:[%s1681 + $0x50] sm:$0xf]
        %v1704 = vld [vmem:[%s1681 + $0x54] sm:$0xf]
        %v1705 = vld [vmem:[%s1681 + $0x58] sm:$0xf]
        %v1706 = vld [vmem:[%s1681 + $0x5c] sm:$0xf]
        %v1707 = vld [vmem:[%s1681 + $0x60] sm:$0xf]
        %v1708 = vld [vmem:[%s1681 + $0x64] sm:$0xf]
        %v1709 = vld [vmem:[%s1681 + $0x68] sm:$0xf]
        %v1710 = vld [vmem:[%s1681 + $0x6c] sm:$0xf]
        %v1711 = vld [vmem:[%s1681 + $0x70] sm:$0xf]
        %v1712 = vld [vmem:[%s1681 + $0x74] sm:$0xf]
        %v1713 = vld [vmem:[%s1681 + $0x78] sm:$0xf]
        %v1714 = vld [vmem:[%s1681 + $0x7c] sm:$0xf]
        %v1715 = vld [vmem:[%s3] sm:$0xf]
        %v1716 = vld [vmem:[%s3 + $0x4] sm:$0xf]
        %v1717 = vld [vmem:[%s3 + $0x8] sm:$0xf]
        %v1718 = vld [vmem:[%s3 + $0xc] sm:$0x3]
        %v1719 = vld [vmem:[%s5] sm:$0x1]
        %v1721 = vlaneseq
        %v1722 = vshrl.u32 %v1721, 7
        %v1723 = vsub.s32 0, %v1722
        %v1724 = vrot.slane %v1719, %v1723
        %v1758 = vunpack.c.l.b16 %v1683
        %v1759 = vunpack.c.l.b16 %v1684
        %v1760 = vunpack.c.l.b16 %v1685
        %v1761 = vunpack.c.l.b16 %v1686
        %v1762 = vunpack.c.l.b16 %v1687
        %v1763 = vunpack.c.l.b16 %v1688
        %v1764 = vunpack.c.l.b16 %v1689
        %v1765 = vunpack.c.l.b16 %v1690
        %v1766 = vunpack.c.l.b16 %v1691
        %v1767 = vunpack.c.l.b16 %v1692
        %v1768 = vunpack.c.l.b16 %v1693
        %v1769 = vunpack.c.l.b16 %v1694
        %v1770 = vunpack.c.l.b16 %v1695
        %v1771 = vunpack.c.l.b16 %v1696
        %v1772 = vunpack.c.l.b16 %v1697
        %v1773 = vunpack.c.l.b16 %v1698
        %v1774 = vunpack.c.l.b16 %v1699
        %v1775 = vunpack.c.l.b16 %v1700
        %v1776 = vunpack.c.l.b16 %v1701
        %v1777 = vunpack.c.l.b16 %v1702
        %v1778 = vunpack.c.l.b16 %v1703
        %v1779 = vunpack.c.l.b16 %v1704
        %v1780 = vunpack.c.l.b16 %v1705
        %v1781 = vunpack.c.l.b16 %v1706
        %v1782 = vunpack.c.l.b16 %v1707
        %v1783 = vunpack.c.l.b16 %v1708
        %v1784 = vunpack.c.l.b16 %v1709
        %v1785 = vunpack.c.l.b16 %v1710
        %v1786 = vunpack.c.l.b16 %v1711
        %v1787 = vunpack.c.l.b16 %v1712
        %v1788 = vunpack.c.l.b16 %v1713
        %v1789 = vunpack.c.l.b16 %v1714
        %v1790 = vpack.c.b16 %v1759, %v1758
        %v1791 = vpack.c.b16 %v1761, %v1760
        %v1792 = vpack.c.b16 %v1763, %v1762
        %v1793 = vpack.c.b16 %v1765, %v1764
        %v1794 = vpack.c.b16 %v1767, %v1766
        %v1795 = vpack.c.b16 %v1769, %v1768
        %v1796 = vpack.c.b16 %v1771, %v1770
        %v1797 = vpack.c.b16 %v1773, %v1772
        %v1798 = vpack.c.b16 %v1775, %v1774
        %v1799 = vpack.c.b16 %v1777, %v1776
        %v1800 = vpack.c.b16 %v1779, %v1778
        %v1801 = vpack.c.b16 %v1781, %v1780
        %v1802 = vpack.c.b16 %v1783, %v1782
        %v1803 = vpack.c.b16 %v1785, %v1784
        %v1804 = vpack.c.b16 %v1787, %v1786
        %v1805 = vpack.c.b16 %v1789, %v1788
        %v1810 = vunpack.c.l.b16 %v1715
        %v1811 = vunpack.c.l.b16 %v1716
        %v1812 = vunpack.c.l.b16 %v1717
        %v1813 = vunpack.c.l.b16 %v1718
        %v1814 = vpack.c.b16 %v1811, %v1810
        %v1815 = vpack.c.b16 %v1813, %v1812
        %vm1817 = vcmask 220160
        %v1819 = vsel %vm1817, %v1790, 0
        %v1822 = vsel %vm1817, %v1791, 0
        %v1825 = vsel %vm1817, %v1792, 0
        %v1828 = vsel %vm1817, %v1793, 0
        %v1831 = vsel %vm1817, %v1794, 0
        %v1834 = vsel %vm1817, %v1795, 0
        %v1837 = vsel %vm1817, %v1796, 0
        %v1840 = vsel %vm1817, %v1797, 0
        %v1843 = vsel %vm1817, %v1798, 0
        %v1846 = vsel %vm1817, %v1799, 0
        %v1849 = vsel %vm1817, %v1800, 0
        %v1852 = vsel %vm1817, %v1801, 0
        %v1855 = vsel %vm1817, %v1802, 0
        %v1858 = vsel %vm1817, %v1803, 0
        %v1861 = vsel %vm1817, %v1804, 0
        %v1864 = vsel %vm1817, %v1805, 0
        %vm1866 = vcmask 1044480
        %vm1867 = vcmask 1045504
        %v1868 = vsel %vm1866, 4294967295, 65535
        %v1869 = vsel %vm1867, %v1868, 0
        %v1871 = vand.u32 %v1815, %v1869
        %1873 = vmatprep.subr.bf16.mxu0 0
        %1874 = vmatpush1.bf16.msra.mxu0 0
        %1875 = vmatprep.subr.bf16.mxu0 0
        %1876 = vmatpush1.bf16.msra.mxu0 0
        %1877 = vmatprep.subr.bf16.mxu0 0
        %1878 = vmatpush1.bf16.msra.mxu0 0
        %1879 = vmatprep.subr.bf16.mxu0 0
        %1880 = vmatpush1.bf16.msra.mxu0 0
        %1881 = vmatprep.subr.bf16.mxu0 0
        %1882 = vmatpush1.bf16.msra.mxu0 0
        %1883 = vmatprep.subr.bf16.mxu0 0
        %1884 = vmatpush1.bf16.msra.mxu0 0
        %1885 = vmatprep.subr.bf16.mxu0 0
        %1886 = vmatpush1.bf16.msra.mxu0 %v1871
        %1887 = vmatprep.subr.bf16.mxu0 0
        %1888 = vmatpush1.bf16.msra.mxu0 %v1814
        %1889 = vmatprep.subr.bf16.mxu0 0
        %1890 = vmatpush2.bf16.msra.mxu0 0
        %1891 = vmatprep.subr.bf16.mxu0 0
        %1892 = vmatpush2.bf16.msra.mxu0 0
        %1893 = vmatprep.subr.bf16.mxu0 0
        %1894 = vmatpush2.bf16.msra.mxu0 0
        %1895 = vmatprep.subr.bf16.mxu0 0
        %1896 = vmatpush2.bf16.msra.mxu0 0
        %1897 = vmatprep.subr.bf16.mxu0 0
        %1898 = vmatpush2.bf16.msra.mxu0 0
        %1899 = vmatprep.subr.bf16.mxu0 0
        %1900 = vmatpush2.bf16.msra.mxu0 0
        %1901 = vmatprep.subr.bf16.mxu0 0
        %1902 = vmatpush2.bf16.msra.mxu0 0
        %1903 = vmatprep.subr.bf16.mxu0 0
        %1904 = vmatpush2.bf16.msra.mxu0 0
        %1905 = vmatprep.mubr.bf16.mxu0 0
        %1906 = vmatmul.mubr.bf16.gmra.mxu0 %v1819
        %v1907 = vpop.f32.mrf.mxu0
        %v1908 = vadd.f32 %v1724, %v1907
        %v1909 = vpop.f32.mrf.mxu0
        %v1910 = vpop.f32.mrf.mxu0
        %v1911 = vadd.f32 %v1724, %v1910
        %v1912 = vpop.f32.mrf.mxu0
        %1913 = vmatprep.mubr.bf16.mxu0 0
        %1914 = vmatmul.mubr.bf16.gmra.mxu0 %v1822
        %v1915 = vpop.f32.mrf.mxu0
        %v1916 = vadd.f32 %v1724, %v1915
        %v1917 = vpop.f32.mrf.mxu0
        %v1918 = vpop.f32.mrf.mxu0
        %v1919 = vadd.f32 %v1724, %v1918
        %v1920 = vpop.f32.mrf.mxu0
        %1921 = vmatprep.mubr.bf16.mxu0 0
        %1922 = vmatmul.mubr.bf16.gmra.mxu0 %v1825
        %v1923 = vpop.f32.mrf.mxu0
        %v1924 = vadd.f32 %v1724, %v1923
        %v1925 = vpop.f32.mrf.mxu0
        %v1926 = vpop.f32.mrf.mxu0
        %v1927 = vadd.f32 %v1724, %v1926
        %v1928 = vpop.f32.mrf.mxu0
        %1929 = vmatprep.mubr.bf16.mxu0 0
        %1930 = vmatmul.mubr.bf16.gmra.mxu0 %v1828
        %v1931 = vpop.f32.mrf.mxu0
        %v1932 = vadd.f32 %v1724, %v1931
        %v1933 = vpop.f32.mrf.mxu0
        %v1934 = vpop.f32.mrf.mxu0
        %v1935 = vadd.f32 %v1724, %v1934
        %v1936 = vpop.f32.mrf.mxu0
        %1937 = vmatprep.mubr.bf16.mxu0 0
        %1938 = vmatmul.mubr.bf16.gmra.mxu0 %v1831
        %v1939 = vpop.f32.mrf.mxu0
        %v1940 = vadd.f32 %v1724, %v1939
        %v1941 = vpop.f32.mrf.mxu0
        %v1942 = vpop.f32.mrf.mxu0
        %v1943 = vadd.f32 %v1724, %v1942
        %v1944 = vpop.f32.mrf.mxu0
        %1945 = vmatprep.mubr.bf16.mxu0 0
        %1946 = vmatmul.mubr.bf16.gmra.mxu0 %v1834
        %v1947 = vpop.f32.mrf.mxu0
        %v1948 = vadd.f32 %v1724, %v1947
        %v1949 = vpop.f32.mrf.mxu0
        %v1950 = vpop.f32.mrf.mxu0
        %v1951 = vadd.f32 %v1724, %v1950
        %v1952 = vpop.f32.mrf.mxu0
        %1953 = vmatprep.mubr.bf16.mxu0 0
        %1954 = vmatmul.mubr.bf16.gmra.mxu0 %v1837
        %v1955 = vpop.f32.mrf.mxu0
        %v1956 = vadd.f32 %v1724, %v1955
        %v1957 = vpop.f32.mrf.mxu0
        %v1958 = vpop.f32.mrf.mxu0
        %v1959 = vadd.f32 %v1724, %v1958
        %v1960 = vpop.f32.mrf.mxu0
        %1961 = vmatprep.mubr.bf16.mxu0 0
        %1962 = vmatmul.mubr.bf16.gmra.mxu0 %v1840
        %v1963 = vpop.f32.mrf.mxu0
        %v1964 = vadd.f32 %v1724, %v1963
        %v1965 = vpop.f32.mrf.mxu0
        %v1966 = vpop.f32.mrf.mxu0
        %v1967 = vadd.f32 %v1724, %v1966
        %v1968 = vpop.f32.mrf.mxu0
        %1969 = vmatprep.mubr.bf16.mxu0 0
        %1970 = vmatmul.mubr.bf16.gmra.mxu0 %v1843
        %v1971 = vpop.f32.mrf.mxu0
        %v1972 = vadd.f32 %v1724, %v1971
        %v1973 = vpop.f32.mrf.mxu0
        %v1974 = vpop.f32.mrf.mxu0
        %v1975 = vadd.f32 %v1724, %v1974
        %v1976 = vpop.f32.mrf.mxu0
        %1977 = vmatprep.mubr.bf16.mxu0 0
        %1978 = vmatmul.mubr.bf16.gmra.mxu0 %v1846
        %v1979 = vpop.f32.mrf.mxu0
        %v1980 = vadd.f32 %v1724, %v1979
        %v1981 = vpop.f32.mrf.mxu0
        %v1982 = vpop.f32.mrf.mxu0
        %v1983 = vadd.f32 %v1724, %v1982
        %v1984 = vpop.f32.mrf.mxu0
        %1985 = vmatprep.mubr.bf16.mxu0 0
        %1986 = vmatmul.mubr.bf16.gmra.mxu0 %v1849
        %v1987 = vpop.f32.mrf.mxu0
        %v1988 = vadd.f32 %v1724, %v1987
        %v1989 = vpop.f32.mrf.mxu0
        %v1990 = vpop.f32.mrf.mxu0
        %v1991 = vadd.f32 %v1724, %v1990
        %v1992 = vpop.f32.mrf.mxu0
        %1993 = vmatprep.mubr.bf16.mxu0 0
        %1994 = vmatmul.mubr.bf16.gmra.mxu0 %v1852
        %v1995 = vpop.f32.mrf.mxu0
        %v1996 = vadd.f32 %v1724, %v1995
        %v1997 = vpop.f32.mrf.mxu0
        %v1998 = vpop.f32.mrf.mxu0
        %v1999 = vadd.f32 %v1724, %v1998
        %v2000 = vpop.f32.mrf.mxu0
        %2001 = vmatprep.mubr.bf16.mxu0 0
        %2002 = vmatmul.mubr.bf16.gmra.mxu0 %v1855
        %v2003 = vpop.f32.mrf.mxu0
        %v2004 = vadd.f32 %v1724, %v2003
        %v2005 = vpop.f32.mrf.mxu0
        %v2006 = vpop.f32.mrf.mxu0
        %v2007 = vadd.f32 %v1724, %v2006
        %v2008 = vpop.f32.mrf.mxu0
        %2009 = vmatprep.mubr.bf16.mxu0 0
        %2010 = vmatmul.mubr.bf16.gmra.mxu0 %v1858
        %v2011 = vpop.f32.mrf.mxu0
        %v2012 = vadd.f32 %v1724, %v2011
        %v2013 = vpop.f32.mrf.mxu0
        %v2014 = vpop.f32.mrf.mxu0
        %v2015 = vadd.f32 %v1724, %v2014
        %v2016 = vpop.f32.mrf.mxu0
        %2017 = vmatprep.mubr.bf16.mxu0 0
        %2018 = vmatmul.mubr.bf16.gmra.mxu0 %v1861
        %v2019 = vpop.f32.mrf.mxu0
        %v2020 = vadd.f32 %v1724, %v2019
        %v2021 = vpop.f32.mrf.mxu0
        %v2022 = vpop.f32.mrf.mxu0
        %v2023 = vadd.f32 %v1724, %v2022
        %v2024 = vpop.f32.mrf.mxu0
        %2025 = vmatprep.mubr.bf16.mxu0 0
        %2026 = vmatmul.mubr.bf16.gmra.mxu0 %v1864
        %v2027 = vpop.f32.mrf.mxu0
        %v2028 = vadd.f32 %v1724, %v2027
        %v2029 = vpop.f32.mrf.mxu0
        %v2030 = vpop.f32.mrf.mxu0
        %v2031 = vadd.f32 %v1724, %v2030
        %v2032 = vpop.f32.mrf.mxu0
        %2033 = vdwg.mxu0
        %v2034 = vmax.f32 %v1908, 0.0
        %v2035 = vmax.f32 %v1911, 0.0
        %v2036 = vmax.f32 %v1916, 0.0
        %v2037 = vmax.f32 %v1919, 0.0
        %v2038 = vmax.f32 %v1924, 0.0
        %v2039 = vmax.f32 %v1927, 0.0
        %v2040 = vmax.f32 %v1932, 0.0
        %v2041 = vmax.f32 %v1935, 0.0
        %v2042 = vmax.f32 %v1940, 0.0
        %v2043 = vmax.f32 %v1943, 0.0
        %v2044 = vmax.f32 %v1948, 0.0
        %v2045 = vmax.f32 %v1951, 0.0
        %v2046 = vmax.f32 %v1956, 0.0
        %v2047 = vmax.f32 %v1959, 0.0
        %v2048 = vmax.f32 %v1964, 0.0
        %v2049 = vmax.f32 %v1967, 0.0
        %v2050 = vmax.f32 %v1972, 0.0
        %v2051 = vmax.f32 %v1975, 0.0
        %v2052 = vmax.f32 %v1980, 0.0
        %v2053 = vmax.f32 %v1983, 0.0
        %v2054 = vmax.f32 %v1988, 0.0
        %v2055 = vmax.f32 %v1991, 0.0
        %v2056 = vmax.f32 %v1996, 0.0
        %v2057 = vmax.f32 %v1999, 0.0
        %v2058 = vmax.f32 %v2004, 0.0
        %v2059 = vmax.f32 %v2007, 0.0
        %v2060 = vmax.f32 %v2012, 0.0
        %v2061 = vmax.f32 %v2015, 0.0
        %v2062 = vmax.f32 %v2020, 0.0
        %v2063 = vmax.f32 %v2023, 0.0
        %v2064 = vmax.f32 %v2028, 0.0
        %v2065 = vmax.f32 %v2031, 0.0
        %v2066 = vpack.c.bf16 %v2035, %v2034
        %v2067 = vpack.c.bf16 %v2037, %v2036
        %v2068 = vpack.c.bf16 %v2039, %v2038
        %v2069 = vpack.c.bf16 %v2041, %v2040
        %v2070 = vpack.c.bf16 %v2043, %v2042
        %v2071 = vpack.c.bf16 %v2045, %v2044
        %v2072 = vpack.c.bf16 %v2047, %v2046
        %v2073 = vpack.c.bf16 %v2049, %v2048
        %v2074 = vpack.c.bf16 %v2051, %v2050
        %v2075 = vpack.c.bf16 %v2053, %v2052
        %v2076 = vpack.c.bf16 %v2055, %v2054
        %v2077 = vpack.c.bf16 %v2057, %v2056
        %v2078 = vpack.c.bf16 %v2059, %v2058
        %v2079 = vpack.c.bf16 %v2061, %v2060
        %v2080 = vpack.c.bf16 %v2063, %v2062
        %v2081 = vpack.c.bf16 %v2065, %v2064
        %v2082 = vld [vmem:[%s7] sm:$0xff]
        %v2083 = vld [vmem:[%s7 + $0x8] sm:$0xff]
        %v2084 = vld [vmem:[%s7 + $0x10] sm:$0xff]
        %v2085 = vld [vmem:[%s7 + $0x18] sm:$0xff]
        %v2086 = vld [vmem:[%s7 + $0x20] sm:$0xff]
        %v2087 = vld [vmem:[%s7 + $0x28] sm:$0xff]
        %v2088 = vld [vmem:[%s7 + $0x30] sm:$0xff]
        %v2089 = vld [vmem:[%s7 + $0x38] sm:$0xff]
        %v2090 = vld [vmem:[%s7 + $0x40] sm:$0xff]
        %v2091 = vld [vmem:[%s7 + $0x48] sm:$0xff]
        %v2092 = vld [vmem:[%s7 + $0x50] sm:$0xff]
        %v2093 = vld [vmem:[%s7 + $0x58] sm:$0xff]
        %v2094 = vld [vmem:[%s7 + $0x60] sm:$0xff]
        %v2095 = vld [vmem:[%s7 + $0x68] sm:$0xff]
        %v2096 = vld [vmem:[%s7 + $0x70] sm:$0xff]
        %v2097 = vld [vmem:[%s7 + $0x78] sm:$0xff]
        %v2098 = vld [vmem:[%s7 + $0x80] sm:$0xff]
        %v2099 = vld [vmem:[%s7 + $0x88] sm:$0xff]
        %v2100 = vld [vmem:[%s7 + $0x90] sm:$0xff]
        %v2101 = vld [vmem:[%s7 + $0x98] sm:$0xff]
        %v2102 = vld [vmem:[%s7 + $0xa0] sm:$0xff]
        %v2103 = vld [vmem:[%s7 + $0xa8] sm:$0xff]
        %v2104 = vld [vmem:[%s7 + $0xb0] sm:$0xff]
        %v2105 = vld [vmem:[%s7 + $0xb8] sm:$0xff]
        %v2106 = vld [vmem:[%s7 + $0xc0] sm:$0xff]
        %v2107 = vld [vmem:[%s7 + $0xc8] sm:$0xff]
        %v2108 = vld [vmem:[%s7 + $0xd0] sm:$0xff]
        %v2109 = vld [vmem:[%s7 + $0xd8] sm:$0xff]
        %v2110 = vld [vmem:[%s7 + $0xe0] sm:$0xff]
        %v2111 = vld [vmem:[%s7 + $0xe8] sm:$0xff]
        %v2112 = vld [vmem:[%s7 + $0xf0] sm:$0xff]
        %v2113 = vld [vmem:[%s7 + $0xf8] sm:$0xff]
        %v2114 = vld [vmem:[%s7 + $0x100] sm:$0xff]
        %v2115 = vld [vmem:[%s7 + $0x108] sm:$0xff]
        %v2116 = vld [vmem:[%s7 + $0x110] sm:$0xff]
        %v2117 = vld [vmem:[%s7 + $0x118] sm:$0xff]
        %v2118 = vld [vmem:[%s7 + $0x120] sm:$0xff]
        %v2119 = vld [vmem:[%s7 + $0x128] sm:$0xff]
        %v2120 = vld [vmem:[%s7 + $0x130] sm:$0xff]
        %v2121 = vld [vmem:[%s7 + $0x138] sm:$0xff]
        %v2122 = vld [vmem:[%s7 + $0x140] sm:$0xff]
        %v2123 = vld [vmem:[%s7 + $0x148] sm:$0xff]
        %v2124 = vld [vmem:[%s7 + $0x150] sm:$0xff]
        %v2125 = vld [vmem:[%s7 + $0x158] sm:$0xff]
        %v2126 = vld [vmem:[%s7 + $0x160] sm:$0xff]
        %v2127 = vld [vmem:[%s7 + $0x168] sm:$0xff]
        %v2128 = vld [vmem:[%s7 + $0x170] sm:$0xff]
        %v2129 = vld [vmem:[%s7 + $0x178] sm:$0xff]
        %v2130 = vld [vmem:[%s7 + $0x180] sm:$0xff]
        %v2131 = vld [vmem:[%s7 + $0x188] sm:$0xff]
        %v2132 = vld [vmem:[%s7 + $0x190] sm:$0xff]
        %v2133 = vld [vmem:[%s7 + $0x198] sm:$0xff]
        %v2134 = vld [vmem:[%s7 + $0x1a0] sm:$0xff]
        %v2135 = vld [vmem:[%s7 + $0x1a8] sm:$0xff]
        %v2136 = vld [vmem:[%s7 + $0x1b0] sm:$0xff]
        %v2137 = vld [vmem:[%s7 + $0x1b8] sm:$0xff]
        %v2138 = vld [vmem:[%s7 + $0x1c0] sm:$0xff]
        %v2139 = vld [vmem:[%s7 + $0x1c8] sm:$0xff]
        %v2140 = vld [vmem:[%s7 + $0x1d0] sm:$0xff]
        %v2141 = vld [vmem:[%s7 + $0x1d8] sm:$0xff]
        %v2142 = vld [vmem:[%s7 + $0x1e0] sm:$0xff]
        %v2143 = vld [vmem:[%s7 + $0x1e8] sm:$0xff]
        %v2144 = vld [vmem:[%s7 + $0x1f0] sm:$0xff]
        %v2145 = vld [vmem:[%s7 + $0x1f8] sm:$0xff]
        %v2146 = vld [vmem:[%s7 + $0x200] sm:$0xff]
        %v2147 = vld [vmem:[%s7 + $0x208] sm:$0xff]
        %v2148 = vld [vmem:[%s7 + $0x210] sm:$0xff]
        %v2149 = vld [vmem:[%s7 + $0x218] sm:$0xff]
        %v2150 = vld [vmem:[%s7 + $0x220] sm:$0xff]
        %v2151 = vld [vmem:[%s7 + $0x228] sm:$0xff]
        %v2152 = vld [vmem:[%s7 + $0x230] sm:$0xff]
        %v2153 = vld [vmem:[%s7 + $0x238] sm:$0xff]
        %v2226 = vunpack.c.l.b16 %v2082
        %v2227 = vunpack.c.h.b16 %v2082
        %v2228 = vunpack.c.l.b16 %v2083
        %v2229 = vunpack.c.h.b16 %v2083
        %v2230 = vunpack.c.l.b16 %v2084
        %v2231 = vunpack.c.h.b16 %v2084
        %v2232 = vunpack.c.l.b16 %v2085
        %v2233 = vunpack.c.h.b16 %v2085
        %v2234 = vunpack.c.l.b16 %v2086
        %v2235 = vunpack.c.h.b16 %v2086
        %v2236 = vunpack.c.l.b16 %v2087
        %v2237 = vunpack.c.h.b16 %v2087
        %v2238 = vunpack.c.l.b16 %v2088
        %v2239 = vunpack.c.h.b16 %v2088
        %v2240 = vunpack.c.l.b16 %v2089
        %v2241 = vunpack.c.h.b16 %v2089
        %v2242 = vunpack.c.l.b16 %v2090
        %v2243 = vunpack.c.h.b16 %v2090
        %v2244 = vunpack.c.l.b16 %v2091
        %v2245 = vunpack.c.h.b16 %v2091
        %v2246 = vunpack.c.l.b16 %v2092
        %v2247 = vunpack.c.h.b16 %v2092
        %v2248 = vunpack.c.l.b16 %v2093
        %v2249 = vunpack.c.h.b16 %v2093
        %v2250 = vunpack.c.l.b16 %v2094
        %v2251 = vunpack.c.h.b16 %v2094
        %v2252 = vunpack.c.l.b16 %v2095
        %v2253 = vunpack.c.h.b16 %v2095
        %v2254 = vunpack.c.l.b16 %v2096
        %v2255 = vunpack.c.h.b16 %v2096
        %v2256 = vunpack.c.l.b16 %v2097
        %v2257 = vunpack.c.h.b16 %v2097
        %v2258 = vunpack.c.l.b16 %v2098
        %v2259 = vunpack.c.h.b16 %v2098
        %v2260 = vunpack.c.l.b16 %v2099
        %v2261 = vunpack.c.h.b16 %v2099
        %v2262 = vunpack.c.l.b16 %v2100
        %v2263 = vunpack.c.h.b16 %v2100
        %v2264 = vunpack.c.l.b16 %v2101
        %v2265 = vunpack.c.h.b16 %v2101
        %v2266 = vunpack.c.l.b16 %v2102
        %v2267 = vunpack.c.h.b16 %v2102
        %v2268 = vunpack.c.l.b16 %v2103
        %v2269 = vunpack.c.h.b16 %v2103
        %v2270 = vunpack.c.l.b16 %v2104
        %v2271 = vunpack.c.h.b16 %v2104
        %v2272 = vunpack.c.l.b16 %v2105
        %v2273 = vunpack.c.h.b16 %v2105
        %v2274 = vunpack.c.l.b16 %v2106
        %v2275 = vunpack.c.h.b16 %v2106
        %v2276 = vunpack.c.l.b16 %v2107
        %v2277 = vunpack.c.h.b16 %v2107
        %v2278 = vunpack.c.l.b16 %v2108
        %v2279 = vunpack.c.h.b16 %v2108
        %v2280 = vunpack.c.l.b16 %v2109
        %v2281 = vunpack.c.h.b16 %v2109
        %v2282 = vunpack.c.l.b16 %v2110
        %v2283 = vunpack.c.h.b16 %v2110
        %v2284 = vunpack.c.l.b16 %v2111
        %v2285 = vunpack.c.h.b16 %v2111
        %v2286 = vunpack.c.l.b16 %v2112
        %v2287 = vunpack.c.h.b16 %v2112
        %v2288 = vunpack.c.l.b16 %v2113
        %v2289 = vunpack.c.h.b16 %v2113
        %v2290 = vunpack.c.l.b16 %v2114
        %v2291 = vunpack.c.h.b16 %v2114
        %v2292 = vunpack.c.l.b16 %v2115
        %v2293 = vunpack.c.h.b16 %v2115
        %v2294 = vunpack.c.l.b16 %v2116
        %v2295 = vunpack.c.h.b16 %v2116
        %v2296 = vunpack.c.l.b16 %v2117
        %v2297 = vunpack.c.h.b16 %v2117
        %v2298 = vunpack.c.l.b16 %v2118
        %v2299 = vunpack.c.h.b16 %v2118
        %v2300 = vunpack.c.l.b16 %v2119
        %v2301 = vunpack.c.h.b16 %v2119
        %v2302 = vunpack.c.l.b16 %v2120
        %v2303 = vunpack.c.h.b16 %v2120
        %v2304 = vunpack.c.l.b16 %v2121
        %v2305 = vunpack.c.h.b16 %v2121
        %v2306 = vunpack.c.l.b16 %v2122
        %v2307 = vunpack.c.h.b16 %v2122
        %v2308 = vunpack.c.l.b16 %v2123
        %v2309 = vunpack.c.h.b16 %v2123
        %v2310 = vunpack.c.l.b16 %v2124
        %v2311 = vunpack.c.h.b16 %v2124
        %v2312 = vunpack.c.l.b16 %v2125
        %v2313 = vunpack.c.h.b16 %v2125
        %v2314 = vunpack.c.l.b16 %v2126
        %v2315 = vunpack.c.h.b16 %v2126
        %v2316 = vunpack.c.l.b16 %v2127
        %v2317 = vunpack.c.h.b16 %v2127
        %v2318 = vunpack.c.l.b16 %v2128
        %v2319 = vunpack.c.h.b16 %v2128
        %v2320 = vunpack.c.l.b16 %v2129
        %v2321 = vunpack.c.h.b16 %v2129
        %v2322 = vunpack.c.l.b16 %v2130
        %v2323 = vunpack.c.h.b16 %v2130
        %v2324 = vunpack.c.l.b16 %v2131
        %v2325 = vunpack.c.h.b16 %v2131
        %v2326 = vunpack.c.l.b16 %v2132
        %v2327 = vunpack.c.h.b16 %v2132
        %v2328 = vunpack.c.l.b16 %v2133
        %v2329 = vunpack.c.h.b16 %v2133
        %v2330 = vunpack.c.l.b16 %v2134
        %v2331 = vunpack.c.h.b16 %v2134
        %v2332 = vunpack.c.l.b16 %v2135
        %v2333 = vunpack.c.h.b16 %v2135
        %v2334 = vunpack.c.l.b16 %v2136
        %v2335 = vunpack.c.h.b16 %v2136
        %v2336 = vunpack.c.l.b16 %v2137
        %v2337 = vunpack.c.h.b16 %v2137
        %v2338 = vunpack.c.l.b16 %v2138
        %v2339 = vunpack.c.h.b16 %v2138
        %v2340 = vunpack.c.l.b16 %v2139
        %v2341 = vunpack.c.h.b16 %v2139
        %v2342 = vunpack.c.l.b16 %v2140
        %v2343 = vunpack.c.h.b16 %v2140
        %v2344 = vunpack.c.l.b16 %v2141
        %v2345 = vunpack.c.h.b16 %v2141
        %v2346 = vunpack.c.l.b16 %v2142
        %v2347 = vunpack.c.h.b16 %v2142
        %v2348 = vunpack.c.l.b16 %v2143
        %v2349 = vunpack.c.h.b16 %v2143
        %v2350 = vunpack.c.l.b16 %v2144
        %v2351 = vunpack.c.h.b16 %v2144
        %v2352 = vunpack.c.l.b16 %v2145
        %v2353 = vunpack.c.h.b16 %v2145
        %v2354 = vunpack.c.l.b16 %v2146
        %v2355 = vunpack.c.h.b16 %v2146
        %v2356 = vunpack.c.l.b16 %v2147
        %v2357 = vunpack.c.h.b16 %v2147
        %v2358 = vunpack.c.l.b16 %v2148
        %v2359 = vunpack.c.h.b16 %v2148
        %v2360 = vunpack.c.l.b16 %v2149
        %v2361 = vunpack.c.h.b16 %v2149
        %v2362 = vunpack.c.l.b16 %v2150
        %v2363 = vunpack.c.h.b16 %v2150
        %v2364 = vunpack.c.l.b16 %v2151
        %v2365 = vunpack.c.h.b16 %v2151
        %v2366 = vunpack.c.l.b16 %v2152
        %v2367 = vunpack.c.h.b16 %v2152
        %v2368 = vunpack.c.l.b16 %v2153
        %v2369 = vunpack.c.h.b16 %v2153
        %v2370 = vpack.c.b16 %v2228, %v2226
        %v2371 = vpack.c.b16 %v2229, %v2227
        %v2372 = vpack.c.b16 %v2232, %v2230
        %v2373 = vpack.c.b16 %v2233, %v2231
        %v2374 = vpack.c.b16 %v2236, %v2234
        %v2375 = vpack.c.b16 %v2237, %v2235
        %v2376 = vpack.c.b16 %v2240, %v2238
        %v2377 = vpack.c.b16 %v2241, %v2239
        %v2378 = vpack.c.b16 %v2244, %v2242
        %v2379 = vpack.c.b16 %v2245, %v2243
        %v2380 = vpack.c.b16 %v2248, %v2246
        %v2381 = vpack.c.b16 %v2249, %v2247
        %v2382 = vpack.c.b16 %v2252, %v2250
        %v2383 = vpack.c.b16 %v2253, %v2251
        %v2384 = vpack.c.b16 %v2256, %v2254
        %v2385 = vpack.c.b16 %v2257, %v2255
        %v2386 = vpack.c.b16 %v2260, %v2258
        %v2387 = vpack.c.b16 %v2261, %v2259
        %v2388 = vpack.c.b16 %v2264, %v2262
        %v2389 = vpack.c.b16 %v2265, %v2263
        %v2390 = vpack.c.b16 %v2268, %v2266
        %v2391 = vpack.c.b16 %v2269, %v2267
        %v2392 = vpack.c.b16 %v2272, %v2270
        %v2393 = vpack.c.b16 %v2273, %v2271
        %v2394 = vpack.c.b16 %v2276, %v2274
        %v2395 = vpack.c.b16 %v2277, %v2275
        %v2396 = vpack.c.b16 %v2280, %v2278
        %v2397 = vpack.c.b16 %v2281, %v2279
        %v2398 = vpack.c.b16 %v2284, %v2282
        %v2399 = vpack.c.b16 %v2285, %v2283
        %v2400 = vpack.c.b16 %v2288, %v2286
        %v2401 = vpack.c.b16 %v2289, %v2287
        %v2402 = vpack.c.b16 %v2292, %v2290
        %v2403 = vpack.c.b16 %v2293, %v2291
        %v2404 = vpack.c.b16 %v2296, %v2294
        %v2405 = vpack.c.b16 %v2297, %v2295
        %v2406 = vpack.c.b16 %v2300, %v2298
        %v2407 = vpack.c.b16 %v2301, %v2299
        %v2408 = vpack.c.b16 %v2304, %v2302
        %v2409 = vpack.c.b16 %v2305, %v2303
        %v2410 = vpack.c.b16 %v2308, %v2306
        %v2411 = vpack.c.b16 %v2309, %v2307
        %v2412 = vpack.c.b16 %v2312, %v2310
        %v2413 = vpack.c.b16 %v2313, %v2311
        %v2414 = vpack.c.b16 %v2316, %v2314
        %v2415 = vpack.c.b16 %v2317, %v2315
        %v2416 = vpack.c.b16 %v2320, %v2318
        %v2417 = vpack.c.b16 %v2321, %v2319
        %v2418 = vpack.c.b16 %v2324, %v2322
        %v2419 = vpack.c.b16 %v2325, %v2323
        %v2420 = vpack.c.b16 %v2328, %v2326
        %v2421 = vpack.c.b16 %v2329, %v2327
        %v2422 = vpack.c.b16 %v2332, %v2330
        %v2423 = vpack.c.b16 %v2333, %v2331
        %v2424 = vpack.c.b16 %v2336, %v2334
        %v2425 = vpack.c.b16 %v2337, %v2335
        %v2426 = vpack.c.b16 %v2340, %v2338
        %v2427 = vpack.c.b16 %v2341, %v2339
        %v2428 = vpack.c.b16 %v2344, %v2342
        %v2429 = vpack.c.b16 %v2345, %v2343
        %v2430 = vpack.c.b16 %v2348, %v2346
        %v2431 = vpack.c.b16 %v2349, %v2347
        %v2432 = vpack.c.b16 %v2352, %v2350
        %v2433 = vpack.c.b16 %v2353, %v2351
        %v2434 = vpack.c.b16 %v2356, %v2354
        %v2435 = vpack.c.b16 %v2357, %v2355
        %v2436 = vpack.c.b16 %v2360, %v2358
        %v2437 = vpack.c.b16 %v2361, %v2359
        %v2438 = vpack.c.b16 %v2364, %v2362
        %v2439 = vpack.c.b16 %v2365, %v2363
        %v2440 = vpack.c.b16 %v2368, %v2366
        %v2441 = vpack.c.b16 %v2369, %v2367
        %2514 = vmatprep.subr.bf16.mxu0 0
        %2515 = vmatpush1.bf16.msra.mxu0 %v2073
        %2516 = vmatprep.subr.bf16.mxu0 0
        %2517 = vmatpush1.bf16.msra.mxu0 %v2072
        %2518 = vmatprep.subr.bf16.mxu0 0
        %2519 = vmatpush1.bf16.msra.mxu0 %v2071
        %2520 = vmatprep.subr.bf16.mxu0 0
        %2521 = vmatpush1.bf16.msra.mxu0 %v2070
        %2522 = vmatprep.subr.bf16.mxu0 0
        %2523 = vmatpush1.bf16.msra.mxu0 %v2069
        %2524 = vmatprep.subr.bf16.mxu0 0
        %2525 = vmatpush1.bf16.msra.mxu0 %v2068
        %2526 = vmatprep.subr.bf16.mxu0 0
        %2527 = vmatpush1.bf16.msra.mxu0 %v2067
        %2528 = vmatprep.subr.bf16.mxu0 0
        %2529 = vmatpush1.bf16.msra.mxu0 %v2066
        %2530 = vmatprep.subr.bf16.mxu0 0
        %2531 = vmatpush2.bf16.msra.mxu0 %v2081
        %2532 = vmatprep.subr.bf16.mxu0 0
        %2533 = vmatpush2.bf16.msra.mxu0 %v2080
        %2534 = vmatprep.subr.bf16.mxu0 0
        %2535 = vmatpush2.bf16.msra.mxu0 %v2079
        %2536 = vmatprep.subr.bf16.mxu0 0
        %2537 = vmatpush2.bf16.msra.mxu0 %v2078
        %2538 = vmatprep.subr.bf16.mxu0 0
        %2539 = vmatpush2.bf16.msra.mxu0 %v2077
        %2540 = vmatprep.subr.bf16.mxu0 0
        %2541 = vmatpush2.bf16.msra.mxu0 %v2076
        %2542 = vmatprep.subr.bf16.mxu0 0
        %2543 = vmatpush2.bf16.msra.mxu0 %v2075
        %2544 = vmatprep.subr.bf16.mxu0 0
        %2545 = vmatpush2.bf16.msra.mxu0 %v2074
        %2546 = vmatprep.mubr.bf16.mxu0 %v2371
        %2547 = vmatmul.mubr.bf16.gmra.mxu0 %v2370
        %v2548 = vpop.f32.mrf.mxu0
        %v2549 = vadd.f32 0.0, %v2548
        %v2550 = vpop.f32.mrf.mxu0
        %v2551 = vpop.f32.mrf.mxu0
        %v2552 = vadd.f32 0.0, %v2551
        %v2553 = vpop.f32.mrf.mxu0
        %2554 = vmatprep.mubr.bf16.mxu0 %v2373
        %2555 = vmatmul.mubr.bf16.gmra.mxu0 %v2372
        %v2556 = vpop.f32.mrf.mxu0
        %v2557 = vadd.f32 0.0, %v2556
        %v2558 = vpop.f32.mrf.mxu0
        %v2559 = vpop.f32.mrf.mxu0
        %v2560 = vadd.f32 0.0, %v2559
        %v2561 = vpop.f32.mrf.mxu0
        %2562 = vmatprep.mubr.bf16.mxu0 %v2375
        %2563 = vmatmul.mubr.bf16.gmra.mxu0 %v2374
        %v2564 = vpop.f32.mrf.mxu0
        %v2565 = vadd.f32 0.0, %v2564
        %v2566 = vpop.f32.mrf.mxu0
        %v2567 = vpop.f32.mrf.mxu0
        %v2568 = vadd.f32 0.0, %v2567
        %v2569 = vpop.f32.mrf.mxu0
        %2570 = vmatprep.mubr.bf16.mxu0 %v2377
        %2571 = vmatmul.mubr.bf16.gmra.mxu0 %v2376
        %v2572 = vpop.f32.mrf.mxu0
        %v2573 = vadd.f32 0.0, %v2572
        %v2574 = vpop.f32.mrf.mxu0
        %v2575 = vpop.f32.mrf.mxu0
        %v2576 = vadd.f32 0.0, %v2575
        %v2577 = vpop.f32.mrf.mxu0
        %2578 = vmatprep.mubr.bf16.mxu0 %v2379
        %2579 = vmatmul.mubr.bf16.gmra.mxu0 %v2378
        %v2580 = vpop.f32.mrf.mxu0
        %v2581 = vadd.f32 0.0, %v2580
        %v2582 = vpop.f32.mrf.mxu0
        %v2583 = vpop.f32.mrf.mxu0
        %v2584 = vadd.f32 0.0, %v2583
        %v2585 = vpop.f32.mrf.mxu0
        %2586 = vmatprep.mubr.bf16.mxu0 %v2381
        %2587 = vmatmul.mubr.bf16.gmra.mxu0 %v2380
        %v2588 = vpop.f32.mrf.mxu0
        %v2589 = vadd.f32 0.0, %v2588
        %v2590 = vpop.f32.mrf.mxu0
        %v2591 = vpop.f32.mrf.mxu0
        %v2592 = vadd.f32 0.0, %v2591
        %v2593 = vpop.f32.mrf.mxu0
        %2594 = vmatprep.mubr.bf16.mxu0 %v2383
        %2595 = vmatmul.mubr.bf16.gmra.mxu0 %v2382
        %v2596 = vpop.f32.mrf.mxu0
        %v2597 = vadd.f32 0.0, %v2596
        %v2598 = vpop.f32.mrf.mxu0
        %v2599 = vpop.f32.mrf.mxu0
        %v2600 = vadd.f32 0.0, %v2599
        %v2601 = vpop.f32.mrf.mxu0
        %2602 = vmatprep.mubr.bf16.mxu0 %v2385
        %2603 = vmatmul.mubr.bf16.gmra.mxu0 %v2384
        %v2604 = vpop.f32.mrf.mxu0
        %v2605 = vadd.f32 0.0, %v2604
        %v2606 = vpop.f32.mrf.mxu0
        %v2607 = vpop.f32.mrf.mxu0
        %v2608 = vadd.f32 0.0, %v2607
        %v2609 = vpop.f32.mrf.mxu0
        %2610 = vmatprep.mubr.bf16.mxu0 %v2387
        %2611 = vmatmul.mubr.bf16.gmra.mxu0 %v2386
        %v2612 = vpop.f32.mrf.mxu0
        %v2613 = vadd.f32 0.0, %v2612
        %v2614 = vpop.f32.mrf.mxu0
        %v2615 = vpop.f32.mrf.mxu0
        %v2616 = vadd.f32 0.0, %v2615
        %v2617 = vpop.f32.mrf.mxu0
        %2618 = vmatprep.mubr.bf16.mxu0 %v2389
        %2619 = vmatmul.mubr.bf16.gmra.mxu0 %v2388
        %v2620 = vpop.f32.mrf.mxu0
        %v2621 = vadd.f32 0.0, %v2620
        %v2622 = vpop.f32.mrf.mxu0
        %v2623 = vpop.f32.mrf.mxu0
        %v2624 = vadd.f32 0.0, %v2623
        %v2625 = vpop.f32.mrf.mxu0
        %2626 = vmatprep.mubr.bf16.mxu0 %v2391
        %2627 = vmatmul.mubr.bf16.gmra.mxu0 %v2390
        %v2628 = vpop.f32.mrf.mxu0
        %v2629 = vadd.f32 0.0, %v2628
        %v2630 = vpop.f32.mrf.mxu0
        %v2631 = vpop.f32.mrf.mxu0
        %v2632 = vadd.f32 0.0, %v2631
        %v2633 = vpop.f32.mrf.mxu0
        %2634 = vmatprep.mubr.bf16.mxu0 %v2393
        %2635 = vmatmul.mubr.bf16.gmra.mxu0 %v2392
        %v2636 = vpop.f32.mrf.mxu0
        %v2637 = vadd.f32 0.0, %v2636
        %v2638 = vpop.f32.mrf.mxu0
        %v2639 = vpop.f32.mrf.mxu0
        %v2640 = vadd.f32 0.0, %v2639
        %v2641 = vpop.f32.mrf.mxu0
        %2642 = vmatprep.mubr.bf16.mxu0 %v2395
        %2643 = vmatmul.mubr.bf16.gmra.mxu0 %v2394
        %v2644 = vpop.f32.mrf.mxu0
        %v2645 = vadd.f32 0.0, %v2644
        %v2646 = vpop.f32.mrf.mxu0
        %v2647 = vpop.f32.mrf.mxu0
        %v2648 = vadd.f32 0.0, %v2647
        %v2649 = vpop.f32.mrf.mxu0
        %2650 = vmatprep.mubr.bf16.mxu0 %v2397
        %2651 = vmatmul.mubr.bf16.gmra.mxu0 %v2396
        %v2652 = vpop.f32.mrf.mxu0
        %v2653 = vadd.f32 0.0, %v2652
        %v2654 = vpop.f32.mrf.mxu0
        %v2655 = vpop.f32.mrf.mxu0
        %v2656 = vadd.f32 0.0, %v2655
        %v2657 = vpop.f32.mrf.mxu0
        %2658 = vmatprep.mubr.bf16.mxu0 %v2399
        %2659 = vmatmul.mubr.bf16.gmra.mxu0 %v2398
        %v2660 = vpop.f32.mrf.mxu0
        %v2661 = vadd.f32 0.0, %v2660
        %v2662 = vpop.f32.mrf.mxu0
        %v2663 = vpop.f32.mrf.mxu0
        %v2664 = vadd.f32 0.0, %v2663
        %v2665 = vpop.f32.mrf.mxu0
        %2666 = vmatprep.mubr.bf16.mxu0 %v2401
        %2667 = vmatmul.mubr.bf16.gmra.mxu0 %v2400
        %v2668 = vpop.f32.mrf.mxu0
        %v2669 = vadd.f32 0.0, %v2668
        %v2670 = vpop.f32.mrf.mxu0
        %v2671 = vpop.f32.mrf.mxu0
        %v2672 = vadd.f32 0.0, %v2671
        %v2673 = vpop.f32.mrf.mxu0
        %2674 = vmatprep.mubr.bf16.mxu0 %v2403
        %2675 = vmatmul.mubr.bf16.gmra.mxu0 %v2402
        %v2676 = vpop.f32.mrf.mxu0
        %v2677 = vadd.f32 0.0, %v2676
        %v2678 = vpop.f32.mrf.mxu0
        %v2679 = vpop.f32.mrf.mxu0
        %v2680 = vadd.f32 0.0, %v2679
        %v2681 = vpop.f32.mrf.mxu0
        %2682 = vmatprep.mubr.bf16.mxu0 %v2405
        %2683 = vmatmul.mubr.bf16.gmra.mxu0 %v2404
        %v2684 = vpop.f32.mrf.mxu0
        %v2685 = vadd.f32 0.0, %v2684
        %v2686 = vpop.f32.mrf.mxu0
        %v2687 = vpop.f32.mrf.mxu0
        %v2688 = vadd.f32 0.0, %v2687
        %v2689 = vpop.f32.mrf.mxu0
        %2690 = vmatprep.mubr.bf16.mxu0 %v2407
        %2691 = vmatmul.mubr.bf16.gmra.mxu0 %v2406
        %v2692 = vpop.f32.mrf.mxu0
        %v2693 = vadd.f32 0.0, %v2692
        %v2694 = vpop.f32.mrf.mxu0
        %v2695 = vpop.f32.mrf.mxu0
        %v2696 = vadd.f32 0.0, %v2695
        %v2697 = vpop.f32.mrf.mxu0
        %2698 = vmatprep.mubr.bf16.mxu0 %v2409
        %2699 = vmatmul.mubr.bf16.gmra.mxu0 %v2408
        %v2700 = vpop.f32.mrf.mxu0
        %v2701 = vadd.f32 0.0, %v2700
        %v2702 = vpop.f32.mrf.mxu0
        %v2703 = vpop.f32.mrf.mxu0
        %v2704 = vadd.f32 0.0, %v2703
        %v2705 = vpop.f32.mrf.mxu0
        %2706 = vmatprep.mubr.bf16.mxu0 %v2411
        %2707 = vmatmul.mubr.bf16.gmra.mxu0 %v2410
        %v2708 = vpop.f32.mrf.mxu0
        %v2709 = vadd.f32 0.0, %v2708
        %v2710 = vpop.f32.mrf.mxu0
        %v2711 = vpop.f32.mrf.mxu0
        %v2712 = vadd.f32 0.0, %v2711
        %v2713 = vpop.f32.mrf.mxu0
        %2714 = vmatprep.mubr.bf16.mxu0 %v2413
        %2715 = vmatmul.mubr.bf16.gmra.mxu0 %v2412
        %v2716 = vpop.f32.mrf.mxu0
        %v2717 = vadd.f32 0.0, %v2716
        %v2718 = vpop.f32.mrf.mxu0
        %v2719 = vpop.f32.mrf.mxu0
        %v2720 = vadd.f32 0.0, %v2719
        %v2721 = vpop.f32.mrf.mxu0
        %2722 = vmatprep.mubr.bf16.mxu0 %v2415
        %2723 = vmatmul.mubr.bf16.gmra.mxu0 %v2414
        %v2724 = vpop.f32.mrf.mxu0
        %v2725 = vadd.f32 0.0, %v2724
        %v2726 = vpop.f32.mrf.mxu0
        %v2727 = vpop.f32.mrf.mxu0
        %v2728 = vadd.f32 0.0, %v2727
        %v2729 = vpop.f32.mrf.mxu0
        %2730 = vmatprep.mubr.bf16.mxu0 %v2417
        %2731 = vmatmul.mubr.bf16.gmra.mxu0 %v2416
        %v2732 = vpop.f32.mrf.mxu0
        %v2733 = vadd.f32 0.0, %v2732
        %v2734 = vpop.f32.mrf.mxu0
        %v2735 = vpop.f32.mrf.mxu0
        %v2736 = vadd.f32 0.0, %v2735
        %v2737 = vpop.f32.mrf.mxu0
        %2738 = vmatprep.mubr.bf16.mxu0 %v2419
        %2739 = vmatmul.mubr.bf16.gmra.mxu0 %v2418
        %v2740 = vpop.f32.mrf.mxu0
        %v2741 = vadd.f32 0.0, %v2740
        %v2742 = vpop.f32.mrf.mxu0
        %v2743 = vpop.f32.mrf.mxu0
        %v2744 = vadd.f32 0.0, %v2743
        %v2745 = vpop.f32.mrf.mxu0
        %2746 = vmatprep.mubr.bf16.mxu0 %v2421
        %2747 = vmatmul.mubr.bf16.gmra.mxu0 %v2420
        %v2748 = vpop.f32.mrf.mxu0
        %v2749 = vadd.f32 0.0, %v2748
        %v2750 = vpop.f32.mrf.mxu0
        %v2751 = vpop.f32.mrf.mxu0
        %v2752 = vadd.f32 0.0, %v2751
        %v2753 = vpop.f32.mrf.mxu0
        %2754 = vmatprep.mubr.bf16.mxu0 %v2423
        %2755 = vmatmul.mubr.bf16.gmra.mxu0 %v2422
        %v2756 = vpop.f32.mrf.mxu0
        %v2757 = vadd.f32 0.0, %v2756
        %v2758 = vpop.f32.mrf.mxu0
        %v2759 = vpop.f32.mrf.mxu0
        %v2760 = vadd.f32 0.0, %v2759
        %v2761 = vpop.f32.mrf.mxu0
        %2762 = vmatprep.mubr.bf16.mxu0 %v2425
        %2763 = vmatmul.mubr.bf16.gmra.mxu0 %v2424
        %v2764 = vpop.f32.mrf.mxu0
        %v2765 = vadd.f32 0.0, %v2764
        %v2766 = vpop.f32.mrf.mxu0
        %v2767 = vpop.f32.mrf.mxu0
        %v2768 = vadd.f32 0.0, %v2767
        %v2769 = vpop.f32.mrf.mxu0
        %2770 = vmatprep.mubr.bf16.mxu0 %v2427
        %2771 = vmatmul.mubr.bf16.gmra.mxu0 %v2426
        %v2772 = vpop.f32.mrf.mxu0
        %v2773 = vadd.f32 0.0, %v2772
        %v2774 = vpop.f32.mrf.mxu0
        %v2775 = vpop.f32.mrf.mxu0
        %v2776 = vadd.f32 0.0, %v2775
        %v2777 = vpop.f32.mrf.mxu0
        %2778 = vmatprep.mubr.bf16.mxu0 %v2429
        %2779 = vmatmul.mubr.bf16.gmra.mxu0 %v2428
        %v2780 = vpop.f32.mrf.mxu0
        %v2781 = vadd.f32 0.0, %v2780
        %v2782 = vpop.f32.mrf.mxu0
        %v2783 = vpop.f32.mrf.mxu0
        %v2784 = vadd.f32 0.0, %v2783
        %v2785 = vpop.f32.mrf.mxu0
        %2786 = vmatprep.mubr.bf16.mxu0 %v2431
        %2787 = vmatmul.mubr.bf16.gmra.mxu0 %v2430
        %v2788 = vpop.f32.mrf.mxu0
        %v2789 = vadd.f32 0.0, %v2788
        %v2790 = vpop.f32.mrf.mxu0
        %v2791 = vpop.f32.mrf.mxu0
        %v2792 = vadd.f32 0.0, %v2791
        %v2793 = vpop.f32.mrf.mxu0
        %2794 = vmatprep.mubr.bf16.mxu0 %v2433
        %2795 = vmatmul.mubr.bf16.gmra.mxu0 %v2432
        %v2796 = vpop.f32.mrf.mxu0
        %v2797 = vadd.f32 0.0, %v2796
        %v2798 = vpop.f32.mrf.mxu0
        %v2799 = vpop.f32.mrf.mxu0
        %v2800 = vadd.f32 0.0, %v2799
        %v2801 = vpop.f32.mrf.mxu0
        %2802 = vmatprep.mubr.bf16.mxu0 %v2435
        %2803 = vmatmul.mubr.bf16.gmra.mxu0 %v2434
        %v2804 = vpop.f32.mrf.mxu0
        %v2805 = vadd.f32 0.0, %v2804
        %v2806 = vpop.f32.mrf.mxu0
        %v2807 = vpop.f32.mrf.mxu0
        %v2808 = vadd.f32 0.0, %v2807
        %v2809 = vpop.f32.mrf.mxu0
        %2810 = vmatprep.mubr.bf16.mxu0 %v2437
        %2811 = vmatmul.mubr.bf16.gmra.mxu0 %v2436
        %v2812 = vpop.f32.mrf.mxu0
        %v2813 = vadd.f32 0.0, %v2812
        %v2814 = vpop.f32.mrf.mxu0
        %v2815 = vpop.f32.mrf.mxu0
        %v2816 = vadd.f32 0.0, %v2815
        %v2817 = vpop.f32.mrf.mxu0
        %2818 = vmatprep.mubr.bf16.mxu0 %v2439
        %2819 = vmatmul.mubr.bf16.gmra.mxu0 %v2438
        %v2820 = vpop.f32.mrf.mxu0
        %v2821 = vadd.f32 0.0, %v2820
        %v2822 = vpop.f32.mrf.mxu0
        %v2823 = vpop.f32.mrf.mxu0
        %v2824 = vadd.f32 0.0, %v2823
        %v2825 = vpop.f32.mrf.mxu0
        %2826 = vmatprep.mubr.bf16.mxu0 %v2441
        %2827 = vmatmul.mubr.bf16.gmra.mxu0 %v2440
        %v2828 = vpop.f32.mrf.mxu0
        %v2829 = vadd.f32 0.0, %v2828
        %v2830 = vpop.f32.mrf.mxu0
        %v2831 = vpop.f32.mrf.mxu0
        %v2832 = vadd.f32 0.0, %v2831
        %v2833 = vpop.f32.mrf.mxu0
        %2834 = vdwg.mxu0
        %v2835 = vmax.f32 %v2549, %v2581
        %v2836 = vmax.f32 %v2552, %v2584
        %v2837 = vmax.f32 %v2557, %v2589
        %v2838 = vmax.f32 %v2560, %v2592
        %v2839 = vmax.f32 %v2565, %v2597
        %v2840 = vmax.f32 %v2568, %v2600
        %v2841 = vmax.f32 %v2573, %v2605
        %v2842 = vmax.f32 %v2576, %v2608
        %v2843 = vmax.f32 %v2835, %v2613
        %v2844 = vmax.f32 %v2836, %v2616
        %v2845 = vmax.f32 %v2837, %v2621
        %v2846 = vmax.f32 %v2838, %v2624
        %v2847 = vmax.f32 %v2839, %v2629
        %v2848 = vmax.f32 %v2840, %v2632
        %v2849 = vmax.f32 %v2841, %v2637
        %v2850 = vmax.f32 %v2842, %v2640
        %v2851 = vmax.f32 %v2843, %v2645
        %v2852 = vmax.f32 %v2844, %v2648
        %v2853 = vmax.f32 %v2845, %v2653
        %v2854 = vmax.f32 %v2846, %v2656
        %v2855 = vmax.f32 %v2847, %v2661
        %v2856 = vmax.f32 %v2848, %v2664
        %v2857 = vmax.f32 %v2849, %v2669
        %v2858 = vmax.f32 %v2850, %v2672
        %v2859 = vmax.f32 %v2851, %v2677
        %v2860 = vmax.f32 %v2852, %v2680
        %v2861 = vmax.f32 %v2853, %v2685
        %v2862 = vmax.f32 %v2854, %v2688
        %v2863 = vmax.f32 %v2855, %v2693
        %v2864 = vmax.f32 %v2856, %v2696
        %v2865 = vmax.f32 %v2857, %v2701
        %v2866 = vmax.f32 %v2858, %v2704
        %v2867 = vmax.f32 %v2859, %v2709
        %v2868 = vmax.f32 %v2860, %v2712
        %v2869 = vmax.f32 %v2861, %v2717
        %v2870 = vmax.f32 %v2862, %v2720
        %v2871 = vmax.f32 %v2863, %v2725
        %v2872 = vmax.f32 %v2864, %v2728
        %v2873 = vmax.f32 %v2865, %v2733
        %v2874 = vmax.f32 %v2866, %v2736
        %v2875 = vmax.f32 %v2867, %v2741
        %v2876 = vmax.f32 %v2868, %v2744
        %v2877 = vmax.f32 %v2869, %v2749
        %v2878 = vmax.f32 %v2870, %v2752
        %v2879 = vmax.f32 %v2871, %v2757
        %v2880 = vmax.f32 %v2872, %v2760
        %v2881 = vmax.f32 %v2873, %v2765
        %v2882 = vmax.f32 %v2874, %v2768
        %v2883 = vmax.f32 %v2875, %v2773
        %v2884 = vmax.f32 %v2876, %v2776
        %v2885 = vmax.f32 %v2877, %v2781
        %v2886 = vmax.f32 %v2878, %v2784
        %v2887 = vmax.f32 %v2879, %v2789
        %v2888 = vmax.f32 %v2880, %v2792
        %v2889 = vmax.f32 %v2881, %v2797
        %v2890 = vmax.f32 %v2882, %v2800
        %v2891 = vmax.f32 %v2883, %v2805
        %v2892 = vmax.f32 %v2884, %v2808
        %v2893 = vmax.f32 %v2885, %v2813
        %v2894 = vmax.f32 %v2886, %v2816
        %v2895 = vmax.f32 %v2887, %v2821
        %v2896 = vmax.f32 %v2888, %v2824
        %v2897 = vmax.f32 %v2889, %v2829
        %v2898 = vmax.f32 %v2890, %v2832
        %v2899 = vpack.c.bf16 %v2892, %v2891
        %v2900 = vpack.c.bf16 %v2894, %v2893
        %v2901 = vpack.c.bf16 %v2896, %v2895
        %v2902 = vpack.c.bf16 %v2898, %v2897
        %v2903 = vld [vmem:[%s9] sm:$0xf]
        %v2904 = vld [vmem:[%s11] sm:$0x1]
        %v2905 = vld [vmem:[%s17] sm:$0x1]
        %v2906 = vld [vmem:[%s19] sm:$0xf]
        %v2907 = vld [vmem:[%s21] sm:$0x1]
        %v2909 = vlaneseq
        %v2910 = vshrl.u32 %v2909, 7
        %v2911 = vsub.s32 0, %v2910
        %v2912 = vrot.slane %v2904, %v2911
        %vm2914 = vcmask 64512
        %v2916 = vsel %vm2914, %v2899, 0
        %v2919 = vsel %vm2914, %v2900, 0
        %v2922 = vsel %vm2914, %v2901, 0
        %v2925 = vsel %vm2914, %v2902, 0
        %vm2927 = vcmask 1043456
        %v2929 = vsel %vm2927, %v2903, 0
        %2931 = vmatprep.subr.bf16.mxu0 0
        %2932 = vmatpush1.bf16.msra.mxu0 0
        %2933 = vmatprep.subr.bf16.mxu0 0
        %2934 = vmatpush1.bf16.msra.mxu0 0
        %2935 = vmatprep.subr.bf16.mxu0 0
        %2936 = vmatpush1.bf16.msra.mxu0 0
        %2937 = vmatprep.subr.bf16.mxu0 0
        %2938 = vmatpush1.bf16.msra.mxu0 0
        %2939 = vmatprep.subr.bf16.mxu0 0
        %2940 = vmatpush1.bf16.msra.mxu0 0
        %2941 = vmatprep.subr.bf16.mxu0 0
        %2942 = vmatpush1.bf16.msra.mxu0 0
        %2943 = vmatprep.subr.bf16.mxu0 0
        %2944 = vmatpush1.bf16.msra.mxu0 0
        %2945 = vmatprep.subr.bf16.mxu0 0
        %2946 = vmatpush1.bf16.msra.mxu0 %v2929
        %2947 = vmatprep.subr.bf16.mxu0 0
        %2948 = vmatpush2.bf16.msra.mxu0 0
        %2949 = vmatprep.subr.bf16.mxu0 0
        %2950 = vmatpush2.bf16.msra.mxu0 0
        %2951 = vmatprep.subr.bf16.mxu0 0
        %2952 = vmatpush2.bf16.msra.mxu0 0
        %2953 = vmatprep.subr.bf16.mxu0 0
        %2954 = vmatpush2.bf16.msra.mxu0 0
        %2955 = vmatprep.subr.bf16.mxu0 0
        %2956 = vmatpush2.bf16.msra.mxu0 0
        %2957 = vmatprep.subr.bf16.mxu0 0
        %2958 = vmatpush2.bf16.msra.mxu0 0
        %2959 = vmatprep.subr.bf16.mxu0 0
        %2960 = vmatpush2.bf16.msra.mxu0 0
        %2961 = vmatprep.subr.bf16.mxu0 0
        %2962 = vmatpush2.bf16.msra.mxu0 0
        %2963 = vmatprep.mubr.bf16.mxu0 0
        %2964 = vmatmul.mubr.bf16.gmra.mxu0 %v2916
        %v2965 = vpop.f32.mrf.mxu0
        %v2966 = vadd.f32 %v2912, %v2965
        %v2967 = vpop.f32.mrf.mxu0
        %v2968 = vpop.f32.mrf.mxu0
        %v2969 = vadd.f32 %v2912, %v2968
        %v2970 = vpop.f32.mrf.mxu0
        %2971 = vmatprep.mubr.bf16.mxu0 0
        %2972 = vmatmul.mubr.bf16.gmra.mxu0 %v2919
        %v2973 = vpop.f32.mrf.mxu0
        %v2974 = vadd.f32 %v2912, %v2973
        %v2975 = vpop.f32.mrf.mxu0
        %v2976 = vpop.f32.mrf.mxu0
        %v2977 = vadd.f32 %v2912, %v2976
        %v2978 = vpop.f32.mrf.mxu0
        %2979 = vmatprep.mubr.bf16.mxu0 0
        %2980 = vmatmul.mubr.bf16.gmra.mxu0 %v2922
        %v2981 = vpop.f32.mrf.mxu0
        %v2982 = vadd.f32 %v2912, %v2981
        %v2983 = vpop.f32.mrf.mxu0
        %v2984 = vpop.f32.mrf.mxu0
        %v2985 = vadd.f32 %v2912, %v2984
        %v2986 = vpop.f32.mrf.mxu0
        %2987 = vmatprep.mubr.bf16.mxu0 0
        %2988 = vmatmul.mubr.bf16.gmra.mxu0 %v2925
        %v2989 = vpop.f32.mrf.mxu0
        %v2990 = vadd.f32 %v2912, %v2989
        %v2991 = vpop.f32.mrf.mxu0
        %v2992 = vpop.f32.mrf.mxu0
        %v2993 = vadd.f32 %v2912, %v2992
        %v2994 = vpop.f32.mrf.mxu0
        %2995 = vdwg.mxu0
        %v2996 = vmax.f32 %v2966, 0.0
        %v2997 = vmax.f32 %v2969, 0.0
        %v2998 = vmax.f32 %v2974, 0.0
        %v2999 = vmax.f32 %v2977, 0.0
        %v3000 = vmax.f32 %v2982, 0.0
        %v3001 = vmax.f32 %v2985, 0.0
        %v3002 = vmax.f32 %v2990, 0.0
        %v3003 = vmax.f32 %v2993, 0.0
        %v3004 = vpack.c.bf16 %v2997, %v2996
        %v3005 = vpack.c.bf16 %v2999, %v2998
        %v3006 = vpack.c.bf16 %v3001, %v3000
        %v3007 = vpack.c.bf16 %v3003, %v3002
        %v3008 = vld [vmem:[%s13] sm:$0xf]
        %v3009 = vld [vmem:[%s13 + $0x4] sm:$0xf]
        %v3010 = vld [vmem:[%s13 + $0x8] sm:$0xf]
        %v3011 = vld [vmem:[%s13 + $0xc] sm:$0xf]
        %v3012 = vld [vmem:[%s13 + $0x10] sm:$0xf]
        %v3013 = vld [vmem:[%s13 + $0x14] sm:$0xf]
        %v3014 = vld [vmem:[%s13 + $0x18] sm:$0xf]
        %v3015 = vld [vmem:[%s13 + $0x1c] sm:$0xf]
        %v3016 = vld [vmem:[%s13 + $0x20] sm:$0xf]
        %v3017 = vld [vmem:[%s13 + $0x24] sm:$0xf]
        %v3018 = vld [vmem:[%s13 + $0x28] sm:$0xf]
        %v3019 = vld [vmem:[%s13 + $0x2c] sm:$0xf]
        %v3020 = vld [vmem:[%s13 + $0x30] sm:$0xf]
        %v3021 = vld [vmem:[%s13 + $0x34] sm:$0xf]
        %v3022 = vld [vmem:[%s13 + $0x38] sm:$0xf]
        %v3023 = vld [vmem:[%s13 + $0x3c] sm:$0xf]
        %v3024 = vld [vmem:[%s13 + $0x40] sm:$0xf]
        %v3025 = vld [vmem:[%s13 + $0x44] sm:$0xf]
        %v3044 = vunpack.c.l.b16 %v3008
        %v3045 = vunpack.c.l.b16 %v3009
        %v3046 = vunpack.c.l.b16 %v3010
        %v3047 = vunpack.c.l.b16 %v3011
        %v3048 = vunpack.c.l.b16 %v3012
        %v3049 = vunpack.c.l.b16 %v3013
        %v3050 = vunpack.c.l.b16 %v3014
        %v3051 = vunpack.c.l.b16 %v3015
        %v3052 = vunpack.c.l.b16 %v3016
        %v3053 = vunpack.c.l.b16 %v3017
        %v3054 = vunpack.c.l.b16 %v3018
        %v3055 = vunpack.c.l.b16 %v3019
        %v3056 = vunpack.c.l.b16 %v3020
        %v3057 = vunpack.c.l.b16 %v3021
        %v3058 = vunpack.c.l.b16 %v3022
        %v3059 = vunpack.c.l.b16 %v3023
        %v3060 = vunpack.c.l.b16 %v3024
        %v3061 = vunpack.c.l.b16 %v3025
        %v3062 = vpack.c.b16 %v3045, %v3044
        %v3063 = vpack.c.b16 %v3047, %v3046
        %v3064 = vpack.c.b16 %v3049, %v3048
        %v3065 = vpack.c.b16 %v3051, %v3050
        %v3066 = vpack.c.b16 %v3053, %v3052
        %v3067 = vpack.c.b16 %v3055, %v3054
        %v3068 = vpack.c.b16 %v3057, %v3056
        %v3069 = vpack.c.b16 %v3059, %v3058
        %v3070 = vpack.c.b16 %v3061, %v3060
        %vm3071 = vcmask 523264
        %v3073 = vsel %vm3071, %v3062, 0
        %v3076 = vsel %vm3071, %v3063, 0
        %v3079 = vsel %vm3071, %v3064, 0
        %v3082 = vsel %vm3071, %v3065, 0
        %v3085 = vsel %vm3071, %v3066, 0
        %v3088 = vsel %vm3071, %v3067, 0
        %v3091 = vsel %vm3071, %v3068, 0
        %v3094 = vsel %vm3071, %v3069, 0
        %v3097 = vsel %vm3071, %v3070, 0
        %3099 = vmatprep.subr.bf16.mxu0 0
        %3100 = vmatpush1.bf16.msra.mxu0 0
        %3101 = vmatprep.subr.bf16.mxu0 0
        %3102 = vmatpush1.bf16.msra.mxu0 0
        %3103 = vmatprep.subr.bf16.mxu0 0
        %3104 = vmatpush1.bf16.msra.mxu0 0
        %3105 = vmatprep.subr.bf16.mxu0 0
        %3106 = vmatpush1.bf16.msra.mxu0 0
        %3107 = vmatprep.subr.bf16.mxu0 0
        %3108 = vmatpush1.bf16.msra.mxu0 %v3007
        %3109 = vmatprep.subr.bf16.mxu0 0
        %3110 = vmatpush1.bf16.msra.mxu0 %v3006
        %3111 = vmatprep.subr.bf16.mxu0 0
        %3112 = vmatpush1.bf16.msra.mxu0 %v3005
        %3113 = vmatprep.subr.bf16.mxu0 0
        %3114 = vmatpush1.bf16.msra.mxu0 %v3004
        %3115 = vmatprep.subr.bf16.mxu0 0
        %3116 = vmatpush2.bf16.msra.mxu0 0
        %3117 = vmatprep.subr.bf16.mxu0 0
        %3118 = vmatpush2.bf16.msra.mxu0 0
        %3119 = vmatprep.subr.bf16.mxu0 0
        %3120 = vmatpush2.bf16.msra.mxu0 0
        %3121 = vmatprep.subr.bf16.mxu0 0
        %3122 = vmatpush2.bf16.msra.mxu0 0
        %3123 = vmatprep.subr.bf16.mxu0 0
        %3124 = vmatpush2.bf16.msra.mxu0 0
        %3125 = vmatprep.subr.bf16.mxu0 0
        %3126 = vmatpush2.bf16.msra.mxu0 0
        %3127 = vmatprep.subr.bf16.mxu0 0
        %3128 = vmatpush2.bf16.msra.mxu0 0
        %3129 = vmatprep.subr.bf16.mxu0 0
        %3130 = vmatpush2.bf16.msra.mxu0 0
        %3131 = vmatprep.mubr.bf16.mxu0 0
        %3132 = vmatmul.mubr.bf16.gmra.mxu0 %v3073
        %v3133 = vpop.f32.mrf.mxu0
        %v3134 = vadd.f32 0.0, %v3133
        %v3135 = vpop.f32.mrf.mxu0
        %v3136 = vpop.f32.mrf.mxu0
        %v3137 = vadd.f32 0.0, %v3136
        %v3138 = vpop.f32.mrf.mxu0
        %3139 = vmatprep.mubr.bf16.mxu0 0
        %3140 = vmatmul.mubr.bf16.gmra.mxu0 %v3076
        %v3141 = vpop.f32.mrf.mxu0
        %v3142 = vadd.f32 0.0, %v3141
        %v3143 = vpop.f32.mrf.mxu0
        %v3144 = vpop.f32.mrf.mxu0
        %v3145 = vadd.f32 0.0, %v3144
        %v3146 = vpop.f32.mrf.mxu0
        %3147 = vmatprep.mubr.bf16.mxu0 0
        %3148 = vmatmul.mubr.bf16.gmra.mxu0 %v3079
        %v3149 = vpop.f32.mrf.mxu0
        %v3150 = vadd.f32 0.0, %v3149
        %v3151 = vpop.f32.mrf.mxu0
        %v3152 = vpop.f32.mrf.mxu0
        %v3153 = vadd.f32 0.0, %v3152
        %v3154 = vpop.f32.mrf.mxu0
        %3155 = vmatprep.mubr.bf16.mxu0 0
        %3156 = vmatmul.mubr.bf16.gmra.mxu0 %v3082
        %v3157 = vpop.f32.mrf.mxu0
        %v3158 = vadd.f32 0.0, %v3157
        %v3159 = vpop.f32.mrf.mxu0
        %v3160 = vpop.f32.mrf.mxu0
        %v3161 = vadd.f32 0.0, %v3160
        %v3162 = vpop.f32.mrf.mxu0
        %3163 = vmatprep.mubr.bf16.mxu0 0
        %3164 = vmatmul.mubr.bf16.gmra.mxu0 %v3085
        %v3165 = vpop.f32.mrf.mxu0
        %v3166 = vadd.f32 0.0, %v3165
        %v3167 = vpop.f32.mrf.mxu0
        %v3168 = vpop.f32.mrf.mxu0
        %v3169 = vadd.f32 0.0, %v3168
        %v3170 = vpop.f32.mrf.mxu0
        %3171 = vmatprep.mubr.bf16.mxu0 0
        %3172 = vmatmul.mubr.bf16.gmra.mxu0 %v3088
        %v3173 = vpop.f32.mrf.mxu0
        %v3174 = vadd.f32 0.0, %v3173
        %v3175 = vpop.f32.mrf.mxu0
        %v3176 = vpop.f32.mrf.mxu0
        %v3177 = vadd.f32 0.0, %v3176
        %v3178 = vpop.f32.mrf.mxu0
        %3179 = vmatprep.mubr.bf16.mxu0 0
        %3180 = vmatmul.mubr.bf16.gmra.mxu0 %v3091
        %v3181 = vpop.f32.mrf.mxu0
        %v3182 = vadd.f32 0.0, %v3181
        %v3183 = vpop.f32.mrf.mxu0
        %v3184 = vpop.f32.mrf.mxu0
        %v3185 = vadd.f32 0.0, %v3184
        %v3186 = vpop.f32.mrf.mxu0
        %3187 = vmatprep.mubr.bf16.mxu0 0
        %3188 = vmatmul.mubr.bf16.gmra.mxu0 %v3094
        %v3189 = vpop.f32.mrf.mxu0
        %v3190 = vadd.f32 0.0, %v3189
        %v3191 = vpop.f32.mrf.mxu0
        %v3192 = vpop.f32.mrf.mxu0
        %v3193 = vadd.f32 0.0, %v3192
        %v3194 = vpop.f32.mrf.mxu0
        %3195 = vmatprep.mubr.bf16.mxu0 0
        %3196 = vmatmul.mubr.bf16.gmra.mxu0 %v3097
        %v3197 = vpop.f32.mrf.mxu0
        %v3198 = vadd.f32 0.0, %v3197
        %v3199 = vpop.f32.mrf.mxu0
        %v3200 = vpop.f32.mrf.mxu0
        %v3201 = vadd.f32 0.0, %v3200
        %v3202 = vpop.f32.mrf.mxu0
        %3203 = vdwg.mxu0
        %v3204 = vld [vmem:[%s15] sm:$0x1]
        %v3206 = vlaneseq
        %v3207 = vshrl.u32 %v3206, 7
        %v3208 = vsub.s32 0, %v3207
        %v3209 = vrot.slane %v3204, %v3208
        %v3211 = vmul.f32 %v3134, %v3209
        %v3212 = vmul.f32 %v3137, %v3209
        %s3213 = scalar_lea.vmem %s15, 1
        %v3214 = vld [vmem:[%s3213] sm:$0x1]
        %v3216 = vlaneseq
        %v3217 = vshrl.u32 %v3216, 7
        %v3218 = vsub.s32 0, %v3217
        %v3219 = vrot.slane %v3214, %v3218
        %v3221 = vmul.f32 %v3142, %v3219
        %v3222 = vmul.f32 %v3145, %v3219
        %v3223 = vadd.f32 %v3211, %v3221
        %v3224 = vadd.f32 %v3212, %v3222
        %s3225 = scalar_lea.vmem %s15, 2
        %v3226 = vld [vmem:[%s3225] sm:$0x1]
        %v3228 = vlaneseq
        %v3229 = vshrl.u32 %v3228, 7
        %v3230 = vsub.s32 0, %v3229
        %v3231 = vrot.slane %v3226, %v3230
        %v3233 = vmul.f32 %v3150, %v3231
        %v3234 = vmul.f32 %v3153, %v3231
        %v3235 = vadd.f32 %v3223, %v3233
        %v3236 = vadd.f32 %v3224, %v3234
        %s3237 = scalar_lea.vmem %s15, 3
        %v3238 = vld [vmem:[%s3237] sm:$0x1]
        %v3240 = vlaneseq
        %v3241 = vshrl.u32 %v3240, 7
        %v3242 = vsub.s32 0, %v3241
        %v3243 = vrot.slane %v3238, %v3242
        %v3245 = vmul.f32 %v3158, %v3243
        %v3246 = vmul.f32 %v3161, %v3243
        %v3247 = vadd.f32 %v3235, %v3245
        %v3248 = vadd.f32 %v3236, %v3246
        %s3249 = scalar_lea.vmem %s15, 4
        %v3250 = vld [vmem:[%s3249] sm:$0x1]
        %v3252 = vlaneseq
        %v3253 = vshrl.u32 %v3252, 7
        %v3254 = vsub.s32 0, %v3253
        %v3255 = vrot.slane %v3250, %v3254
        %v3257 = vmul.f32 %v3166, %v3255
        %v3258 = vmul.f32 %v3169, %v3255
        %v3259 = vadd.f32 %v3247, %v3257
        %v3260 = vadd.f32 %v3248, %v3258
        %s3261 = scalar_lea.vmem %s15, 5
        %v3262 = vld [vmem:[%s3261] sm:$0x1]
        %v3264 = vlaneseq
        %v3265 = vshrl.u32 %v3264, 7
        %v3266 = vsub.s32 0, %v3265
        %v3267 = vrot.slane %v3262, %v3266
        %v3269 = vmul.f32 %v3174, %v3267
        %v3270 = vmul.f32 %v3177, %v3267
        %v3271 = vadd.f32 %v3259, %v3269
        %v3272 = vadd.f32 %v3260, %v3270
        %s3273 = scalar_lea.vmem %s15, 6
        %v3274 = vld [vmem:[%s3273] sm:$0x1]
        %v3276 = vlaneseq
        %v3277 = vshrl.u32 %v3276, 7
        %v3278 = vsub.s32 0, %v3277
        %v3279 = vrot.slane %v3274, %v3278
        %v3281 = vmul.f32 %v3182, %v3279
        %v3282 = vmul.f32 %v3185, %v3279
        %v3283 = vadd.f32 %v3271, %v3281
        %v3284 = vadd.f32 %v3272, %v3282
        %s3285 = scalar_lea.vmem %s15, 7
        %v3286 = vld [vmem:[%s3285] sm:$0x1]
        %v3288 = vlaneseq
        %v3289 = vshrl.u32 %v3288, 7
        %v3290 = vsub.s32 0, %v3289
        %v3291 = vrot.slane %v3286, %v3290
        %v3293 = vmul.f32 %v3190, %v3291
        %v3294 = vmul.f32 %v3193, %v3291
        %v3295 = vadd.f32 %v3283, %v3293
        %v3296 = vadd.f32 %v3284, %v3294
        %s3297 = scalar_lea.vmem %s15, 8
        %v3298 = vld [vmem:[%s3297] sm:$0x1]
        %v3300 = vlaneseq
        %v3301 = vshrl.u32 %v3300, 7
        %v3302 = vsub.s32 0, %v3301
        %v3303 = vrot.slane %v3298, %v3302
        %v3305 = vmul.f32 %v3198, %v3303
        %v3306 = vmul.f32 %v3201, %v3303
        %v3307 = vadd.f32 %v3295, %v3305
        %v3308 = vadd.f32 %v3296, %v3306
        %v3310 = vlaneseq
        %v3311 = vshrl.u32 %v3310, 7
        %v3312 = vsub.s32 0, %v3311
        %v3313 = vrot.slane %v2905, %v3312
        %v3315 = vadd.f32 %v3307, %v3313
        %v3316 = vadd.f32 %v3308, %v3313
        %v3317 = vpack.c.bf16 %v3316, %v3315
        %v3319 = vlaneseq
        %v3320 = vshrl.u32 %v3319, 7
        %v3321 = vsub.s32 0, %v3320
        %v3322 = vrot.slane %v2907, %v3321
        %v3325 = vsel %vm2914, %v3317, 0
        %v3328 = vsel %vm2927, %v2906, 0
        %3330 = vmatprep.subr.bf16.mxu0 0
        %3331 = vmatpush1.bf16.msra.mxu0 0
        %3332 = vmatprep.subr.bf16.mxu0 0
        %3333 = vmatpush1.bf16.msra.mxu0 0
        %3334 = vmatprep.subr.bf16.mxu0 0
        %3335 = vmatpush1.bf16.msra.mxu0 0
        %3336 = vmatprep.subr.bf16.mxu0 0
        %3337 = vmatpush1.bf16.msra.mxu0 0
        %3338 = vmatprep.subr.bf16.mxu0 0
        %3339 = vmatpush1.bf16.msra.mxu0 0
        %3340 = vmatprep.subr.bf16.mxu0 0
        %3341 = vmatpush1.bf16.msra.mxu0 0
        %3342 = vmatprep.subr.bf16.mxu0 0
        %3343 = vmatpush1.bf16.msra.mxu0 0
        %3344 = vmatprep.subr.bf16.mxu0 0
        %3345 = vmatpush1.bf16.msra.mxu0 %v3328
        %3346 = vmatprep.subr.bf16.mxu0 0
        %3347 = vmatpush2.bf16.msra.mxu0 0
        %3348 = vmatprep.subr.bf16.mxu0 0
        %3349 = vmatpush2.bf16.msra.mxu0 0
        %3350 = vmatprep.subr.bf16.mxu0 0
        %3351 = vmatpush2.bf16.msra.mxu0 0
        %3352 = vmatprep.subr.bf16.mxu0 0
        %3353 = vmatpush2.bf16.msra.mxu0 0
        %3354 = vmatprep.subr.bf16.mxu0 0
        %3355 = vmatpush2.bf16.msra.mxu0 0
        %3356 = vmatprep.subr.bf16.mxu0 0
        %3357 = vmatpush2.bf16.msra.mxu0 0
        %3358 = vmatprep.subr.bf16.mxu0 0
        %3359 = vmatpush2.bf16.msra.mxu0 0
        %3360 = vmatprep.subr.bf16.mxu0 0
        %3361 = vmatpush2.bf16.msra.mxu0 0
        %3362 = vmatprep.mubr.bf16.mxu0 0
        %3363 = vmatmul.mubr.bf16.gmra.mxu0 %v3325
        %v3364 = vpop.f32.mrf.mxu0
        %v3365 = vadd.f32 %v3322, %v3364
        %v3366 = vpop.f32.mrf.mxu0
        %v3367 = vpop.f32.mrf.mxu0
        %v3368 = vadd.f32 %v3322, %v3367
        %v3369 = vpop.f32.mrf.mxu0
        %3370 = vdwg.mxu0
        %v3371 = vmax.f32 %v3365, 0.0
        %v3372 = vmax.f32 %v3368, 0.0
        %v3373 = vpack.c.bf16 %v3372, %v3371
        %v3374 = vld [vmem:[%s23] sm:$0xf]
        %v3375 = vld [vmem:[%s23 + $0x4] sm:$0xf]
        %v3376 = vld [vmem:[%s25] sm:$0x1]
        %v3377 = vld [vmem:[%s31] sm:$0x1]
        %v3378 = vld [vmem:[%s33] sm:$0xf]
        %v3379 = vld [vmem:[%s35] sm:$0x1]
        %v3380 = vld [vmem:[%s37] sm:$0xf]
        %v3381 = vld [vmem:[%s37 + $0x4] sm:$0xf]
        %v3383 = vlaneseq
        %v3384 = vshrl.u32 %v3383, 7
        %v3385 = vsub.s32 0, %v3384
        %v3386 = vrot.slane %v3376, %v3385
        %v3390 = vunpack.c.l.b16 %v3374
        %v3391 = vunpack.c.l.b16 %v3375
        %v3392 = vpack.c.b16 %v3391, %v3390
        %vm3394 = vcmask 130048
        %v3396 = vsel %vm3394, %v3373, 0
        %3398 = vmatprep.subr.bf16.mxu0 0
        %3399 = vmatpush1.bf16.msra.mxu0 0
        %3400 = vmatprep.subr.bf16.mxu0 0
        %3401 = vmatpush1.bf16.msra.mxu0 0
        %3402 = vmatprep.subr.bf16.mxu0 0
        %3403 = vmatpush1.bf16.msra.mxu0 0
        %3404 = vmatprep.subr.bf16.mxu0 0
        %3405 = vmatpush1.bf16.msra.mxu0 0
        %3406 = vmatprep.subr.bf16.mxu0 0
        %3407 = vmatpush1.bf16.msra.mxu0 0
        %3408 = vmatprep.subr.bf16.mxu0 0
        %3409 = vmatpush1.bf16.msra.mxu0 0
        %3410 = vmatprep.subr.bf16.mxu0 0
        %3411 = vmatpush1.bf16.msra.mxu0 0
        %3412 = vmatprep.subr.bf16.mxu0 0
        %3413 = vmatpush1.bf16.msra.mxu0 %v3392
        %3414 = vmatprep.subr.bf16.mxu0 0
        %3415 = vmatpush2.bf16.msra.mxu0 0
        %3416 = vmatprep.subr.bf16.mxu0 0
        %3417 = vmatpush2.bf16.msra.mxu0 0
        %3418 = vmatprep.subr.bf16.mxu0 0
        %3419 = vmatpush2.bf16.msra.mxu0 0
        %3420 = vmatprep.subr.bf16.mxu0 0
        %3421 = vmatpush2.bf16.msra.mxu0 0
        %3422 = vmatprep.subr.bf16.mxu0 0
        %3423 = vmatpush2.bf16.msra.mxu0 0
        %3424 = vmatprep.subr.bf16.mxu0 0
        %3425 = vmatpush2.bf16.msra.mxu0 0
        %3426 = vmatprep.subr.bf16.mxu0 0
        %3427 = vmatpush2.bf16.msra.mxu0 0
        %3428 = vmatprep.subr.bf16.mxu0 0
        %3429 = vmatpush2.bf16.msra.mxu0 0
        %3430 = vmatprep.mubr.bf16.mxu0 0
        %3431 = vmatmul.mubr.bf16.gmra.mxu0 %v3396
        %v3432 = vpop.f32.mrf.mxu0
        %v3433 = vadd.f32 %v3386, %v3432
        %v3434 = vpop.f32.mrf.mxu0
        %v3435 = vpop.f32.mrf.mxu0
        %v3436 = vadd.f32 %v3386, %v3435
        %v3437 = vpop.f32.mrf.mxu0
        %3438 = vdwg.mxu0
        %v3439 = vmax.f32 %v3433, 0.0
        %v3440 = vmax.f32 %v3436, 0.0
        %v3441 = vpack.c.bf16 %v3440, %v3439
        %v3442 = vld [vmem:[%s27] sm:$0xf]
        %v3443 = vld [vmem:[%s27 + $0x4] sm:$0xf]
        %v3444 = vld [vmem:[%s27 + $0x8] sm:$0xf]
        %v3445 = vld [vmem:[%s27 + $0xc] sm:$0xf]
        %v3446 = vld [vmem:[%s27 + $0x10] sm:$0xf]
        %v3447 = vld [vmem:[%s27 + $0x14] sm:$0xf]
        %v3448 = vld [vmem:[%s27 + $0x18] sm:$0xf]
        %v3449 = vld [vmem:[%s27 + $0x1c] sm:$0xf]
        %v3450 = vld [vmem:[%s27 + $0x20] sm:$0xf]
        %v3451 = vld [vmem:[%s27 + $0x24] sm:$0xf]
        %v3452 = vld [vmem:[%s27 + $0x28] sm:$0xf]
        %v3453 = vld [vmem:[%s27 + $0x2c] sm:$0xf]
        %v3454 = vld [vmem:[%s27 + $0x30] sm:$0xf]
        %v3455 = vld [vmem:[%s27 + $0x34] sm:$0xf]
        %v3456 = vld [vmem:[%s27 + $0x38] sm:$0xf]
        %v3457 = vld [vmem:[%s27 + $0x3c] sm:$0xf]
        %v3474 = vunpack.c.l.b16 %v3442
        %v3475 = vunpack.c.l.b16 %v3443
        %v3476 = vunpack.c.l.b16 %v3444
        %v3477 = vunpack.c.l.b16 %v3445
        %v3478 = vunpack.c.l.b16 %v3446
        %v3479 = vunpack.c.l.b16 %v3447
        %v3480 = vunpack.c.l.b16 %v3448
        %v3481 = vunpack.c.l.b16 %v3449
        %v3482 = vunpack.c.l.b16 %v3450
        %v3483 = vunpack.c.l.b16 %v3451
        %v3484 = vunpack.c.l.b16 %v3452
        %v3485 = vunpack.c.l.b16 %v3453
        %v3486 = vunpack.c.l.b16 %v3454
        %v3487 = vunpack.c.l.b16 %v3455
        %v3488 = vunpack.c.l.b16 %v3456
        %v3489 = vunpack.c.l.b16 %v3457
        %v3490 = vpack.c.b16 %v3475, %v3474
        %v3491 = vpack.c.b16 %v3477, %v3476
        %v3492 = vpack.c.b16 %v3479, %v3478
        %v3493 = vpack.c.b16 %v3481, %v3480
        %v3494 = vpack.c.b16 %v3483, %v3482
        %v3495 = vpack.c.b16 %v3485, %v3484
        %v3496 = vpack.c.b16 %v3487, %v3486
        %v3497 = vpack.c.b16 %v3489, %v3488
        %v3499 = vsel %vm3394, %v3490, 0
        %v3502 = vsel %vm3394, %v3491, 0
        %v3505 = vsel %vm3394, %v3492, 0
        %v3508 = vsel %vm3394, %v3493, 0
        %v3511 = vsel %vm3394, %v3494, 0
        %v3514 = vsel %vm3394, %v3495, 0
        %v3517 = vsel %vm3394, %v3496, 0
        %v3520 = vsel %vm3394, %v3497, 0
        %3522 = vmatprep.subr.bf16.mxu0 0
        %3523 = vmatpush1.bf16.msra.mxu0 0
        %3524 = vmatprep.subr.bf16.mxu0 0
        %3525 = vmatpush1.bf16.msra.mxu0 0
        %3526 = vmatprep.subr.bf16.mxu0 0
        %3527 = vmatpush1.bf16.msra.mxu0 0
        %3528 = vmatprep.subr.bf16.mxu0 0
        %3529 = vmatpush1.bf16.msra.mxu0 0
        %3530 = vmatprep.subr.bf16.mxu0 0
        %3531 = vmatpush1.bf16.msra.mxu0 0
        %3532 = vmatprep.subr.bf16.mxu0 0
        %3533 = vmatpush1.bf16.msra.mxu0 0
        %3534 = vmatprep.subr.bf16.mxu0 0
        %3535 = vmatpush1.bf16.msra.mxu0 0
        %3536 = vmatprep.subr.bf16.mxu0 0
        %3537 = vmatpush1.bf16.msra.mxu0 %v3441
        %3538 = vmatprep.subr.bf16.mxu0 0
        %3539 = vmatpush2.bf16.msra.mxu0 0
        %3540 = vmatprep.subr.bf16.mxu0 0
        %3541 = vmatpush2.bf16.msra.mxu0 0
        %3542 = vmatprep.subr.bf16.mxu0 0
        %3543 = vmatpush2.bf16.msra.mxu0 0
        %3544 = vmatprep.subr.bf16.mxu0 0
        %3545 = vmatpush2.bf16.msra.mxu0 0
        %3546 = vmatprep.subr.bf16.mxu0 0
        %3547 = vmatpush2.bf16.msra.mxu0 0
        %3548 = vmatprep.subr.bf16.mxu0 0
        %3549 = vmatpush2.bf16.msra.mxu0 0
        %3550 = vmatprep.subr.bf16.mxu0 0
        %3551 = vmatpush2.bf16.msra.mxu0 0
        %3552 = vmatprep.subr.bf16.mxu0 0
        %3553 = vmatpush2.bf16.msra.mxu0 0
        %3554 = vmatprep.mubr.bf16.mxu0 0
        %3555 = vmatmul.mubr.bf16.gmra.mxu0 %v3499
        %v3556 = vpop.f32.mrf.mxu0
        %v3557 = vadd.f32 0.0, %v3556
        %v3558 = vpop.f32.mrf.mxu0
        %v3559 = vpop.f32.mrf.mxu0
        %v3560 = vadd.f32 0.0, %v3559
        %v3561 = vpop.f32.mrf.mxu0
        %3562 = vmatprep.mubr.bf16.mxu0 0
        %3563 = vmatmul.mubr.bf16.gmra.mxu0 %v3502
        %v3564 = vpop.f32.mrf.mxu0
        %v3565 = vadd.f32 0.0, %v3564
        %v3566 = vpop.f32.mrf.mxu0
        %v3567 = vpop.f32.mrf.mxu0
        %v3568 = vadd.f32 0.0, %v3567
        %v3569 = vpop.f32.mrf.mxu0
        %3570 = vmatprep.mubr.bf16.mxu0 0
        %3571 = vmatmul.mubr.bf16.gmra.mxu0 %v3505
        %v3572 = vpop.f32.mrf.mxu0
        %v3573 = vadd.f32 0.0, %v3572
        %v3574 = vpop.f32.mrf.mxu0
        %v3575 = vpop.f32.mrf.mxu0
        %v3576 = vadd.f32 0.0, %v3575
        %v3577 = vpop.f32.mrf.mxu0
        %3578 = vmatprep.mubr.bf16.mxu0 0
        %3579 = vmatmul.mubr.bf16.gmra.mxu0 %v3508
        %v3580 = vpop.f32.mrf.mxu0
        %v3581 = vadd.f32 0.0, %v3580
        %v3582 = vpop.f32.mrf.mxu0
        %v3583 = vpop.f32.mrf.mxu0
        %v3584 = vadd.f32 0.0, %v3583
        %v3585 = vpop.f32.mrf.mxu0
        %3586 = vmatprep.mubr.bf16.mxu0 0
        %3587 = vmatmul.mubr.bf16.gmra.mxu0 %v3511
        %v3588 = vpop.f32.mrf.mxu0
        %v3589 = vadd.f32 0.0, %v3588
        %v3590 = vpop.f32.mrf.mxu0
        %v3591 = vpop.f32.mrf.mxu0
        %v3592 = vadd.f32 0.0, %v3591
        %v3593 = vpop.f32.mrf.mxu0
        %3594 = vmatprep.mubr.bf16.mxu0 0
        %3595 = vmatmul.mubr.bf16.gmra.mxu0 %v3514
        %v3596 = vpop.f32.mrf.mxu0
        %v3597 = vadd.f32 0.0, %v3596
        %v3598 = vpop.f32.mrf.mxu0
        %v3599 = vpop.f32.mrf.mxu0
        %v3600 = vadd.f32 0.0, %v3599
        %v3601 = vpop.f32.mrf.mxu0
        %3602 = vmatprep.mubr.bf16.mxu0 0
        %3603 = vmatmul.mubr.bf16.gmra.mxu0 %v3517
        %v3604 = vpop.f32.mrf.mxu0
        %v3605 = vadd.f32 0.0, %v3604
        %v3606 = vpop.f32.mrf.mxu0
        %v3607 = vpop.f32.mrf.mxu0
        %v3608 = vadd.f32 0.0, %v3607
        %v3609 = vpop.f32.mrf.mxu0
        %3610 = vmatprep.mubr.bf16.mxu0 0
        %3611 = vmatmul.mubr.bf16.gmra.mxu0 %v3520
        %v3612 = vpop.f32.mrf.mxu0
        %v3613 = vadd.f32 0.0, %v3612
        %v3614 = vpop.f32.mrf.mxu0
        %v3615 = vpop.f32.mrf.mxu0
        %v3616 = vadd.f32 0.0, %v3615
        %v3617 = vpop.f32.mrf.mxu0
        %3618 = vdwg.mxu0
        %v3619 = vld [vmem:[%s29] sm:$0x1]
        %v3621 = vlaneseq
        %v3622 = vshrl.u32 %v3621, 7
        %v3623 = vsub.s32 0, %v3622
        %v3624 = vrot.slane %v3619, %v3623
        %v3626 = vmul.f32 %v3557, %v3624
        %v3627 = vmul.f32 %v3560, %v3624
        %s3628 = scalar_lea.vmem %s29, 1
        %v3629 = vld [vmem:[%s3628] sm:$0x1]
        %v3631 = vlaneseq
        %v3632 = vshrl.u32 %v3631, 7
        %v3633 = vsub.s32 0, %v3632
        %v3634 = vrot.slane %v3629, %v3633
        %v3636 = vmul.f32 %v3565, %v3634
        %v3637 = vmul.f32 %v3568, %v3634
        %v3638 = vadd.f32 %v3626, %v3636
        %v3639 = vadd.f32 %v3627, %v3637
        %s3640 = scalar_lea.vmem %s29, 2
        %v3641 = vld [vmem:[%s3640] sm:$0x1]
        %v3643 = vlaneseq
        %v3644 = vshrl.u32 %v3643, 7
        %v3645 = vsub.s32 0, %v3644
        %v3646 = vrot.slane %v3641, %v3645
        %v3648 = vmul.f32 %v3573, %v3646
        %v3649 = vmul.f32 %v3576, %v3646
        %v3650 = vadd.f32 %v3638, %v3648
        %v3651 = vadd.f32 %v3639, %v3649
        %s3652 = scalar_lea.vmem %s29, 3
        %v3653 = vld [vmem:[%s3652] sm:$0x1]
        %v3655 = vlaneseq
        %v3656 = vshrl.u32 %v3655, 7
        %v3657 = vsub.s32 0, %v3656
        %v3658 = vrot.slane %v3653, %v3657
        %v3660 = vmul.f32 %v3581, %v3658
        %v3661 = vmul.f32 %v3584, %v3658
        %v3662 = vadd.f32 %v3650, %v3660
        %v3663 = vadd.f32 %v3651, %v3661
        %s3664 = scalar_lea.vmem %s29, 5
        %v3665 = vld [vmem:[%s3664] sm:$0x1]
        %v3667 = vlaneseq
        %v3668 = vshrl.u32 %v3667, 7
        %v3669 = vsub.s32 0, %v3668
        %v3670 = vrot.slane %v3665, %v3669
        %v3672 = vmul.f32 %v3589, %v3670
        %v3673 = vmul.f32 %v3592, %v3670
        %v3674 = vadd.f32 %v3662, %v3672
        %v3675 = vadd.f32 %v3663, %v3673
        %s3676 = scalar_lea.vmem %s29, 6
        %v3677 = vld [vmem:[%s3676] sm:$0x1]
        %v3679 = vlaneseq
        %v3680 = vshrl.u32 %v3679, 7
        %v3681 = vsub.s32 0, %v3680
        %v3682 = vrot.slane %v3677, %v3681
        %v3684 = vmul.f32 %v3597, %v3682
        %v3685 = vmul.f32 %v3600, %v3682
        %v3686 = vadd.f32 %v3674, %v3684
        %v3687 = vadd.f32 %v3675, %v3685
        %s3688 = scalar_lea.vmem %s29, 7
        %v3689 = vld [vmem:[%s3688] sm:$0x1]
        %v3691 = vlaneseq
        %v3692 = vshrl.u32 %v3691, 7
        %v3693 = vsub.s32 0, %v3692
        %v3694 = vrot.slane %v3689, %v3693
        %v3696 = vmul.f32 %v3605, %v3694
        %v3697 = vmul.f32 %v3608, %v3694
        %v3698 = vadd.f32 %v3686, %v3696
        %v3699 = vadd.f32 %v3687, %v3697
        %s3700 = scalar_lea.vmem %s29, 8
        %v3701 = vld [vmem:[%s3700] sm:$0x1]
        %v3703 = vlaneseq
        %v3704 = vshrl.u32 %v3703, 7
        %v3705 = vsub.s32 0, %v3704
        %v3706 = vrot.slane %v3701, %v3705
        %v3708 = vmul.f32 %v3613, %v3706
        %v3709 = vmul.f32 %v3616, %v3706
        %v3710 = vadd.f32 %v3698, %v3708
        %v3711 = vadd.f32 %v3699, %v3709
        %s3712 = scalar_lea.vmem %s29, 4
        %v3713 = vld [vmem:[%s3712] sm:$0x1]
        %v3715 = vlaneseq
        %v3716 = vshrl.u32 %v3715, 7
        %v3717 = vsub.s32 0, %v3716
        %v3718 = vrot.slane %v3713, %v3717
        %v3720 = vmul.f32 %v3439, %v3718
        %v3721 = vmul.f32 %v3440, %v3718
        %v3722 = vadd.f32 %v3710, %v3720
        %v3723 = vadd.f32 %v3711, %v3721
        %v3725 = vlaneseq
        %v3726 = vshrl.u32 %v3725, 7
        %v3727 = vsub.s32 0, %v3726
        %v3728 = vrot.slane %v3377, %v3727
        %v3730 = vadd.f32 %v3722, %v3728
        %v3731 = vadd.f32 %v3723, %v3728
        %v3732 = vpack.c.bf16 %v3731, %v3730
        %v3734 = vlaneseq
        %v3735 = vshrl.u32 %v3734, 7
        %v3736 = vsub.s32 0, %v3735
        %v3737 = vrot.slane %v3379, %v3736
        %v3740 = vsel %vm2914, %v3732, 0
        %v3743 = vsel %vm2927, %v3378, 0
        %3745 = vmatprep.subr.bf16.mxu0 0
        %3746 = vmatpush1.bf16.msra.mxu0 0
        %3747 = vmatprep.subr.bf16.mxu0 0
        %3748 = vmatpush1.bf16.msra.mxu0 0
        %3749 = vmatprep.subr.bf16.mxu0 0
        %3750 = vmatpush1.bf16.msra.mxu0 0
        %3751 = vmatprep.subr.bf16.mxu0 0
        %3752 = vmatpush1.bf16.msra.mxu0 0
        %3753 = vmatprep.subr.bf16.mxu0 0
        %3754 = vmatpush1.bf16.msra.mxu0 0
        %3755 = vmatprep.subr.bf16.mxu0 0
        %3756 = vmatpush1.bf16.msra.mxu0 0
        %3757 = vmatprep.subr.bf16.mxu0 0
        %3758 = vmatpush1.bf16.msra.mxu0 0
        %3759 = vmatprep.subr.bf16.mxu0 0
        %3760 = vmatpush1.bf16.msra.mxu0 %v3743
        %3761 = vmatprep.subr.bf16.mxu0 0
        %3762 = vmatpush2.bf16.msra.mxu0 0
        %3763 = vmatprep.subr.bf16.mxu0 0
        %3764 = vmatpush2.bf16.msra.mxu0 0
        %3765 = vmatprep.subr.bf16.mxu0 0
        %3766 = vmatpush2.bf16.msra.mxu0 0
        %3767 = vmatprep.subr.bf16.mxu0 0
        %3768 = vmatpush2.bf16.msra.mxu0 0
        %3769 = vmatprep.subr.bf16.mxu0 0
        %3770 = vmatpush2.bf16.msra.mxu0 0
        %3771 = vmatprep.subr.bf16.mxu0 0
        %3772 = vmatpush2.bf16.msra.mxu0 0
        %3773 = vmatprep.subr.bf16.mxu0 0
        %3774 = vmatpush2.bf16.msra.mxu0 0
        %3775 = vmatprep.subr.bf16.mxu0 0
        %3776 = vmatpush2.bf16.msra.mxu0 0
        %3777 = vmatprep.mubr.bf16.mxu0 0
        %3778 = vmatmul.mubr.bf16.gmra.mxu0 %v3740
        %v3779 = vpop.f32.mrf.mxu0
        %v3780 = vadd.f32 %v3737, %v3779
        %v3781 = vpop.f32.mrf.mxu0
        %v3782 = vpop.f32.mrf.mxu0
        %v3783 = vadd.f32 %v3737, %v3782
        %v3784 = vpop.f32.mrf.mxu0
        %3785 = vdwg.mxu0
        %v3786 = vmax.f32 %v3780, 0.0
        %v3787 = vmax.f32 %v3783, 0.0
        %v3790 = vunpack.c.l.b16 %v3380
        %v3791 = vunpack.c.l.b16 %v3381
        %v3792 = vpack.c.b16 %v3791, %v3790
        %3794 = vmatprep.subr.bf16.mxu0 0
        %3795 = vmatpush1.bf16.msra.mxu0 0
        %3796 = vmatprep.subr.bf16.mxu0 0
        %3797 = vmatpush1.bf16.msra.mxu0 0
        %3798 = vmatprep.subr.bf16.mxu0 0
        %3799 = vmatpush1.bf16.msra.mxu0 0
        %3800 = vmatprep.subr.bf16.mxu0 0
        %3801 = vmatpush1.bf16.msra.mxu0 0
        %3802 = vmatprep.subr.bf16.mxu0 0
        %3803 = vmatpush1.bf16.msra.mxu0 0
        %3804 = vmatprep.subr.bf16.mxu0 0
        %3805 = vmatpush1.bf16.msra.mxu0 0
        %3806 = vmatprep.subr.bf16.mxu0 0
        %3807 = vmatpush1.bf16.msra.mxu0 0
        %3808 = vmatprep.subr.bf16.mxu0 0
        %3809 = vmatpush1.bf16.msra.mxu0 %v3792
        %3810 = vmatprep.subr.bf16.mxu0 0
        %3811 = vmatpush2.bf16.msra.mxu0 0
        %3812 = vmatprep.subr.bf16.mxu0 0
        %3813 = vmatpush2.bf16.msra.mxu0 0
        %3814 = vmatprep.subr.bf16.mxu0 0
        %3815 = vmatpush2.bf16.msra.mxu0 0
        %3816 = vmatprep.subr.bf16.mxu0 0
        %3817 = vmatpush2.bf16.msra.mxu0 0
        %3818 = vmatprep.subr.bf16.mxu0 0
        %3819 = vmatpush2.bf16.msra.mxu0 0
        %3820 = vmatprep.subr.bf16.mxu0 0
        %3821 = vmatpush2.bf16.msra.mxu0 0
        %3822 = vmatprep.subr.bf16.mxu0 0
        %3823 = vmatpush2.bf16.msra.mxu0 0
        %3824 = vmatprep.subr.bf16.mxu0 0
        %3825 = vmatpush2.bf16.msra.mxu0 0
        %3826 = vmatprep.mubr.bf16.mxu0 0
        %3827 = vmatmul.mubr.bf16.gmra.mxu0 %v3396
        %v3828 = vpop.f32.mrf.mxu0
        %v3829 = vadd.f32 0.0, %v3828
        %v3830 = vpop.f32.mrf.mxu0
        %v3831 = vpop.f32.mrf.mxu0
        %v3832 = vadd.f32 0.0, %v3831
        %v3833 = vpop.f32.mrf.mxu0
        %3834 = vdwg.mxu0
        %v3835 = vadd.f32 %v3786, %v3829
        %v3836 = vadd.f32 %v3787, %v3832
        %v3837 = vpack.c.bf16 %v3836, %v3835
        %v3838 = vld [vmem:[%s39] sm:$0xf]
        %v3839 = vld [vmem:[%s39 + $0x4] sm:$0xf]
        %v3840 = vld [vmem:[%s41] sm:$0x1]
        %v3841 = vld [vmem:[#allocation2] sm:$0x1]
        %v3842 = vld [vmem:[%s49] sm:$0xf]
        %v3843 = vld [vmem:[%s49 + $0x4] sm:$0xf]
        %v3844 = vld [vmem:[#allocation5] sm:$0x1]
        %v3846 = vlaneseq
        %v3847 = vshrl.u32 %v3846, 7
        %v3848 = vsub.s32 0, %v3847
        %v3849 = vrot.slane %v3840, %v3848
        %v3853 = vunpack.c.l.b16 %v3838
        %v3854 = vunpack.c.l.b16 %v3839
        %v3855 = vpack.c.b16 %v3854, %v3853
        %v3858 = vsel %vm3394, %v3837, 0
        %3860 = vmatprep.subr.bf16.mxu0 0
        %3861 = vmatpush1.bf16.msra.mxu0 0
        %3862 = vmatprep.subr.bf16.mxu0 0
        %3863 = vmatpush1.bf16.msra.mxu0 0
        %3864 = vmatprep.subr.bf16.mxu0 0
        %3865 = vmatpush1.bf16.msra.mxu0 0
        %3866 = vmatprep.subr.bf16.mxu0 0
        %3867 = vmatpush1.bf16.msra.mxu0 0
        %3868 = vmatprep.subr.bf16.mxu0 0
        %3869 = vmatpush1.bf16.msra.mxu0 0
        %3870 = vmatprep.subr.bf16.mxu0 0
        %3871 = vmatpush1.bf16.msra.mxu0 0
        %3872 = vmatprep.subr.bf16.mxu0 0
        %3873 = vmatpush1.bf16.msra.mxu0 0
        %3874 = vmatprep.subr.bf16.mxu0 0
        %3875 = vmatpush1.bf16.msra.mxu0 %v3855
        %3876 = vmatprep.subr.bf16.mxu0 0
        %3877 = vmatpush2.bf16.msra.mxu0 0
        %3878 = vmatprep.subr.bf16.mxu0 0
        %3879 = vmatpush2.bf16.msra.mxu0 0
        %3880 = vmatprep.subr.bf16.mxu0 0
        %3881 = vmatpush2.bf16.msra.mxu0 0
        %3882 = vmatprep.subr.bf16.mxu0 0
        %3883 = vmatpush2.bf16.msra.mxu0 0
        %3884 = vmatprep.subr.bf16.mxu0 0
        %3885 = vmatpush2.bf16.msra.mxu0 0
        %3886 = vmatprep.subr.bf16.mxu0 0
        %3887 = vmatpush2.bf16.msra.mxu0 0
        %3888 = vmatprep.subr.bf16.mxu0 0
        %3889 = vmatpush2.bf16.msra.mxu0 0
        %3890 = vmatprep.subr.bf16.mxu0 0
        %3891 = vmatpush2.bf16.msra.mxu0 0
        %3892 = vmatprep.mubr.bf16.mxu0 0
        %3893 = vmatmul.mubr.bf16.gmra.mxu0 %v3858
        %v3894 = vpop.f32.mrf.mxu0
        %v3895 = vadd.f32 %v3849, %v3894
        %v3896 = vpop.f32.mrf.mxu0
        %v3897 = vpop.f32.mrf.mxu0
        %v3898 = vadd.f32 %v3849, %v3897
        %v3899 = vpop.f32.mrf.mxu0
        %3900 = vdwg.mxu0
        %v3901 = vmax.f32 %v3895, 0.0
        %v3902 = vmax.f32 %v3898, 0.0
        %v3903 = vpack.c.bf16 %v3902, %v3901
        %v3904 = vld [vmem:[%s43] sm:$0xf]
        %v3905 = vld [vmem:[%s43 + $0x4] sm:$0xf]
        %v3906 = vld [vmem:[%s43 + $0x8] sm:$0xf]
        %v3907 = vld [vmem:[%s43 + $0xc] sm:$0xf]
        %v3908 = vld [vmem:[%s43 + $0x10] sm:$0x3]
        %v3914 = vunpack.c.l.b16 %v3904
        %v3915 = vunpack.c.l.b16 %v3905
        %v3916 = vunpack.c.l.b16 %v3906
        %v3917 = vunpack.c.l.b16 %v3907
        %v3918 = vunpack.c.l.b16 %v3908
        %v3919 = vpack.c.b16 %v3915, %v3914
        %v3920 = vpack.c.b16 %v3917, %v3916
        %v3921 = vpack.c.b16 %v3918, %v3918
        %v3923 = vsel %vm3394, %v3919, 0
        %v3926 = vsel %vm3394, %v3920, 0
        %v3929 = vsel %vm3394, %v3921, 0
        %3931 = vmatprep.subr.bf16.mxu0 0
        %3932 = vmatpush1.bf16.msra.mxu0 0
        %3933 = vmatprep.subr.bf16.mxu0 0
        %3934 = vmatpush1.bf16.msra.mxu0 0
        %3935 = vmatprep.subr.bf16.mxu0 0
        %3936 = vmatpush1.bf16.msra.mxu0 0
        %3937 = vmatprep.subr.bf16.mxu0 0
        %3938 = vmatpush1.bf16.msra.mxu0 0
        %3939 = vmatprep.subr.bf16.mxu0 0
        %3940 = vmatpush1.bf16.msra.mxu0 0
        %3941 = vmatprep.subr.bf16.mxu0 0
        %3942 = vmatpush1.bf16.msra.mxu0 0
        %3943 = vmatprep.subr.bf16.mxu0 0
        %3944 = vmatpush1.bf16.msra.mxu0 0
        %3945 = vmatprep.subr.bf16.mxu0 0
        %3946 = vmatpush1.bf16.msra.mxu0 %v3903
        %3947 = vmatprep.subr.bf16.mxu0 0
        %3948 = vmatpush2.bf16.msra.mxu0 0
        %3949 = vmatprep.subr.bf16.mxu0 0
        %3950 = vmatpush2.bf16.msra.mxu0 0
        %3951 = vmatprep.subr.bf16.mxu0 0
        %3952 = vmatpush2.bf16.msra.mxu0 0
        %3953 = vmatprep.subr.bf16.mxu0 0
        %3954 = vmatpush2.bf16.msra.mxu0 0
        %3955 = vmatprep.subr.bf16.mxu0 0
        %3956 = vmatpush2.bf16.msra.mxu0 0
        %3957 = vmatprep.subr.bf16.mxu0 0
        %3958 = vmatpush2.bf16.msra.mxu0 0
        %3959 = vmatprep.subr.bf16.mxu0 0
        %3960 = vmatpush2.bf16.msra.mxu0 0
        %3961 = vmatprep.subr.bf16.mxu0 0
        %3962 = vmatpush2.bf16.msra.mxu0 0
        %3963 = vmatprep.mubr.bf16.mxu0 0
        %3964 = vmatmul.mubr.bf16.gmra.mxu0 %v3923
        %v3965 = vpop.f32.mrf.mxu0
        %v3966 = vadd.f32 0.0, %v3965
        %v3967 = vpop.f32.mrf.mxu0
        %v3968 = vpop.f32.mrf.mxu0
        %v3969 = vadd.f32 0.0, %v3968
        %v3970 = vpop.f32.mrf.mxu0
        %3971 = vmatprep.mubr.bf16.mxu0 0
        %3972 = vmatmul.mubr.bf16.gmra.mxu0 %v3926
        %v3973 = vpop.f32.mrf.mxu0
        %v3974 = vadd.f32 0.0, %v3973
        %v3975 = vpop.f32.mrf.mxu0
        %v3976 = vpop.f32.mrf.mxu0
        %v3977 = vadd.f32 0.0, %v3976
        %v3978 = vpop.f32.mrf.mxu0
        %3979 = vmatprep.mubr.bf16.mxu0 0
        %3980 = vmatmul.mubr.bf16.gmra.mxu0 %v3929
        %v3981 = vpop.f32.mrf.mxu0
        %v3982 = vadd.f32 0.0, %v3981
        %v3983 = vpop.f32.mrf.mxu0
        %v3984 = vpop.f32.mrf.mxu0
        %v3985 = vpop.f32.mrf.mxu0
        %3986 = vdwg.mxu0
        %v3987 = vld [vmem:[%s45] sm:$0x1]
        %v3989 = vlaneseq
        %v3990 = vshrl.u32 %v3989, 7
        %v3991 = vsub.s32 0, %v3990
        %v3992 = vrot.slane %v3987, %v3991
        %v3994 = vmul.f32 %v3966, %v3992
        %s3995 = scalar_lea.vmem %s45, 1
        %v3996 = vld [vmem:[%s3995] sm:$0x1]
        %v3998 = vlaneseq
        %v3999 = vshrl.u32 %v3998, 7
        %v4000 = vsub.s32 0, %v3999
        %v4001 = vrot.slane %v3996, %v4000
        %v4003 = vmul.f32 %v3966, %v4001
        %v4005 = vrot.slane %v4003, 4
        %v4007 = vadd.f32 %v3994, %v4005
        %s4008 = scalar_lea.vmem %s45, 2
        %v4009 = vld [vmem:[%s4008] sm:$0x1]
        %v4011 = vlaneseq
        %v4012 = vshrl.u32 %v4011, 7
        %v4013 = vsub.s32 0, %v4012
        %v4014 = vrot.slane %v4009, %v4013
        %v4016 = vmul.f32 %v3969, %v4014
        %v4017 = vadd.f32 %v4007, %v4016
        %s4018 = scalar_lea.vmem %s45, 3
        %v4019 = vld [vmem:[%s4018] sm:$0x1]
        %v4021 = vlaneseq
        %v4022 = vshrl.u32 %v4021, 7
        %v4023 = vsub.s32 0, %v4022
        %v4024 = vrot.slane %v4019, %v4023
        %v4026 = vmul.f32 %v3969, %v4024
        %v4028 = vrot.slane %v4026, 4
        %v4030 = vadd.f32 %v4017, %v4028
        %s4031 = scalar_lea.vmem %s45, 4
        %v4032 = vld [vmem:[%s4031] sm:$0x1]
        %v4034 = vlaneseq
        %v4035 = vshrl.u32 %v4034, 7
        %v4036 = vsub.s32 0, %v4035
        %v4037 = vrot.slane %v4032, %v4036
        %v4039 = vmul.f32 %v3974, %v4037
        %v4040 = vadd.f32 %v4030, %v4039
        %s4041 = scalar_lea.vmem %s45, 5
        %v4042 = vld [vmem:[%s4041] sm:$0x1]
        %v4044 = vlaneseq
        %v4045 = vshrl.u32 %v4044, 7
        %v4046 = vsub.s32 0, %v4045
        %v4047 = vrot.slane %v4042, %v4046
        %v4049 = vmul.f32 %v3974, %v4047
        %v4051 = vrot.slane %v4049, 4
        %v4053 = vadd.f32 %v4040, %v4051
        %s4054 = scalar_lea.vmem %s45, 6
        %v4055 = vld [vmem:[%s4054] sm:$0x1]
        %v4057 = vlaneseq
        %v4058 = vshrl.u32 %v4057, 7
        %v4059 = vsub.s32 0, %v4058
        %v4060 = vrot.slane %v4055, %v4059
        %v4062 = vmul.f32 %v3977, %v4060
        %v4063 = vadd.f32 %v4053, %v4062
        %s4064 = scalar_lea.vmem %s45, 7
        %v4065 = vld [vmem:[%s4064] sm:$0x1]
        %v4067 = vlaneseq
        %v4068 = vshrl.u32 %v4067, 7
        %v4069 = vsub.s32 0, %v4068
        %v4070 = vrot.slane %v4065, %v4069
        %v4072 = vmul.f32 %v3977, %v4070
        %v4074 = vrot.slane %v4072, 4
        %v4076 = vadd.f32 %v4063, %v4074
        %s4077 = scalar_lea.vmem %s45, 8
        %v4078 = vld [vmem:[%s4077] sm:$0x1]
        %v4080 = vlaneseq
        %v4081 = vshrl.u32 %v4080, 7
        %v4082 = vsub.s32 0, %v4081
        %v4083 = vrot.slane %v4078, %v4082
        %v4085 = vmul.f32 %v3982, %v4083
        %v4086 = vadd.f32 %v4076, %v4085
        %v4088 = vlaneseq
        %v4089 = vshrl.u32 %v4088, 7
        %v4090 = vsub.s32 0, %v4089
        %v4091 = vrot.slane %v3841, %v4090
        %v4093 = vadd.f32 %v4086, %v4091
        %v4094 = vpack.c.bf16 %v4093, %v4093
        %v4096 = vlaneseq
        %v4097 = vshrl.u32 %v4096, 7
        %v4098 = vsub.s32 0, %v4097
        %v4099 = vrot.slane %v3844, %v4098
        %v4103 = vunpack.c.l.b16 %v3842
        %v4104 = vunpack.c.l.b16 %v3843
        %v4105 = vpack.c.b16 %v4104, %v4103
        %v4108 = vsel %vm3394, %v4094, 0
        %4110 = vmatprep.subr.bf16.mxu0 0
        %4111 = vmatpush1.bf16.msra.mxu0 0
        %4112 = vmatprep.subr.bf16.mxu0 0
        %4113 = vmatpush1.bf16.msra.mxu0 0
        %4114 = vmatprep.subr.bf16.mxu0 0
        %4115 = vmatpush1.bf16.msra.mxu0 0
        %4116 = vmatprep.subr.bf16.mxu0 0
        %4117 = vmatpush1.bf16.msra.mxu0 0
        %4118 = vmatprep.subr.bf16.mxu0 0
        %4119 = vmatpush1.bf16.msra.mxu0 0
        %4120 = vmatprep.subr.bf16.mxu0 0
        %4121 = vmatpush1.bf16.msra.mxu0 0
        %4122 = vmatprep.subr.bf16.mxu0 0
        %4123 = vmatpush1.bf16.msra.mxu0 0
        %4124 = vmatprep.subr.bf16.mxu0 0
        %4125 = vmatpush1.bf16.msra.mxu0 %v4105
        %4126 = vmatprep.subr.bf16.mxu0 0
        %4127 = vmatpush2.bf16.msra.mxu0 0
        %4128 = vmatprep.subr.bf16.mxu0 0
        %4129 = vmatpush2.bf16.msra.mxu0 0
        %4130 = vmatprep.subr.bf16.mxu0 0
        %4131 = vmatpush2.bf16.msra.mxu0 0
        %4132 = vmatprep.subr.bf16.mxu0 0
        %4133 = vmatpush2.bf16.msra.mxu0 0
        %4134 = vmatprep.subr.bf16.mxu0 0
        %4135 = vmatpush2.bf16.msra.mxu0 0
        %4136 = vmatprep.subr.bf16.mxu0 0
        %4137 = vmatpush2.bf16.msra.mxu0 0
        %4138 = vmatprep.subr.bf16.mxu0 0
        %4139 = vmatpush2.bf16.msra.mxu0 0
        %4140 = vmatprep.subr.bf16.mxu0 0
        %4141 = vmatpush2.bf16.msra.mxu0 0
        %4142 = vmatprep.mubr.bf16.mxu0 0
        %4143 = vmatmul.mubr.bf16.gmra.mxu0 %v4108
        %v4144 = vpop.f32.mrf.mxu0
        %v4145 = vadd.f32 %v4099, %v4144
        %v4146 = vpop.f32.mrf.mxu0
        %v4147 = vpop.f32.mrf.mxu0
        %v4148 = vpop.f32.mrf.mxu0
        %4149 = vdwg.mxu0
        %v4150 = vmax.f32 %v4145, 0.0
        %v4151 = vpack.c.bf16 %v4150, %v4150
        %v4152 = vld [vmem:[%s53] sm:$0xf]
        %v4153 = vld [vmem:[%s53 + $0x4] sm:$0xf]
        %v4154 = vld [vmem:[%s53 + $0x8] sm:$0xf]
        %v4155 = vld [vmem:[%s53 + $0xc] sm:$0xf]
        %v4156 = vld [vmem:[#allocation7] sm:$0x1]
        %v4157 = vld [vmem:[#allocation8] sm:$0x1]
        %v4158 = vld [vmem:[%s63] sm:$0xf]
        %v4159 = vld [vmem:[%s63 + $0x4] sm:$0xf]
        %v4160 = vld [vmem:[#allocation10] sm:$0x1]
        %v4161 = vld [vmem:[%s67] sm:$0xf]
        %v4162 = vld [vmem:[%s67 + $0x4] sm:$0xf]
        %v4163 = vld [vmem:[%s67 + $0x8] sm:$0xf]
        %v4164 = vld [vmem:[%s67 + $0xc] sm:$0xf]
        %v4166 = vlaneseq
        %v4167 = vshrl.u32 %v4166, 7
        %v4168 = vsub.s32 0, %v4167
        %v4169 = vrot.slane %v4156, %v4168
        %v4175 = vunpack.c.l.b16 %v4152
        %v4176 = vunpack.c.l.b16 %v4153
        %v4177 = vunpack.c.l.b16 %v4154
        %v4178 = vunpack.c.l.b16 %v4155
        %v4179 = vpack.c.b16 %v4176, %v4175
        %v4180 = vpack.c.b16 %v4178, %v4177
        %vm4183 = vcmask 261120
        %v4185 = vsel %vm4183, %v4151, 0
        %4187 = vmatprep.subr.bf16.mxu0 0
        %4188 = vmatpush1.bf16.msra.mxu0 0
        %4189 = vmatprep.subr.bf16.mxu0 0
        %4190 = vmatpush1.bf16.msra.mxu0 0
        %4191 = vmatprep.subr.bf16.mxu0 0
        %4192 = vmatpush1.bf16.msra.mxu0 0
        %4193 = vmatprep.subr.bf16.mxu0 0
        %4194 = vmatpush1.bf16.msra.mxu0 0
        %4195 = vmatprep.subr.bf16.mxu0 0
        %4196 = vmatpush1.bf16.msra.mxu0 0
        %4197 = vmatprep.subr.bf16.mxu0 0
        %4198 = vmatpush1.bf16.msra.mxu0 0
        %4199 = vmatprep.subr.bf16.mxu0 0
        %4200 = vmatpush1.bf16.msra.mxu0 %v4180
        %4201 = vmatprep.subr.bf16.mxu0 0
        %4202 = vmatpush1.bf16.msra.mxu0 %v4179
        %4203 = vmatprep.subr.bf16.mxu0 0
        %4204 = vmatpush2.bf16.msra.mxu0 0
        %4205 = vmatprep.subr.bf16.mxu0 0
        %4206 = vmatpush2.bf16.msra.mxu0 0
        %4207 = vmatprep.subr.bf16.mxu0 0
        %4208 = vmatpush2.bf16.msra.mxu0 0
        %4209 = vmatprep.subr.bf16.mxu0 0
        %4210 = vmatpush2.bf16.msra.mxu0 0
        %4211 = vmatprep.subr.bf16.mxu0 0
        %4212 = vmatpush2.bf16.msra.mxu0 0
        %4213 = vmatprep.subr.bf16.mxu0 0
        %4214 = vmatpush2.bf16.msra.mxu0 0
        %4215 = vmatprep.subr.bf16.mxu0 0
        %4216 = vmatpush2.bf16.msra.mxu0 0
        %4217 = vmatprep.subr.bf16.mxu0 0
        %4218 = vmatpush2.bf16.msra.mxu0 0
        %4219 = vmatprep.mubr.bf16.mxu0 0
        %4220 = vmatmul.mubr.bf16.gmra.mxu0 %v4185
        %v4221 = vpop.f32.mrf.mxu0
        %v4222 = vadd.f32 %v4169, %v4221
        %v4223 = vpop.f32.mrf.mxu0
        %v4224 = vpop.f32.mrf.mxu0
        %v4225 = vpop.f32.mrf.mxu0
        %4226 = vdwg.mxu0
        %v4227 = vmax.f32 %v4222, 0.0
        %v4228 = vpack.c.bf16 %v4227, %v4227
        %v4229 = vld [vmem:[%s57] sm:$0xf]
        %v4230 = vld [vmem:[%s57 + $0x4] sm:$0xf]
        %v4231 = vld [vmem:[%s57 + $0x8] sm:$0xf]
        %v4232 = vld [vmem:[%s57 + $0xc] sm:$0xf]
        %v4237 = vunpack.c.l.b16 %v4229
        %v4238 = vunpack.c.l.b16 %v4230
        %v4239 = vunpack.c.l.b16 %v4231
        %v4240 = vunpack.c.l.b16 %v4232
        %v4241 = vpack.c.b16 %v4238, %v4237
        %v4242 = vpack.c.b16 %v4240, %v4239
        %vm4243 = vcmask 31744
        %v4245 = vsel %vm4243, %v4241, 0
        %v4248 = vsel %vm4243, %v4242, 0
        %vm4250 = vcmask 1041408
        %v4252 = vsel %vm4250, %v4228, 0
        %4254 = vmatprep.subr.bf16.mxu0 0
        %4255 = vmatpush1.bf16.msra.mxu0 0
        %4256 = vmatprep.subr.bf16.mxu0 0
        %4257 = vmatpush1.bf16.msra.mxu0 0
        %4258 = vmatprep.subr.bf16.mxu0 0
        %4259 = vmatpush1.bf16.msra.mxu0 0
        %4260 = vmatprep.subr.bf16.mxu0 0
        %4261 = vmatpush1.bf16.msra.mxu0 0
        %4262 = vmatprep.subr.bf16.mxu0 0
        %4263 = vmatpush1.bf16.msra.mxu0 0
        %4264 = vmatprep.subr.bf16.mxu0 0
        %4265 = vmatpush1.bf16.msra.mxu0 0
        %4266 = vmatprep.subr.bf16.mxu0 0
        %4267 = vmatpush1.bf16.msra.mxu0 0
        %4268 = vmatprep.subr.bf16.mxu0 0
        %4269 = vmatpush1.bf16.msra.mxu0 %v4252
        %4270 = vmatprep.subr.bf16.mxu0 0
        %4271 = vmatpush2.bf16.msra.mxu0 0
        %4272 = vmatprep.subr.bf16.mxu0 0
        %4273 = vmatpush2.bf16.msra.mxu0 0
        %4274 = vmatprep.subr.bf16.mxu0 0
        %4275 = vmatpush2.bf16.msra.mxu0 0
        %4276 = vmatprep.subr.bf16.mxu0 0
        %4277 = vmatpush2.bf16.msra.mxu0 0
        %4278 = vmatprep.subr.bf16.mxu0 0
        %4279 = vmatpush2.bf16.msra.mxu0 0
        %4280 = vmatprep.subr.bf16.mxu0 0
        %4281 = vmatpush2.bf16.msra.mxu0 0
        %4282 = vmatprep.subr.bf16.mxu0 0
        %4283 = vmatpush2.bf16.msra.mxu0 0
        %4284 = vmatprep.subr.bf16.mxu0 0
        %4285 = vmatpush2.bf16.msra.mxu0 0
        %4286 = vmatprep.mubr.bf16.mxu0 0
        %4287 = vmatmul.mubr.bf16.gmra.mxu0 %v4245
        %v4288 = vpop.f32.mrf.mxu0
        %v4289 = vadd.f32 0.0, %v4288
        %v4290 = vpop.f32.mrf.mxu0
        %v4291 = vpop.f32.mrf.mxu0
        %v4292 = vadd.f32 0.0, %v4291
        %v4293 = vpop.f32.mrf.mxu0
        %4294 = vmatprep.mubr.bf16.mxu0 0
        %4295 = vmatmul.mubr.bf16.gmra.mxu0 %v4248
        %v4296 = vpop.f32.mrf.mxu0
        %v4297 = vadd.f32 0.0, %v4296
        %v4298 = vpop.f32.mrf.mxu0
        %v4299 = vpop.f32.mrf.mxu0
        %v4300 = vadd.f32 0.0, %v4299
        %v4301 = vpop.f32.mrf.mxu0
        %4302 = vdwg.mxu0
        %v4303 = vld [vmem:[%s59] sm:$0x1]
        %v4305 = vlaneseq
        %v4306 = vshrl.u32 %v4305, 7
        %v4307 = vsub.s32 0, %v4306
        %v4308 = vrot.slane %v4303, %v4307
        %v4310 = vmul.f32 %v4289, %v4308
        %s4311 = scalar_lea.vmem %s59, 1
        %v4312 = vld [vmem:[%s4311] sm:$0x1]
        %v4314 = vlaneseq
        %v4315 = vshrl.u32 %v4314, 7
        %v4316 = vsub.s32 0, %v4315
        %v4317 = vrot.slane %v4312, %v4316
        %v4319 = vmul.f32 %v4289, %v4317
        %v4321 = vrot.slane %v4319, 4
        %v4323 = vadd.f32 %v4310, %v4321
        %s4324 = scalar_lea.vmem %s59, 2
        %v4325 = vld [vmem:[%s4324] sm:$0x1]
        %v4327 = vlaneseq
        %v4328 = vshrl.u32 %v4327, 7
        %v4329 = vsub.s32 0, %v4328
        %v4330 = vrot.slane %v4325, %v4329
        %v4332 = vmul.f32 %v4292, %v4330
        %v4333 = vadd.f32 %v4323, %v4332
        %s4334 = scalar_lea.vmem %s59, 3
        %v4335 = vld [vmem:[%s4334] sm:$0x1]
        %v4337 = vlaneseq
        %v4338 = vshrl.u32 %v4337, 7
        %v4339 = vsub.s32 0, %v4338
        %v4340 = vrot.slane %v4335, %v4339
        %v4342 = vmul.f32 %v4292, %v4340
        %v4344 = vrot.slane %v4342, 4
        %v4346 = vadd.f32 %v4333, %v4344
        %s4347 = scalar_lea.vmem %s59, 5
        %v4348 = vld [vmem:[%s4347] sm:$0x1]
        %v4350 = vlaneseq
        %v4351 = vshrl.u32 %v4350, 7
        %v4352 = vsub.s32 0, %v4351
        %v4353 = vrot.slane %v4348, %v4352
        %v4355 = vmul.f32 %v4297, %v4353
        %v4356 = vadd.f32 %v4346, %v4355
        %s4357 = scalar_lea.vmem %s59, 6
        %v4358 = vld [vmem:[%s4357] sm:$0x1]
        %v4360 = vlaneseq
        %v4361 = vshrl.u32 %v4360, 7
        %v4362 = vsub.s32 0, %v4361
        %v4363 = vrot.slane %v4358, %v4362
        %v4365 = vmul.f32 %v4297, %v4363
        %v4367 = vrot.slane %v4365, 4
        %v4369 = vadd.f32 %v4356, %v4367
        %s4370 = scalar_lea.vmem %s59, 7
        %v4371 = vld [vmem:[%s4370] sm:$0x1]
        %v4373 = vlaneseq
        %v4374 = vshrl.u32 %v4373, 7
        %v4375 = vsub.s32 0, %v4374
        %v4376 = vrot.slane %v4371, %v4375
        %v4378 = vmul.f32 %v4300, %v4376
        %v4379 = vadd.f32 %v4369, %v4378
        %s4380 = scalar_lea.vmem %s59, 8
        %v4381 = vld [vmem:[%s4380] sm:$0x1]
        %v4383 = vlaneseq
        %v4384 = vshrl.u32 %v4383, 7
        %v4385 = vsub.s32 0, %v4384
        %v4386 = vrot.slane %v4381, %v4385
        %v4388 = vmul.f32 %v4300, %v4386
        %v4390 = vrot.slane %v4388, 4
        %v4392 = vadd.f32 %v4379, %v4390
        %s4393 = scalar_lea.vmem %s59, 4
        %v4394 = vld [vmem:[%s4393] sm:$0x1]
        %v4396 = vlaneseq
        %v4397 = vshrl.u32 %v4396, 7
        %v4398 = vsub.s32 0, %v4397
        %v4399 = vrot.slane %v4394, %v4398
        %v4401 = vmul.f32 %v4227, %v4399
        %v4402 = vadd.f32 %v4392, %v4401
        %v4404 = vlaneseq
        %v4405 = vshrl.u32 %v4404, 7
        %v4406 = vsub.s32 0, %v4405
        %v4407 = vrot.slane %v4157, %v4406
        %v4409 = vadd.f32 %v4402, %v4407
        %v4410 = vpack.c.bf16 %v4409, %v4409
        %v4412 = vlaneseq
        %v4413 = vshrl.u32 %v4412, 7
        %v4414 = vsub.s32 0, %v4413
        %v4415 = vrot.slane %v4160, %v4414
        %v4419 = vunpack.c.l.b16 %v4158
        %v4420 = vunpack.c.l.b16 %v4159
        %v4421 = vpack.c.b16 %v4420, %v4419
        %v4424 = vsel %vm3394, %v4410, 0
        %4426 = vmatprep.subr.bf16.mxu0 0
        %4427 = vmatpush1.bf16.msra.mxu0 0
        %4428 = vmatprep.subr.bf16.mxu0 0
        %4429 = vmatpush1.bf16.msra.mxu0 0
        %4430 = vmatprep.subr.bf16.mxu0 0
        %4431 = vmatpush1.bf16.msra.mxu0 0
        %4432 = vmatprep.subr.bf16.mxu0 0
        %4433 = vmatpush1.bf16.msra.mxu0 0
        %4434 = vmatprep.subr.bf16.mxu0 0
        %4435 = vmatpush1.bf16.msra.mxu0 0
        %4436 = vmatprep.subr.bf16.mxu0 0
        %4437 = vmatpush1.bf16.msra.mxu0 0
        %4438 = vmatprep.subr.bf16.mxu0 0
        %4439 = vmatpush1.bf16.msra.mxu0 0
        %4440 = vmatprep.subr.bf16.mxu0 0
        %4441 = vmatpush1.bf16.msra.mxu0 %v4421
        %4442 = vmatprep.subr.bf16.mxu0 0
        %4443 = vmatpush2.bf16.msra.mxu0 0
        %4444 = vmatprep.subr.bf16.mxu0 0
        %4445 = vmatpush2.bf16.msra.mxu0 0
        %4446 = vmatprep.subr.bf16.mxu0 0
        %4447 = vmatpush2.bf16.msra.mxu0 0
        %4448 = vmatprep.subr.bf16.mxu0 0
        %4449 = vmatpush2.bf16.msra.mxu0 0
        %4450 = vmatprep.subr.bf16.mxu0 0
        %4451 = vmatpush2.bf16.msra.mxu0 0
        %4452 = vmatprep.subr.bf16.mxu0 0
        %4453 = vmatpush2.bf16.msra.mxu0 0
        %4454 = vmatprep.subr.bf16.mxu0 0
        %4455 = vmatpush2.bf16.msra.mxu0 0
        %4456 = vmatprep.subr.bf16.mxu0 0
        %4457 = vmatpush2.bf16.msra.mxu0 0
        %4458 = vmatprep.mubr.bf16.mxu0 0
        %4459 = vmatmul.mubr.bf16.gmra.mxu0 %v4424
        %v4460 = vpop.f32.mrf.mxu0
        %v4461 = vadd.f32 %v4415, %v4460
        %v4462 = vpop.f32.mrf.mxu0
        %v4463 = vpop.f32.mrf.mxu0
        %v4464 = vpop.f32.mrf.mxu0
        %4465 = vdwg.mxu0
        %v4466 = vmax.f32 %v4461, 0.0
        %v4471 = vunpack.c.l.b16 %v4161
        %v4472 = vunpack.c.l.b16 %v4162
        %v4473 = vunpack.c.l.b16 %v4163
        %v4474 = vunpack.c.l.b16 %v4164
        %v4475 = vpack.c.b16 %v4472, %v4471
        %v4476 = vpack.c.b16 %v4474, %v4473
        %4479 = vmatprep.subr.bf16.mxu0 0
        %4480 = vmatpush1.bf16.msra.mxu0 0
        %4481 = vmatprep.subr.bf16.mxu0 0
        %4482 = vmatpush1.bf16.msra.mxu0 0
        %4483 = vmatprep.subr.bf16.mxu0 0
        %4484 = vmatpush1.bf16.msra.mxu0 0
        %4485 = vmatprep.subr.bf16.mxu0 0
        %4486 = vmatpush1.bf16.msra.mxu0 0
        %4487 = vmatprep.subr.bf16.mxu0 0
        %4488 = vmatpush1.bf16.msra.mxu0 0
        %4489 = vmatprep.subr.bf16.mxu0 0
        %4490 = vmatpush1.bf16.msra.mxu0 0
        %4491 = vmatprep.subr.bf16.mxu0 0
        %4492 = vmatpush1.bf16.msra.mxu0 %v4476
        %4493 = vmatprep.subr.bf16.mxu0 0
        %4494 = vmatpush1.bf16.msra.mxu0 %v4475
        %4495 = vmatprep.subr.bf16.mxu0 0
        %4496 = vmatpush2.bf16.msra.mxu0 0
        %4497 = vmatprep.subr.bf16.mxu0 0
        %4498 = vmatpush2.bf16.msra.mxu0 0
        %4499 = vmatprep.subr.bf16.mxu0 0
        %4500 = vmatpush2.bf16.msra.mxu0 0
        %4501 = vmatprep.subr.bf16.mxu0 0
        %4502 = vmatpush2.bf16.msra.mxu0 0
        %4503 = vmatprep.subr.bf16.mxu0 0
        %4504 = vmatpush2.bf16.msra.mxu0 0
        %4505 = vmatprep.subr.bf16.mxu0 0
        %4506 = vmatpush2.bf16.msra.mxu0 0
        %4507 = vmatprep.subr.bf16.mxu0 0
        %4508 = vmatpush2.bf16.msra.mxu0 0
        %4509 = vmatprep.subr.bf16.mxu0 0
        %4510 = vmatpush2.bf16.msra.mxu0 0
        %4511 = vmatprep.mubr.bf16.mxu0 0
        %4512 = vmatmul.mubr.bf16.gmra.mxu0 %v4185
        %v4513 = vpop.f32.mrf.mxu0
        %v4514 = vadd.f32 0.0, %v4513
        %v4515 = vpop.f32.mrf.mxu0
        %v4516 = vpop.f32.mrf.mxu0
        %v4517 = vpop.f32.mrf.mxu0
        %4518 = vdwg.mxu0
        %v4519 = vadd.f32 %v4466, %v4514
        %v4520 = vpack.c.bf16 %v4519, %v4519
        %v4521 = vld [vmem:[%s69] sm:$0xf]
        %v4522 = vld [vmem:[%s69 + $0x4] sm:$0xf]
        %v4523 = vld [vmem:[%s69 + $0x8] sm:$0xf]
        %v4524 = vld [vmem:[%s69 + $0xc] sm:$0xf]
        %v4525 = vld [vmem:[#allocation11] sm:$0x1]
        %v4526 = vld [vmem:[#allocation13] sm:$0x1]
        %v4527 = vld [vmem:[%s79] sm:$0xf]
        %v4528 = vld [vmem:[%s79 + $0x4] sm:$0xf]
        %v4529 = vld [vmem:[%s79 + $0x8] sm:$0xf]
        %v4530 = vld [vmem:[%s79 + $0xc] sm:$0xf]
        %v4531 = vld [vmem:[#allocation14] sm:$0x1]
        %v4533 = vlaneseq
        %v4534 = vshrl.u32 %v4533, 7
        %v4535 = vsub.s32 0, %v4534
        %v4536 = vrot.slane %v4525, %v4535
        %v4542 = vunpack.c.l.b16 %v4521
        %v4543 = vunpack.c.l.b16 %v4522
        %v4544 = vunpack.c.l.b16 %v4523
        %v4545 = vunpack.c.l.b16 %v4524
        %v4546 = vpack.c.b16 %v4543, %v4542
        %v4547 = vpack.c.b16 %v4545, %v4544
        %v4551 = vsel %vm4183, %v4520, 0
        %4553 = vmatprep.subr.bf16.mxu0 0
        %4554 = vmatpush1.bf16.msra.mxu0 0
        %4555 = vmatprep.subr.bf16.mxu0 0
        %4556 = vmatpush1.bf16.msra.mxu0 0
        %4557 = vmatprep.subr.bf16.mxu0 0
        %4558 = vmatpush1.bf16.msra.mxu0 0
        %4559 = vmatprep.subr.bf16.mxu0 0
        %4560 = vmatpush1.bf16.msra.mxu0 0
        %4561 = vmatprep.subr.bf16.mxu0 0
        %4562 = vmatpush1.bf16.msra.mxu0 0
        %4563 = vmatprep.subr.bf16.mxu0 0
        %4564 = vmatpush1.bf16.msra.mxu0 0
        %4565 = vmatprep.subr.bf16.mxu0 0
        %4566 = vmatpush1.bf16.msra.mxu0 %v4547
        %4567 = vmatprep.subr.bf16.mxu0 0
        %4568 = vmatpush1.bf16.msra.mxu0 %v4546
        %4569 = vmatprep.subr.bf16.mxu0 0
        %4570 = vmatpush2.bf16.msra.mxu0 0
        %4571 = vmatprep.subr.bf16.mxu0 0
        %4572 = vmatpush2.bf16.msra.mxu0 0
        %4573 = vmatprep.subr.bf16.mxu0 0
        %4574 = vmatpush2.bf16.msra.mxu0 0
        %4575 = vmatprep.subr.bf16.mxu0 0
        %4576 = vmatpush2.bf16.msra.mxu0 0
        %4577 = vmatprep.subr.bf16.mxu0 0
        %4578 = vmatpush2.bf16.msra.mxu0 0
        %4579 = vmatprep.subr.bf16.mxu0 0
        %4580 = vmatpush2.bf16.msra.mxu0 0
        %4581 = vmatprep.subr.bf16.mxu0 0
        %4582 = vmatpush2.bf16.msra.mxu0 0
        %4583 = vmatprep.subr.bf16.mxu0 0
        %4584 = vmatpush2.bf16.msra.mxu0 0
        %4585 = vmatprep.mubr.bf16.mxu0 0
        %4586 = vmatmul.mubr.bf16.gmra.mxu0 %v4551
        %v4587 = vpop.f32.mrf.mxu0
        %v4588 = vadd.f32 %v4536, %v4587
        %v4589 = vpop.f32.mrf.mxu0
        %v4590 = vpop.f32.mrf.mxu0
        %v4591 = vpop.f32.mrf.mxu0
        %4592 = vdwg.mxu0
        %v4593 = vmax.f32 %v4588, 0.0
        %v4594 = vpack.c.bf16 %v4593, %v4593
        %v4595 = vld [vmem:[%s73] sm:$0x3]
        %v4597 = vsel %vm4243, %v4595, 0
        %v4600 = vsel %vm4250, %v4594, 0
        %4602 = vmatprep.subr.bf16.mxu0 0
        %4603 = vmatpush1.bf16.msra.mxu0 0
        %4604 = vmatprep.subr.bf16.mxu0 0
        %4605 = vmatpush1.bf16.msra.mxu0 0
        %4606 = vmatprep.subr.bf16.mxu0 0
        %4607 = vmatpush1.bf16.msra.mxu0 0
        %4608 = vmatprep.subr.bf16.mxu0 0
        %4609 = vmatpush1.bf16.msra.mxu0 0
        %4610 = vmatprep.subr.bf16.mxu0 0
        %4611 = vmatpush1.bf16.msra.mxu0 0
        %4612 = vmatprep.subr.bf16.mxu0 0
        %4613 = vmatpush1.bf16.msra.mxu0 0
        %4614 = vmatprep.subr.bf16.mxu0 0
        %4615 = vmatpush1.bf16.msra.mxu0 0
        %4616 = vmatprep.subr.bf16.mxu0 0
        %4617 = vmatpush1.bf16.msra.mxu0 %v4600
        %4618 = vmatprep.subr.bf16.mxu0 0
        %4619 = vmatpush2.bf16.msra.mxu0 0
        %4620 = vmatprep.subr.bf16.mxu0 0
        %4621 = vmatpush2.bf16.msra.mxu0 0
        %4622 = vmatprep.subr.bf16.mxu0 0
        %4623 = vmatpush2.bf16.msra.mxu0 0
        %4624 = vmatprep.subr.bf16.mxu0 0
        %4625 = vmatpush2.bf16.msra.mxu0 0
        %4626 = vmatprep.subr.bf16.mxu0 0
        %4627 = vmatpush2.bf16.msra.mxu0 0
        %4628 = vmatprep.subr.bf16.mxu0 0
        %4629 = vmatpush2.bf16.msra.mxu0 0
        %4630 = vmatprep.subr.bf16.mxu0 0
        %4631 = vmatpush2.bf16.msra.mxu0 0
        %4632 = vmatprep.subr.bf16.mxu0 0
        %4633 = vmatpush2.bf16.msra.mxu0 0
        %4634 = vmatprep.mubr.bf16.mxu0 0
        %4635 = vmatmul.mubr.bf16.gmra.mxu0 %v4597
        %v4636 = vpop.f32.mrf.mxu0
        %v4637 = vadd.f32 0.0, %v4636
        %v4638 = vpop.f32.mrf.mxu0
        %v4639 = vpop.f32.mrf.mxu0
        %v4640 = vpop.f32.mrf.mxu0
        %4641 = vdwg.mxu0
        %s4642 = scalar_lea.vmem %s75, 4
        %v4643 = vld [vmem:[%s4642] sm:$0x1]
        %v4644 = vmul.f32 %v4637, %v4643
        %s4645 = scalar_lea.vmem %s75, 5
        %v4646 = vld [vmem:[%s4645] sm:$0x1]
        %v4648 = vlaneseq
        %v4649 = vshrl.u32 %v4648, 7
        %v4650 = vsub.s32 0, %v4649
        %v4651 = vrot.slane %v4646, %v4650
        %v4653 = vmul.f32 %v4637, %v4651
        %v4655 = vrot.slane %v4653, 1
        %v4657 = vadd.f32 %v4644, %v4655
        %s4658 = scalar_lea.vmem %s75, 7
        %v4659 = vld [vmem:[%s4658] sm:$0x1]
        %v4661 = vlaneseq
        %v4662 = vshrl.u32 %v4661, 7
        %v4663 = vsub.s32 0, %v4662
        %v4664 = vrot.slane %v4659, %v4663
        %v4666 = vmul.f32 %v4637, %v4664
        %v4668 = vrot.slane %v4666, 2
        %v4670 = vadd.f32 %v4657, %v4668
        %s4671 = scalar_lea.vmem %s75, 8
        %v4672 = vld [vmem:[%s4671] sm:$0x1]
        %v4674 = vlaneseq
        %v4675 = vshrl.u32 %v4674, 7
        %v4676 = vsub.s32 0, %v4675
        %v4677 = vrot.slane %v4672, %v4676
        %v4679 = vmul.f32 %v4637, %v4677
        %v4681 = vrot.slane %v4679, 3
        %v4683 = vadd.f32 %v4670, %v4681
        %v4684 = vadd.f32 %v4683, %v4526
        %v4685 = vpack.c.bf16 %v4684, %v4684
        %v4690 = vunpack.c.l.b16 %v4527
        %v4691 = vunpack.c.l.b16 %v4528
        %v4692 = vunpack.c.l.b16 %v4529
        %v4693 = vunpack.c.l.b16 %v4530
        %v4694 = vpack.c.b16 %v4691, %v4690
        %v4695 = vpack.c.b16 %v4693, %v4692
        %v4699 = vsel %vm4183, %v4685, 0
        %4701 = vmatprep.subr.bf16.mxu0 0
        %4702 = vmatpush1.bf16.msra.mxu0 0
        %4703 = vmatprep.subr.bf16.mxu0 0
        %4704 = vmatpush1.bf16.msra.mxu0 0
        %4705 = vmatprep.subr.bf16.mxu0 0
        %4706 = vmatpush1.bf16.msra.mxu0 0
        %4707 = vmatprep.subr.bf16.mxu0 0
        %4708 = vmatpush1.bf16.msra.mxu0 0
        %4709 = vmatprep.subr.bf16.mxu0 0
        %4710 = vmatpush1.bf16.msra.mxu0 0
        %4711 = vmatprep.subr.bf16.mxu0 0
        %4712 = vmatpush1.bf16.msra.mxu0 0
        %4713 = vmatprep.subr.bf16.mxu0 0
        %4714 = vmatpush1.bf16.msra.mxu0 %v4695
        %4715 = vmatprep.subr.bf16.mxu0 0
        %4716 = vmatpush1.bf16.msra.mxu0 %v4694
        %4717 = vmatprep.subr.bf16.mxu0 0
        %4718 = vmatpush2.bf16.msra.mxu0 0
        %4719 = vmatprep.subr.bf16.mxu0 0
        %4720 = vmatpush2.bf16.msra.mxu0 0
        %4721 = vmatprep.subr.bf16.mxu0 0
        %4722 = vmatpush2.bf16.msra.mxu0 0
        %4723 = vmatprep.subr.bf16.mxu0 0
        %4724 = vmatpush2.bf16.msra.mxu0 0
        %4725 = vmatprep.subr.bf16.mxu0 0
        %4726 = vmatpush2.bf16.msra.mxu0 0
        %4727 = vmatprep.subr.bf16.mxu0 0
        %4728 = vmatpush2.bf16.msra.mxu0 0
        %4729 = vmatprep.subr.bf16.mxu0 0
        %4730 = vmatpush2.bf16.msra.mxu0 0
        %4731 = vmatprep.subr.bf16.mxu0 0
        %4732 = vmatpush2.bf16.msra.mxu0 0
        %4733 = vmatprep.mubr.bf16.mxu0 0
        %4734 = vmatmul.mubr.bf16.gmra.mxu0 %v4699
        %v4735 = vpop.f32.mrf.mxu0
        %v4736 = vadd.f32 %v4531, %v4735
        %v4737 = vpop.f32.mrf.mxu0
        %v4738 = vpop.f32.mrf.mxu0
        %v4739 = vpop.f32.mrf.mxu0
        %4740 = vdwg.mxu0
        %v4741 = vmax.f32 %v4736, 0.0
        %v4742 = vpack.c.bf16 %v4741, %v4741
        %v4743 = vld [vmem:[%s83] sm:$0xf]
        %v4744 = vld [vmem:[%s83 + $0x4] sm:$0xf]
        %v4745 = vld [vmem:[%s83 + $0x8] sm:$0xf]
        %v4746 = vld [vmem:[%s83 + $0xc] sm:$0xf]
        %v4747 = vld [vmem:[%s83 + $0x10] sm:$0xf]
        %v4748 = vld [vmem:[%s83 + $0x14] sm:$0xf]
        %v4749 = vld [vmem:[%s83 + $0x18] sm:$0xf]
        %v4750 = vld [vmem:[%s83 + $0x1c] sm:$0xf]
        %v4751 = vld [vmem:[#allocation16] sm:$0x1]
        %v4752 = vld [vmem:[#allocation17] sm:$0x1]
        %v4753 = vld [vmem:[%s91] sm:$0xf]
        %v4754 = vld [vmem:[%s91 + $0x4] sm:$0xf]
        %v4755 = vld [vmem:[%s91 + $0x8] sm:$0xf]
        %v4756 = vld [vmem:[%s91 + $0xc] sm:$0xf]
        %v4757 = vld [vmem:[#allocation19] sm:$0x1]
        %v4758 = vld [vmem:[%s95] sm:$0xf]
        %v4759 = vld [vmem:[%s95 + $0x4] sm:$0xf]
        %v4760 = vld [vmem:[%s95 + $0x8] sm:$0xf]
        %v4761 = vld [vmem:[%s95 + $0xc] sm:$0xf]
        %v4762 = vld [vmem:[%s95 + $0x10] sm:$0xf]
        %v4763 = vld [vmem:[%s95 + $0x14] sm:$0xf]
        %v4764 = vld [vmem:[%s95 + $0x18] sm:$0xf]
        %v4765 = vld [vmem:[%s95 + $0x1c] sm:$0xf]
        %v4774 = vunpack.c.l.b16 %v4743
        %v4775 = vunpack.c.l.b16 %v4744
        %v4776 = vunpack.c.l.b16 %v4745
        %v4777 = vunpack.c.l.b16 %v4746
        %v4778 = vunpack.c.l.b16 %v4747
        %v4779 = vunpack.c.l.b16 %v4748
        %v4780 = vunpack.c.l.b16 %v4749
        %v4781 = vunpack.c.l.b16 %v4750
        %v4782 = vpack.c.b16 %v4775, %v4774
        %v4783 = vpack.c.b16 %v4777, %v4776
        %v4784 = vpack.c.b16 %v4779, %v4778
        %v4785 = vpack.c.b16 %v4781, %v4780
        %v4791 = vsel %vm3071, %v4742, 0
        %4793 = vmatprep.subr.bf16.mxu0 0
        %4794 = vmatpush1.bf16.msra.mxu0 0
        %4795 = vmatprep.subr.bf16.mxu0 0
        %4796 = vmatpush1.bf16.msra.mxu0 0
        %4797 = vmatprep.subr.bf16.mxu0 0
        %4798 = vmatpush1.bf16.msra.mxu0 0
        %4799 = vmatprep.subr.bf16.mxu0 0
        %4800 = vmatpush1.bf16.msra.mxu0 0
        %4801 = vmatprep.subr.bf16.mxu0 0
        %4802 = vmatpush1.bf16.msra.mxu0 %v4785
        %4803 = vmatprep.subr.bf16.mxu0 0
        %4804 = vmatpush1.bf16.msra.mxu0 %v4784
        %4805 = vmatprep.subr.bf16.mxu0 0
        %4806 = vmatpush1.bf16.msra.mxu0 %v4783
        %4807 = vmatprep.subr.bf16.mxu0 0
        %4808 = vmatpush1.bf16.msra.mxu0 %v4782
        %4809 = vmatprep.subr.bf16.mxu0 0
        %4810 = vmatpush2.bf16.msra.mxu0 0
        %4811 = vmatprep.subr.bf16.mxu0 0
        %4812 = vmatpush2.bf16.msra.mxu0 0
        %4813 = vmatprep.subr.bf16.mxu0 0
        %4814 = vmatpush2.bf16.msra.mxu0 0
        %4815 = vmatprep.subr.bf16.mxu0 0
        %4816 = vmatpush2.bf16.msra.mxu0 0
        %4817 = vmatprep.subr.bf16.mxu0 0
        %4818 = vmatpush2.bf16.msra.mxu0 0
        %4819 = vmatprep.subr.bf16.mxu0 0
        %4820 = vmatpush2.bf16.msra.mxu0 0
        %4821 = vmatprep.subr.bf16.mxu0 0
        %4822 = vmatpush2.bf16.msra.mxu0 0
        %4823 = vmatprep.subr.bf16.mxu0 0
        %4824 = vmatpush2.bf16.msra.mxu0 0
        %4825 = vmatprep.mubr.bf16.mxu0 0
        %4826 = vmatmul.mubr.bf16.gmra.mxu0 %v4791
        %v4827 = vpop.f32.mrf.mxu0
        %v4828 = vadd.f32 %v4751, %v4827
        %v4829 = vpop.f32.mrf.mxu0
        %v4830 = vpop.f32.mrf.mxu0
        %v4831 = vpop.f32.mrf.mxu0
        %4832 = vdwg.mxu0
        %v4833 = vmax.f32 %v4828, 0.0
        %s4834 = scalar_lea.vmem %s87, 4
        %v4835 = vld [vmem:[%s4834] sm:$0x1]
        %v4836 = vmul.f32 %v4833, %v4835
        %v4837 = vadd.f32 %v4836, %v4752
        %v4838 = vpack.c.bf16 %v4837, %v4837
        %v4843 = vunpack.c.l.b16 %v4753
        %v4844 = vunpack.c.l.b16 %v4754
        %v4845 = vunpack.c.l.b16 %v4755
        %v4846 = vunpack.c.l.b16 %v4756
        %v4847 = vpack.c.b16 %v4844, %v4843
        %v4848 = vpack.c.b16 %v4846, %v4845
        %v4852 = vsel %vm4183, %v4838, 0
        %4854 = vmatprep.subr.bf16.mxu0 0
        %4855 = vmatpush1.bf16.msra.mxu0 0
        %4856 = vmatprep.subr.bf16.mxu0 0
        %4857 = vmatpush1.bf16.msra.mxu0 0
        %4858 = vmatprep.subr.bf16.mxu0 0
        %4859 = vmatpush1.bf16.msra.mxu0 0
        %4860 = vmatprep.subr.bf16.mxu0 0
        %4861 = vmatpush1.bf16.msra.mxu0 0
        %4862 = vmatprep.subr.bf16.mxu0 0
        %4863 = vmatpush1.bf16.msra.mxu0 0
        %4864 = vmatprep.subr.bf16.mxu0 0
        %4865 = vmatpush1.bf16.msra.mxu0 0
        %4866 = vmatprep.subr.bf16.mxu0 0
        %4867 = vmatpush1.bf16.msra.mxu0 %v4848
        %4868 = vmatprep.subr.bf16.mxu0 0
        %4869 = vmatpush1.bf16.msra.mxu0 %v4847
        %4870 = vmatprep.subr.bf16.mxu0 0
        %4871 = vmatpush2.bf16.msra.mxu0 0
        %4872 = vmatprep.subr.bf16.mxu0 0
        %4873 = vmatpush2.bf16.msra.mxu0 0
        %4874 = vmatprep.subr.bf16.mxu0 0
        %4875 = vmatpush2.bf16.msra.mxu0 0
        %4876 = vmatprep.subr.bf16.mxu0 0
        %4877 = vmatpush2.bf16.msra.mxu0 0
        %4878 = vmatprep.subr.bf16.mxu0 0
        %4879 = vmatpush2.bf16.msra.mxu0 0
        %4880 = vmatprep.subr.bf16.mxu0 0
        %4881 = vmatpush2.bf16.msra.mxu0 0
        %4882 = vmatprep.subr.bf16.mxu0 0
        %4883 = vmatpush2.bf16.msra.mxu0 0
        %4884 = vmatprep.subr.bf16.mxu0 0
        %4885 = vmatpush2.bf16.msra.mxu0 0
        %4886 = vmatprep.mubr.bf16.mxu0 0
        %4887 = vmatmul.mubr.bf16.gmra.mxu0 %v4852
        %v4888 = vpop.f32.mrf.mxu0
        %v4889 = vadd.f32 %v4757, %v4888
        %v4890 = vpop.f32.mrf.mxu0
        %v4891 = vpop.f32.mrf.mxu0
        %v4892 = vpop.f32.mrf.mxu0
        %4893 = vdwg.mxu0
        %v4894 = vmax.f32 %v4889, 0.0
        %v4903 = vunpack.c.l.b16 %v4758
        %v4904 = vunpack.c.l.b16 %v4759
        %v4905 = vunpack.c.l.b16 %v4760
        %v4906 = vunpack.c.l.b16 %v4761
        %v4907 = vunpack.c.l.b16 %v4762
        %v4908 = vunpack.c.l.b16 %v4763
        %v4909 = vunpack.c.l.b16 %v4764
        %v4910 = vunpack.c.l.b16 %v4765
        %v4911 = vpack.c.b16 %v4904, %v4903
        %v4912 = vpack.c.b16 %v4906, %v4905
        %v4913 = vpack.c.b16 %v4908, %v4907
        %v4914 = vpack.c.b16 %v4910, %v4909
        %4919 = vmatprep.subr.bf16.mxu0 0
        %4920 = vmatpush1.bf16.msra.mxu0 0
        %4921 = vmatprep.subr.bf16.mxu0 0
        %4922 = vmatpush1.bf16.msra.mxu0 0
        %4923 = vmatprep.subr.bf16.mxu0 0
        %4924 = vmatpush1.bf16.msra.mxu0 0
        %4925 = vmatprep.subr.bf16.mxu0 0
        %4926 = vmatpush1.bf16.msra.mxu0 0
        %4927 = vmatprep.subr.bf16.mxu0 0
        %4928 = vmatpush1.bf16.msra.mxu0 %v4914
        %4929 = vmatprep.subr.bf16.mxu0 0
        %4930 = vmatpush1.bf16.msra.mxu0 %v4913
        %4931 = vmatprep.subr.bf16.mxu0 0
        %4932 = vmatpush1.bf16.msra.mxu0 %v4912
        %4933 = vmatprep.subr.bf16.mxu0 0
        %4934 = vmatpush1.bf16.msra.mxu0 %v4911
        %4935 = vmatprep.subr.bf16.mxu0 0
        %4936 = vmatpush2.bf16.msra.mxu0 0
        %4937 = vmatprep.subr.bf16.mxu0 0
        %4938 = vmatpush2.bf16.msra.mxu0 0
        %4939 = vmatprep.subr.bf16.mxu0 0
        %4940 = vmatpush2.bf16.msra.mxu0 0
        %4941 = vmatprep.subr.bf16.mxu0 0
        %4942 = vmatpush2.bf16.msra.mxu0 0
        %4943 = vmatprep.subr.bf16.mxu0 0
        %4944 = vmatpush2.bf16.msra.mxu0 0
        %4945 = vmatprep.subr.bf16.mxu0 0
        %4946 = vmatpush2.bf16.msra.mxu0 0
        %4947 = vmatprep.subr.bf16.mxu0 0
        %4948 = vmatpush2.bf16.msra.mxu0 0
        %4949 = vmatprep.subr.bf16.mxu0 0
        %4950 = vmatpush2.bf16.msra.mxu0 0
        %4951 = vmatprep.mubr.bf16.mxu0 0
        %4952 = vmatmul.mubr.bf16.gmra.mxu0 %v4791
        %v4953 = vpop.f32.mrf.mxu0
        %v4954 = vadd.f32 0.0, %v4953
        %v4955 = vpop.f32.mrf.mxu0
        %v4956 = vpop.f32.mrf.mxu0
        %v4957 = vpop.f32.mrf.mxu0
        %4958 = vdwg.mxu0
        %v4959 = vadd.f32 %v4894, %v4954
        %v4960 = vpack.c.bf16 %v4959, %v4959
        %v4961 = vld [vmem:[%s97] sm:$0xf]
        %v4962 = vld [vmem:[%s97 + $0x4] sm:$0xf]
        %v4963 = vld [vmem:[%s97 + $0x8] sm:$0xf]
        %v4964 = vld [vmem:[%s97 + $0xc] sm:$0xf]
        %v4965 = vld [vmem:[%s97 + $0x10] sm:$0xf]
        %v4966 = vld [vmem:[%s97 + $0x14] sm:$0xf]
        %v4967 = vld [vmem:[%s97 + $0x18] sm:$0xf]
        %v4968 = vld [vmem:[%s97 + $0x1c] sm:$0xf]
        %v4969 = vld [vmem:[%s99] sm:$0x1]
        %v4970 = vld [vmem:[%s101] sm:$0xf]
        %v4971 = vld [vmem:[%s101 + $0x4] sm:$0xf]
        %v4972 = vld [vmem:[%s101 + $0x8] sm:$0xf]
        %v4973 = vld [vmem:[%s101 + $0xc] sm:$0xf]
        %v4974 = vld [vmem:[%s101 + $0x10] sm:$0xf]
        %v4975 = vld [vmem:[%s101 + $0x14] sm:$0xf]
        %v4976 = vld [vmem:[%s101 + $0x18] sm:$0xf]
        %v4977 = vld [vmem:[%s101 + $0x1c] sm:$0xf]
        %v4978 = vld [vmem:[%s101 + $0x20] sm:$0xf]
        %v4979 = vld [vmem:[%s101 + $0x24] sm:$0xf]
        %v4980 = vld [vmem:[%s101 + $0x28] sm:$0xf]
        %v4981 = vld [vmem:[%s101 + $0x2c] sm:$0xf]
        %v4982 = vld [vmem:[%s101 + $0x30] sm:$0xf]
        %v4983 = vld [vmem:[%s101 + $0x34] sm:$0xf]
        %v4984 = vld [vmem:[%s101 + $0x38] sm:$0xf]
        %v4985 = vld [vmem:[%s101 + $0x3c] sm:$0xf]
        %v4986 = vld [vmem:[%s103] sm:$0x1]
        %v4995 = vunpack.c.l.b16 %v4961
        %v4996 = vunpack.c.l.b16 %v4962
        %v4997 = vunpack.c.l.b16 %v4963
        %v4998 = vunpack.c.l.b16 %v4964
        %v4999 = vunpack.c.l.b16 %v4965
        %v5000 = vunpack.c.l.b16 %v4966
        %v5001 = vunpack.c.l.b16 %v4967
        %v5002 = vunpack.c.l.b16 %v4968
        %v5003 = vpack.c.b16 %v4996, %v4995
        %v5004 = vpack.c.b16 %v4998, %v4997
        %v5005 = vpack.c.b16 %v5000, %v4999
        %v5006 = vpack.c.b16 %v5002, %v5001
        %v5012 = vsel %vm3071, %v4960, 0
        %5014 = vmatprep.subr.bf16.mxu0 0
        %5015 = vmatpush1.bf16.msra.mxu0 0
        %5016 = vmatprep.subr.bf16.mxu0 0
        %5017 = vmatpush1.bf16.msra.mxu0 0
        %5018 = vmatprep.subr.bf16.mxu0 0
        %5019 = vmatpush1.bf16.msra.mxu0 0
        %5020 = vmatprep.subr.bf16.mxu0 0
        %5021 = vmatpush1.bf16.msra.mxu0 0
        %5022 = vmatprep.subr.bf16.mxu0 0
        %5023 = vmatpush1.bf16.msra.mxu0 %v5006
        %5024 = vmatprep.subr.bf16.mxu0 0
        %5025 = vmatpush1.bf16.msra.mxu0 %v5005
        %5026 = vmatprep.subr.bf16.mxu0 0
        %5027 = vmatpush1.bf16.msra.mxu0 %v5004
        %5028 = vmatprep.subr.bf16.mxu0 0
        %5029 = vmatpush1.bf16.msra.mxu0 %v5003
        %5030 = vmatprep.subr.bf16.mxu0 0
        %5031 = vmatpush2.bf16.msra.mxu0 0
        %5032 = vmatprep.subr.bf16.mxu0 0
        %5033 = vmatpush2.bf16.msra.mxu0 0
        %5034 = vmatprep.subr.bf16.mxu0 0
        %5035 = vmatpush2.bf16.msra.mxu0 0
        %5036 = vmatprep.subr.bf16.mxu0 0
        %5037 = vmatpush2.bf16.msra.mxu0 0
        %5038 = vmatprep.subr.bf16.mxu0 0
        %5039 = vmatpush2.bf16.msra.mxu0 0
        %5040 = vmatprep.subr.bf16.mxu0 0
        %5041 = vmatpush2.bf16.msra.mxu0 0
        %5042 = vmatprep.subr.bf16.mxu0 0
        %5043 = vmatpush2.bf16.msra.mxu0 0
        %5044 = vmatprep.subr.bf16.mxu0 0
        %5045 = vmatpush2.bf16.msra.mxu0 0
        %5046 = vmatprep.mubr.bf16.mxu0 0
        %5047 = vmatmul.mubr.bf16.gmra.mxu0 %v5012
        %v5048 = vpop.f32.mrf.mxu0
        %v5049 = vadd.f32 %v4969, %v5048
        %v5050 = vpop.f32.mrf.mxu0
        %v5051 = vpop.f32.mrf.mxu0
        %v5052 = vpop.f32.mrf.mxu0
        %5053 = vdwg.mxu0
        %v5054 = vmax.f32 %v5049, 0.0
        %v5055 = vadd.f32 %v5054, 0.0
        %v5056 = vpack.c.bf16 %v5055, %v5055
        %v5073 = vunpack.c.l.b16 %v4970
        %v5074 = vunpack.c.l.b16 %v4971
        %v5075 = vunpack.c.l.b16 %v4972
        %v5076 = vunpack.c.l.b16 %v4973
        %v5077 = vunpack.c.l.b16 %v4974
        %v5078 = vunpack.c.l.b16 %v4975
        %v5079 = vunpack.c.l.b16 %v4976
        %v5080 = vunpack.c.l.b16 %v4977
        %v5081 = vunpack.c.l.b16 %v4978
        %v5082 = vunpack.c.l.b16 %v4979
        %v5083 = vunpack.c.l.b16 %v4980
        %v5084 = vunpack.c.l.b16 %v4981
        %v5085 = vunpack.c.l.b16 %v4982
        %v5086 = vunpack.c.l.b16 %v4983
        %v5087 = vunpack.c.l.b16 %v4984
        %v5088 = vunpack.c.l.b16 %v4985
        %v5089 = vpack.c.b16 %v5074, %v5073
        %v5090 = vpack.c.b16 %v5076, %v5075
        %v5091 = vpack.c.b16 %v5078, %v5077
        %v5092 = vpack.c.b16 %v5080, %v5079
        %v5093 = vpack.c.b16 %v5082, %v5081
        %v5094 = vpack.c.b16 %v5084, %v5083
        %v5095 = vpack.c.b16 %v5086, %v5085
        %v5096 = vpack.c.b16 %v5088, %v5087
        %5105 = vmatprep.subr.bf16.mxu0 0
        %5106 = vmatpush1.bf16.msra.mxu0 %v5096
        %5107 = vmatprep.subr.bf16.mxu0 0
        %5108 = vmatpush1.bf16.msra.mxu0 %v5095
        %5109 = vmatprep.subr.bf16.mxu0 0
        %5110 = vmatpush1.bf16.msra.mxu0 %v5094
        %5111 = vmatprep.subr.bf16.mxu0 0
        %5112 = vmatpush1.bf16.msra.mxu0 %v5093
        %5113 = vmatprep.subr.bf16.mxu0 0
        %5114 = vmatpush1.bf16.msra.mxu0 %v5092
        %5115 = vmatprep.subr.bf16.mxu0 0
        %5116 = vmatpush1.bf16.msra.mxu0 %v5091
        %5117 = vmatprep.subr.bf16.mxu0 0
        %5118 = vmatpush1.bf16.msra.mxu0 %v5090
        %5119 = vmatprep.subr.bf16.mxu0 0
        %5120 = vmatpush1.bf16.msra.mxu0 %v5089
        %5121 = vmatprep.subr.bf16.mxu0 0
        %5122 = vmatpush2.bf16.msra.mxu0 0
        %5123 = vmatprep.subr.bf16.mxu0 0
        %5124 = vmatpush2.bf16.msra.mxu0 0
        %5125 = vmatprep.subr.bf16.mxu0 0
        %5126 = vmatpush2.bf16.msra.mxu0 0
        %5127 = vmatprep.subr.bf16.mxu0 0
        %5128 = vmatpush2.bf16.msra.mxu0 0
        %5129 = vmatprep.subr.bf16.mxu0 0
        %5130 = vmatpush2.bf16.msra.mxu0 0
        %5131 = vmatprep.subr.bf16.mxu0 0
        %5132 = vmatpush2.bf16.msra.mxu0 0
        %5133 = vmatprep.subr.bf16.mxu0 0
        %5134 = vmatpush2.bf16.msra.mxu0 0
        %5135 = vmatprep.subr.bf16.mxu0 0
        %5136 = vmatpush2.bf16.msra.mxu0 0
        %5137 = vmatprep.mubr.bf16.mxu0 0
        %5138 = vmatmul.mubr.bf16.gmra.mxu0 %v5056
        %v5139 = vpop.f32.mrf.mxu0
        %v5140 = vadd.f32 %v4986, %v5139
        %v5141 = vpop.f32.mrf.mxu0
        %v5142 = vpop.f32.mrf.mxu0
        %v5143 = vpop.f32.mrf.mxu0
        %5144 = vdwg.mxu0
        %vm5145 = vcmask 122880
        %5146 = vst.msk [vmem:[%s1676] sm:$0x1] %vm5145, %v5140
        %s5147 = sand.u32 %s1230, 1
        %s5148 = scalar_lea.sflag [#allocation4], %s5147
        %s5149 = sand.u32 %s1230, 1
        %s5150 = scalar_lea.vmem [#allocation20], %s5149
        // Predicated region
        $region273: #{_lambda_.1} parent=227 // pred_check
          %p5151 = pneg %p1240
        $region274: #{_lambda_.1} parent=227 // pred_check_branch
          %5153 = sbr.rel (%p5151) target = $region276
        $region275: #{_lambda_.1} parent=227 // pred_region
          %s5155 = ssub.s32 16, 16
          %5156 = vsyncadd %s5148, %s5155
          %s5157 = smul.addr %s125, 16
          %s5158 = scalar_lea.hbm %s105, %s5157
          %s5160 = sshll.u32 %s5150, 4
          %s5161 = int_to_ptr.vmem [resolvable:$true] %s5160
          %5163 = dma.vmem_to_hbm [thread:$0]  %s5161, 16, %s5158, %s5148
        $region276: #{_lambda_.1} parent=227 // pred_fallthru
          _
      $region228: #{_lambda_.1} parent=5 // pred_fallthru
        _
      %p5164 = scmp.le.s32.totalorder 2, %s120
      // Predicated region
      $region277: #{_lambda_.1} parent=5 // pred_check
        %p5165 = pneg %p5164
      $region278: #{_lambda_.1} parent=5 // pred_check_branch
        %5167 = sbr.rel (%p5165) target = $region280
      $region279: #{_lambda_.1} parent=5 // pred_region
        %s5168 = ssub.s32 %s120, 2
        // Predicated region
        $region281: #{_lambda_.1} parent=279 // pred_check
          %p5169 = pneg %p1246
        $region282: #{_lambda_.1} parent=279 // pred_check_branch
          %5171 = sbr.rel (%p5169) target = $region284
        $region283: #{_lambda_.1} parent=279 // pred_region
          %s5172 = sand.u32 %s1231, 1
          %s5173 = scalar_lea.sflag [#allocation4], %s5172
          %s5174 = sand.u32 %s1231, 1
          %s5175 = scalar_lea.vmem [#allocation20], %s5174
          %5176 = dma.done %s5173, 16
        $region284: #{_lambda_.1} parent=279 // pred_fallthru
          _
      $region280: #{_lambda_.1} parent=5 // pred_fallthru
        _
    $region6: #{_lambda_.1} parent=1 // loop_footer
      %s124 = sadd.s32 1, %s120
    $region7: #{_lambda_.1} parent=1 // loop_footer_branch
      %119 = sbr.rel target = $region3
    $region8: #{_lambda_.1} parent=1 // loop_exit
      _
    %5177 = vsyncpa [#allocation3], 1
    %s5178 = scalar_lea.sflag [#allocation3], 1
    %5179 = vsyncpa %s5178, 1
    %5180 = vsyncpa [#allocation6], 1
    %5181 = vsyncpa [#allocation9], 1
    %5182 = vsyncpa [#allocation12], 1
    %5183 = vsyncpa [#allocation15], 1
    %5184 = vsyncpa [#allocation18], 1
    %5185 = vsyncpa [#allocation4], 1
    %s5186 = scalar_lea.sflag [#allocation4], 1
    %5187 = vsyncpa %s5186, 1

</llo_original>
